<compile_context>
chip_gen: v5e
topology: v5e:2x2
jax: 0.10.0
libtpu: 0.0.40
codegen_flags: <defaults>
</compile_context>

<pallas_src>
import functools

import jax
import jax.numpy as jnp
from jax.experimental import pallas as pl
from jax.experimental.pallas import tpu as pltpu


# ---------------------------------------------------------------------------
# Fused Pallas kernel: conv3x3+ReLU -> conv3x3+ReLU -> global mean, B images
# ---------------------------------------------------------------------------

def _fused_encoder_kernel(x_ref, m_ref, w1_ref, b1_ref, w2_ref, b2_ref, p_ref,
                          o_ref, k1_s, y1p_s, k2_s, *, W, Cp, hidden, n_pix,
                          pad):
    # x_ref : (1, Cp, pad + n_pix + pad) bf16  channel-sublane / pixel-lane,
    #                                          zero-padded along lanes
    # m_ref : (9, n_pix)                 bf16  per-tap validity masks
    # w1_ref: (hidden, 9*Cp)             bf16  conv1 as a single-dot matrix
    # b1_ref: (hidden, 1)                f32
    # w2_ref: (out_dim, 9*hidden)        bf16  conv2 as a single-dot matrix
    # b2_ref: (out_dim, 1)               f32
    # p_ref : (n_pix, B)                 f32   pooling matrix (1/HW per image)
    # o_ref : (1, out_dim, B)            f32   pooled features for this step
    # k1_s  : (9*Cp, n_pix)              bf16  conv1 transposed-im2col RHS
    # y1p_s : (hidden, pad+n_pix+pad)    bf16  zero-padded conv1 activation
    # k2_s  : (9*hidden, n_pix)          bf16  conv2 transposed-im2col RHS

    # ---- conv1: build (9*Cp, n_pix) RHS with lane-offset taps, ONE dot ----
    for t in range(9):
        dh, dw = t // 3, t % 3
        start = pad + (dh - 1) * W + (dw - 1)
        tap = x_ref[0, :, start:start + n_pix]                # (Cp, n_pix)
        k1_s[t * Cp:(t + 1) * Cp, :] = tap * m_ref[t:t + 1, :]
    acc1 = jnp.dot(w1_ref[...], k1_s[...],
                   preferred_element_type=jnp.float32)        # (hidden, n_pix)
    y1 = jnp.maximum(acc1 + b1_ref[...], 0.0)

    # ---- conv1 activation -> zero-padded bf16 lane buffer -----------------
    # Only the 2*pad border lanes need zeroing (masked taps still read them;
    # keep them from being NaN garbage).  Re-zeroed every step so the kernel
    # is megacore-safe (no reliance on a persistent step-0 init).
    y1p_s[:, 0:pad] = jnp.zeros((hidden, pad), jnp.bfloat16)
    y1p_s[:, pad + n_pix:pad + n_pix + pad] = jnp.zeros((hidden, pad),
                                                        jnp.bfloat16)
    y1p_s[:, pad:pad + n_pix] = y1.astype(jnp.bfloat16)

    # ---- conv2: build (9*hidden, n_pix) RHS, ONE dot (K=288) --------------
    for t in range(9):
        dh, dw = t // 3, t % 3
        start = pad + (dh - 1) * W + (dw - 1)
        tap = y1p_s[:, start:start + n_pix]                   # (hidden, n_pix)
        k2_s[t * hidden:(t + 1) * hidden, :] = tap * m_ref[t:t + 1, :]
    acc2 = jnp.dot(w2_ref[...], k2_s[...],
                   preferred_element_type=jnp.float32)        # (out_dim,n_pix)
    y2 = jnp.maximum(acc2 + b2_ref[...], 0.0)

    # ---- global average pool: one small dot against the pooling matrix ----
    o_ref[0] = jnp.dot(y2, p_ref[...], preferred_element_type=jnp.float32)


# ---------------------------------------------------------------------------
# Encoder forward (single pallas_call)
# ---------------------------------------------------------------------------

def encoder_forward(params, im_nchw, *, images_per_step=None):
    n, c, h, w = im_nchw.shape
    hidden = params["w1"].shape[0]
    out_dim = params["w2"].shape[0]
    hw = h * w

    if images_per_step is None:
        # Keep the grid length >= 2 so both v7x TensorCores get work, and cap
        # the per-step pixel count so scratch stays a few MiB on all gens.
        images_per_step = max(1, min(8, n // 2))
    B = max(1, min(images_per_step, n))
    steps = (n + B - 1) // B
    n_pad_im = steps * B
    n_pix = B * hw                       # lane dim of every hot tensor
    pad = w + 1                          # max |3x3 tap lane offset|
    cp = ((c + 15) // 16) * 16           # pad channels to bf16 sublane tile

    f32, bf16 = jnp.float32, jnp.bfloat16

    # images -> (steps, Cp, B*H*W): channel-sublane / pixel-lane, zero-padded
    # along lanes by `pad` on each side, bf16.
    x = im_nchw.astype(f32).reshape(n, c, hw)
    x = jnp.pad(x, ((0, n_pad_im - n), (0, cp - c), (0, 0)))
    x = x.reshape(steps, B, cp, hw).transpose(0, 2, 1, 3).reshape(
        steps, cp, n_pix)
    x = jnp.pad(x, ((0, 0), (0, 0), (pad, pad))).astype(bf16)

    # 3x3 tap validity masks (shared by both convs), (9, n_pix) bf16.
    pix = jnp.arange(n_pix) % hw
    hh, ww = pix // w, pix % w
    mask_list = []
    for t in range(9):
        dh, dw = t // 3, t % 3
        mask_list.append((hh + dh - 1 >= 0) & (hh + dh - 1 < h)
                         & (ww + dw - 1 >= 0) & (ww + dw - 1 < w))
    masks = jnp.stack(mask_list).astype(bf16)

    # Torch OIHW conv weights -> (Cout, 9*Cin) single-dot matrices (bf16).
    # K-row ordering is tap-major, channel-minor: row = (dh*3 + dw)*Cin + cin,
    # matching the in-kernel k1_s / k2_s construction.
    w1 = jnp.transpose(params["w1"], (0, 2, 3, 1))            # (hidden,3,3,C)
    w1 = jnp.pad(w1, ((0, 0), (0, 0), (0, 0), (0, cp - c)))
    w1 = w1.reshape(hidden, 9 * cp).astype(bf16)
    w2 = jnp.transpose(params["w2"], (0, 2, 3, 1)).reshape(
        out_dim, 9 * hidden).astype(bf16)
    b1 = params["b1"].reshape(hidden, 1).astype(f32)
    b2 = params["b2"].reshape(out_dim, 1).astype(f32)

    # Pooling matrix: column b averages image b's H*W pixels.
    p_mat = (jnp.arange(n_pix)[:, None] // hw
             == jnp.arange(B)[None, :]).astype(f32) / float(hw)

    kernel = functools.partial(_fused_encoder_kernel, W=w, Cp=cp,
                               hidden=hidden, n_pix=n_pix, pad=pad)

    out = pl.pallas_call(
        kernel,
        out_shape=jax.ShapeDtypeStruct((steps, out_dim, B), f32),
        grid_spec=pltpu.PrefetchScalarGridSpec(
            num_scalar_prefetch=0,
            grid=(steps,),
            in_specs=[
                pl.BlockSpec((1, cp, n_pix + 2 * pad), lambda i: (i, 0, 0)),
                pl.BlockSpec((9, n_pix), lambda i: (0, 0)),
                pl.BlockSpec((hidden, 9 * cp), lambda i: (0, 0)),
                pl.BlockSpec((hidden, 1), lambda i: (0, 0)),
                pl.BlockSpec((out_dim, 9 * hidden), lambda i: (0, 0)),
                pl.BlockSpec((out_dim, 1), lambda i: (0, 0)),
                pl.BlockSpec((n_pix, B), lambda i: (0, 0)),
            ],
            out_specs=pl.BlockSpec((1, out_dim, B), lambda i: (i, 0, 0)),
            scratch_shapes=[
                pltpu.VMEM((9 * cp, n_pix), bf16),            # conv1 im2col
                pltpu.VMEM((hidden, n_pix + 2 * pad), bf16),  # padded conv1 act
                pltpu.VMEM((9 * hidden, n_pix), bf16),        # conv2 im2col
            ],
        ),
        compiler_params=pltpu.CompilerParams(
            dimension_semantics=("parallel",),
            vmem_limit_bytes=32 * 1024 * 1024),
    )(x, masks, w1, b1, w2, b2, p_mat)

    # (steps, out_dim, B) -> (n, out_dim); tiny XLA glue.
    feats = jnp.transpose(out, (0, 2, 1)).reshape(n_pad_im, out_dim)[:n]
    return feats


def transparent_superpixel_encoder_forward(params, im, boxes=None,
                                           boxes_dim=None):
    # Mirrors: im = im.view(-1, *img_shape[-3:]); feats = self.encoder(im)
    img_shape = im.shape
    im = im.reshape((-1,) + img_shape[-3:])
    return encoder_forward(params, im)


# ---------------------------------------------------------------------------
# Synthetic encoder params + plain-JAX reference (for a correctness check)
# ---------------------------------------------------------------------------

def make_encoder_params(key, in_ch, hidden, out_dim):
    k1, k2, k3, k4 = jax.random.split(key, 4)
    w1 = jax.random.normal(k1, (hidden, in_ch, 3, 3), jnp.float32) * (
        2.0 / (in_ch * 9)) ** 0.5
    b1 = jax.random.normal(k2, (hidden,), jnp.float32) * 0.01
    w2 = jax.random.normal(k3, (out_dim, hidden, 3, 3), jnp.float32) * (
        2.0 / (hidden * 9)) ** 0.5
    b2 = jax.random.normal(k4, (out_dim,), jnp.float32) * 0.01
    return {"w1": w1, "b1": b1, "w2": w2, "b2": b2}


def encoder_reference(params, im):
    im = im.reshape((-1,) + im.shape[-3:])
    y = jax.lax.conv_general_dilated(
        im, params["w1"], window_strides=(1, 1), padding=((1, 1), (1, 1)),
        dimension_numbers=("NCHW", "OIHW", "NCHW"))
    y = jnp.maximum(y + params["b1"][None, :, None, None], 0.0)
    y = jax.lax.conv_general_dilated(
        y, params["w2"], window_strides=(1, 1), padding=((1, 1), (1, 1)),
        dimension_numbers=("NCHW", "OIHW", "NCHW"))
    y = jnp.maximum(y + params["b2"][None, :, None, None], 0.0)
    return jnp.mean(y, axis=(2, 3))


# ---------------------------------------------------------------------------

if __name__ == "__main__":
    key = jax.random.PRNGKey(0)
    k_im, k_par = jax.random.split(key)

    # im: (batch=2, n_superpixels=2, C=4, H=16, W=16) — NCHW trailing dims.
    im = jax.random.normal(k_im, (2, 2, 4, 16, 16), jnp.float32)

    hidden, out_dim = 32, 32
    params = make_encoder_params(k_par, in_ch=4, hidden=hidden, out_dim=out_dim)

    fwd = jax.jit(transparent_superpixel_encoder_forward)
    feats = jax.block_until_ready(fwd(params, im))

    assert feats.shape == (4, out_dim), feats.shape
    assert bool(jnp.all(jnp.isfinite(feats)))

    # Correctness check vs. plain-JAX f32 reference (kernel uses bf16 MXU
    # operands with f32 accumulation, so allow a generous tolerance).
    ref = jax.block_until_ready(encoder_reference(params, im))
    assert jnp.allclose(feats, ref, rtol=5e-2, atol=5e-2), (
        float(jnp.max(jnp.abs(feats - ref))))

    print("KERNEL_OK")
</pallas_src>

<mosaic_0001>
module attributes {stable_mosaic.version = 11 : i64} {
  func.func @_fused_encoder_kernel(%arg0: i32, %arg1: memref<1x16x546xbf16, #tpu.memory_space<vmem>>, %arg2: memref<9x512xbf16, #tpu.memory_space<vmem>>, %arg3: memref<32x144xbf16, #tpu.memory_space<vmem>>, %arg4: memref<32x1xf32, #tpu.memory_space<vmem>>, %arg5: memref<32x288xbf16, #tpu.memory_space<vmem>>, %arg6: memref<32x1xf32, #tpu.memory_space<vmem>>, %arg7: memref<512x2xf32, #tpu.memory_space<vmem>>, %arg8: memref<1x32x2xf32, #tpu.memory_space<vmem>>, %arg9: memref<144x512xbf16, #tpu.memory_space<vmem>>, %arg10: memref<32x546xbf16, #tpu.memory_space<vmem>>, %arg11: memref<288x512xbf16, #tpu.memory_space<vmem>>) attributes {dimension_semantics = [#tpu.dimension_semantics<parallel>], iteration_bounds = array<i64: 2>, scalar_prefetch = 0 : i64, scratch_operands = 3 : i64, tpu.core_type = #tpu.core_type<tc>, window_params = [{transform_indices = @transform_0, window_bounds = array<i64: 1, 16, 546>}, {pipeline_mode = #tpu.pipeline_mode<synchronous>, transform_indices = @transform_1, window_bounds = array<i64: 9, 512>}, {pipeline_mode = #tpu.pipeline_mode<synchronous>, transform_indices = @transform_2, window_bounds = array<i64: 32, 144>}, {pipeline_mode = #tpu.pipeline_mode<synchronous>, transform_indices = @transform_3, window_bounds = array<i64: 32, 1>}, {pipeline_mode = #tpu.pipeline_mode<synchronous>, transform_indices = @transform_4, window_bounds = array<i64: 32, 288>}, {pipeline_mode = #tpu.pipeline_mode<synchronous>, transform_indices = @transform_5, window_bounds = array<i64: 32, 1>}, {pipeline_mode = #tpu.pipeline_mode<synchronous>, transform_indices = @transform_6, window_bounds = array<i64: 512, 2>}, {transform_indices = @transform_7, window_bounds = array<i64: 1, 32, 2>}]} {
    %c0 = arith.constant 0 : index
    %c0_0 = arith.constant 0 : index
    %c0_1 = arith.constant 0 : index
    %0 = vector.load %arg1[%c0, %c0_0, %c0_1] : memref<1x16x546xbf16, #tpu.memory_space<vmem>>, vector<1x16x512xbf16>
    %1 = vector.shape_cast %0 : vector<1x16x512xbf16> to vector<16x512xbf16>
    %c0_2 = arith.constant 0 : index
    %c0_3 = arith.constant 0 : index
    %2 = vector.load %arg2[%c0_2, %c0_3] : memref<9x512xbf16, #tpu.memory_space<vmem>>, vector<1x512xbf16>
    %3 = vector.broadcast %2 : vector<1x512xbf16> to vector<16x512xbf16>
    %4 = arith.mulf %1, %3 : vector<16x512xbf16>
    %c0_4 = arith.constant 0 : index
    %c0_5 = arith.constant 0 : index
    %5 = vector.load %arg9[%c0_4, %c0_5] : memref<144x512xbf16, #tpu.memory_space<vmem>>, vector<16x512xbf16>
    tpu.vector_store %arg9[%c0_4, %c0_5], %4 {strides = array<i32>} : memref<144x512xbf16, #tpu.memory_space<vmem>>, vector<16x512xbf16>,
    %c0_6 = arith.constant 0 : index
    %c0_7 = arith.constant 0 : index
    %c1 = arith.constant 1 : index
    %6 = vector.load %arg1[%c0_6, %c0_7, %c1] : memref<1x16x546xbf16, #tpu.memory_space<vmem>>, vector<1x16x512xbf16>
    %7 = vector.shape_cast %6 : vector<1x16x512xbf16> to vector<16x512xbf16>
    %c1_8 = arith.constant 1 : index
    %c0_9 = arith.constant 0 : index
    %8 = vector.load %arg2[%c1_8, %c0_9] : memref<9x512xbf16, #tpu.memory_space<vmem>>, vector<1x512xbf16>
    %9 = vector.broadcast %8 : vector<1x512xbf16> to vector<16x512xbf16>
    %10 = arith.mulf %7, %9 : vector<16x512xbf16>
    %c16 = arith.constant 16 : index
    %c0_10 = arith.constant 0 : index
    %11 = vector.load %arg9[%c16, %c0_10] : memref<144x512xbf16, #tpu.memory_space<vmem>>, vector<16x512xbf16>
    tpu.vector_store %arg9[%c16, %c0_10], %10 {strides = array<i32>} : memref<144x512xbf16, #tpu.memory_space<vmem>>, vector<16x512xbf16>,
    %c0_11 = arith.constant 0 : index
    %c0_12 = arith.constant 0 : index
    %c2 = arith.constant 2 : index
    %12 = vector.load %arg1[%c0_11, %c0_12, %c2] : memref<1x16x546xbf16, #tpu.memory_space<vmem>>, vector<1x16x512xbf16>
    %13 = vector.shape_cast %12 : vector<1x16x512xbf16> to vector<16x512xbf16>
    %c2_13 = arith.constant 2 : index
    %c0_14 = arith.constant 0 : index
    %14 = vector.load %arg2[%c2_13, %c0_14] : memref<9x512xbf16, #tpu.memory_space<vmem>>, vector<1x512xbf16>
    %15 = vector.broadcast %14 : vector<1x512xbf16> to vector<16x512xbf16>
    %16 = arith.mulf %13, %15 : vector<16x512xbf16>
    %c32 = arith.constant 32 : index
    %c0_15 = arith.constant 0 : index
    %17 = vector.load %arg9[%c32, %c0_15] : memref<144x512xbf16, #tpu.memory_space<vmem>>, vector<16x512xbf16>
    tpu.vector_store %arg9[%c32, %c0_15], %16 {strides = array<i32>} : memref<144x512xbf16, #tpu.memory_space<vmem>>, vector<16x512xbf16>,
    %c0_16 = arith.constant 0 : index
    %c0_17 = arith.constant 0 : index
    %c16_18 = arith.constant 16 : index
    %18 = vector.load %arg1[%c0_16, %c0_17, %c16_18] : memref<1x16x546xbf16, #tpu.memory_space<vmem>>, vector<1x16x512xbf16>
    %19 = vector.shape_cast %18 : vector<1x16x512xbf16> to vector<16x512xbf16>
    %c3 = arith.constant 3 : index
    %c0_19 = arith.constant 0 : index
    %20 = vector.load %arg2[%c3, %c0_19] : memref<9x512xbf16, #tpu.memory_space<vmem>>, vector<1x512xbf16>
    %21 = vector.broadcast %20 : vector<1x512xbf16> to vector<16x512xbf16>
    %22 = arith.mulf %19, %21 : vector<16x512xbf16>
    %c48 = arith.constant 48 : index
    %c0_20 = arith.constant 0 : index
    %23 = vector.load %arg9[%c48, %c0_20] : memref<144x512xbf16, #tpu.memory_space<vmem>>, vector<16x512xbf16>
    tpu.vector_store %arg9[%c48, %c0_20], %22 {strides = array<i32>} : memref<144x512xbf16, #tpu.memory_space<vmem>>, vector<16x512xbf16>,
    %c0_21 = arith.constant 0 : index
    %c0_22 = arith.constant 0 : index
    %c17 = arith.constant 17 : index
    %24 = vector.load %arg1[%c0_21, %c0_22, %c17] : memref<1x16x546xbf16, #tpu.memory_space<vmem>>, vector<1x16x512xbf16>
    %25 = vector.shape_cast %24 : vector<1x16x512xbf16> to vector<16x512xbf16>
    %c4 = arith.constant 4 : index
    %c0_23 = arith.constant 0 : index
    %26 = vector.load %arg2[%c4, %c0_23] : memref<9x512xbf16, #tpu.memory_space<vmem>>, vector<1x512xbf16>
    %27 = vector.broadcast %26 : vector<1x512xbf16> to vector<16x512xbf16>
    %28 = arith.mulf %25, %27 : vector<16x512xbf16>
    %c64 = arith.constant 64 : index
    %c0_24 = arith.constant 0 : index
    %29 = vector.load %arg9[%c64, %c0_24] : memref<144x512xbf16, #tpu.memory_space<vmem>>, vector<16x512xbf16>
    tpu.vector_store %arg9[%c64, %c0_24], %28 {strides = array<i32>} : memref<144x512xbf16, #tpu.memory_space<vmem>>, vector<16x512xbf16>,
    %c0_25 = arith.constant 0 : index
    %c0_26 = arith.constant 0 : index
    %c18 = arith.constant 18 : index
    %30 = vector.load %arg1[%c0_25, %c0_26, %c18] : memref<1x16x546xbf16, #tpu.memory_space<vmem>>, vector<1x16x512xbf16>
    %31 = vector.shape_cast %30 : vector<1x16x512xbf16> to vector<16x512xbf16>
    %c5 = arith.constant 5 : index
    %c0_27 = arith.constant 0 : index
    %32 = vector.load %arg2[%c5, %c0_27] : memref<9x512xbf16, #tpu.memory_space<vmem>>, vector<1x512xbf16>
    %33 = vector.broadcast %32 : vector<1x512xbf16> to vector<16x512xbf16>
    %34 = arith.mulf %31, %33 : vector<16x512xbf16>
    %c80 = arith.constant 80 : index
    %c0_28 = arith.constant 0 : index
    %35 = vector.load %arg9[%c80, %c0_28] : memref<144x512xbf16, #tpu.memory_space<vmem>>, vector<16x512xbf16>
    tpu.vector_store %arg9[%c80, %c0_28], %34 {strides = array<i32>} : memref<144x512xbf16, #tpu.memory_space<vmem>>, vector<16x512xbf16>,
    %c0_29 = arith.constant 0 : index
    %c0_30 = arith.constant 0 : index
    %c32_31 = arith.constant 32 : index
    %36 = vector.load %arg1[%c0_29, %c0_30, %c32_31] : memref<1x16x546xbf16, #tpu.memory_space<vmem>>, vector<1x16x512xbf16>
    %37 = vector.shape_cast %36 : vector<1x16x512xbf16> to vector<16x512xbf16>
    %c6 = arith.constant 6 : index
    %c0_32 = arith.constant 0 : index
    %38 = vector.load %arg2[%c6, %c0_32] : memref<9x512xbf16, #tpu.memory_space<vmem>>, vector<1x512xbf16>
    %39 = vector.broadcast %38 : vector<1x512xbf16> to vector<16x512xbf16>
    %40 = arith.mulf %37, %39 : vector<16x512xbf16>
    %c96 = arith.constant 96 : index
    %c0_33 = arith.constant 0 : index
    %41 = vector.load %arg9[%c96, %c0_33] : memref<144x512xbf16, #tpu.memory_space<vmem>>, vector<16x512xbf16>
    tpu.vector_store %arg9[%c96, %c0_33], %40 {strides = array<i32>} : memref<144x512xbf16, #tpu.memory_space<vmem>>, vector<16x512xbf16>,
    %c0_34 = arith.constant 0 : index
    %c0_35 = arith.constant 0 : index
    %c33 = arith.constant 33 : index
    %42 = vector.load %arg1[%c0_34, %c0_35, %c33] : memref<1x16x546xbf16, #tpu.memory_space<vmem>>, vector<1x16x512xbf16>
    %43 = vector.shape_cast %42 : vector<1x16x512xbf16> to vector<16x512xbf16>
    %c7 = arith.constant 7 : index
    %c0_36 = arith.constant 0 : index
    %44 = vector.load %arg2[%c7, %c0_36] : memref<9x512xbf16, #tpu.memory_space<vmem>>, vector<1x512xbf16>
    %45 = vector.broadcast %44 : vector<1x512xbf16> to vector<16x512xbf16>
    %46 = arith.mulf %43, %45 : vector<16x512xbf16>
    %c112 = arith.constant 112 : index
    %c0_37 = arith.constant 0 : index
    %47 = vector.load %arg9[%c112, %c0_37] : memref<144x512xbf16, #tpu.memory_space<vmem>>, vector<16x512xbf16>
    tpu.vector_store %arg9[%c112, %c0_37], %46 {strides = array<i32>} : memref<144x512xbf16, #tpu.memory_space<vmem>>, vector<16x512xbf16>,
    %c0_38 = arith.constant 0 : index
    %c0_39 = arith.constant 0 : index
    %c34 = arith.constant 34 : index
    %48 = vector.load %arg1[%c0_38, %c0_39, %c34] : memref<1x16x546xbf16, #tpu.memory_space<vmem>>, vector<1x16x512xbf16>
    %49 = vector.shape_cast %48 : vector<1x16x512xbf16> to vector<16x512xbf16>
    %c8 = arith.constant 8 : index
    %c0_40 = arith.constant 0 : index
    %50 = vector.load %arg2[%c8, %c0_40] : memref<9x512xbf16, #tpu.memory_space<vmem>>, vector<1x512xbf16>
    %51 = vector.broadcast %50 : vector<1x512xbf16> to vector<16x512xbf16>
    %52 = arith.mulf %49, %51 : vector<16x512xbf16>
    %c128 = arith.constant 128 : index
    %c0_41 = arith.constant 0 : index
    %53 = vector.load %arg9[%c128, %c0_41] : memref<144x512xbf16, #tpu.memory_space<vmem>>, vector<16x512xbf16>
    tpu.vector_store %arg9[%c128, %c0_41], %52 {strides = array<i32>} : memref<144x512xbf16, #tpu.memory_space<vmem>>, vector<16x512xbf16>,
    %c0_42 = arith.constant 0 : index
    %c0_43 = arith.constant 0 : index
    %54 = vector.load %arg3[%c0_42, %c0_43] : memref<32x144xbf16, #tpu.memory_space<vmem>>, vector<32x144xbf16>
    %c0_44 = arith.constant 0 : index
    %c0_45 = arith.constant 0 : index
    %55 = vector.load %arg9[%c0_44, %c0_45] : memref<144x512xbf16, #tpu.memory_space<vmem>>, vector<144x512xbf16>
    %cst = arith.constant dense<0.000000e+00> : vector<32x512xf32>
    %56 = tpu.matmul %54, %55, %cst {dimension_numbers = #tpu.dot_dimension_numbers<[1], [0], [0], [1], [0, 0, 1, 1], [], []>} : vector<32x144xbf16>, vector<144x512xbf16>, vector<32x512xf32> -> vector<32x512xf32>
    %c0_46 = arith.constant 0 : index
    %c0_47 = arith.constant 0 : index
    %57 = vector.load %arg4[%c0_46, %c0_47] : memref<32x1xf32, #tpu.memory_space<vmem>>, vector<32x1xf32>
    %58 = vector.broadcast %57 : vector<32x1xf32> to vector<32x512xf32>
    %59 = arith.addf %56, %58 : vector<32x512xf32>
    %cst_48 = arith.constant 0.000000e+00 : f32
    %60 = vector.broadcast %cst_48 : f32 to vector<32x512xf32>
    %61 = arith.maximumf %59, %60 : vector<32x512xf32>
    %cst_49 = arith.constant 0.000000e+00 : bf16
    %62 = vector.broadcast %cst_49 : bf16 to vector<32x17xbf16>
    %c0_50 = arith.constant 0 : index
    %c0_51 = arith.constant 0 : index
    %63 = vector.load %arg10[%c0_50, %c0_51] : memref<32x546xbf16, #tpu.memory_space<vmem>>, vector<32x17xbf16>
    tpu.vector_store %arg10[%c0_50, %c0_51], %62 {strides = array<i32>} : memref<32x546xbf16, #tpu.memory_space<vmem>>, vector<32x17xbf16>,
    %cst_52 = arith.constant 0.000000e+00 : bf16
    %64 = vector.broadcast %cst_52 : bf16 to vector<32x17xbf16>
    %c0_53 = arith.constant 0 : index
    %c529 = arith.constant 529 : index
    %65 = vector.load %arg10[%c0_53, %c529] : memref<32x546xbf16, #tpu.memory_space<vmem>>, vector<32x17xbf16>
    tpu.vector_store %arg10[%c0_53, %c529], %64 {strides = array<i32>} : memref<32x546xbf16, #tpu.memory_space<vmem>>, vector<32x17xbf16>,
    %66 = arith.truncf %61 : vector<32x512xf32> to vector<32x512xbf16>
    %c0_54 = arith.constant 0 : index
    %c17_55 = arith.constant 17 : index
    %67 = vector.load %arg10[%c0_54, %c17_55] : memref<32x546xbf16, #tpu.memory_space<vmem>>, vector<32x512xbf16>
    tpu.vector_store %arg10[%c0_54, %c17_55], %66 {strides = array<i32>} : memref<32x546xbf16, #tpu.memory_space<vmem>>, vector<32x512xbf16>,
    %c0_56 = arith.constant 0 : index
    %c0_57 = arith.constant 0 : index
    %68 = vector.load %arg10[%c0_56, %c0_57] : memref<32x546xbf16, #tpu.memory_space<vmem>>, vector<32x512xbf16>
    %c0_58 = arith.constant 0 : index
    %c0_59 = arith.constant 0 : index
    %69 = vector.load %arg2[%c0_58, %c0_59] : memref<9x512xbf16, #tpu.memory_space<vmem>>, vector<1x512xbf16>
    %70 = vector.broadcast %69 : vector<1x512xbf16> to vector<32x512xbf16>
    %71 = arith.mulf %68, %70 : vector<32x512xbf16>
    %c0_60 = arith.constant 0 : index
    %c0_61 = arith.constant 0 : index
    %72 = vector.load %arg11[%c0_60, %c0_61] : memref<288x512xbf16, #tpu.memory_space<vmem>>, vector<32x512xbf16>
    tpu.vector_store %arg11[%c0_60, %c0_61], %71 {strides = array<i32>} : memref<288x512xbf16, #tpu.memory_space<vmem>>, vector<32x512xbf16>,
    %c0_62 = arith.constant 0 : index
    %c1_63 = arith.constant 1 : index
    %73 = vector.load %arg10[%c0_62, %c1_63] : memref<32x546xbf16, #tpu.memory_space<vmem>>, vector<32x512xbf16>
    %c1_64 = arith.constant 1 : index
    %c0_65 = arith.constant 0 : index
    %74 = vector.load %arg2[%c1_64, %c0_65] : memref<9x512xbf16, #tpu.memory_space<vmem>>, vector<1x512xbf16>
    %75 = vector.broadcast %74 : vector<1x512xbf16> to vector<32x512xbf16>
    %76 = arith.mulf %73, %75 : vector<32x512xbf16>
    %c32_66 = arith.constant 32 : index
    %c0_67 = arith.constant 0 : index
    %77 = vector.load %arg11[%c32_66, %c0_67] : memref<288x512xbf16, #tpu.memory_space<vmem>>, vector<32x512xbf16>
    tpu.vector_store %arg11[%c32_66, %c0_67], %76 {strides = array<i32>} : memref<288x512xbf16, #tpu.memory_space<vmem>>, vector<32x512xbf16>,
    %c0_68 = arith.constant 0 : index
    %c2_69 = arith.constant 2 : index
    %78 = vector.load %arg10[%c0_68, %c2_69] : memref<32x546xbf16, #tpu.memory_space<vmem>>, vector<32x512xbf16>
    %c2_70 = arith.constant 2 : index
    %c0_71 = arith.constant 0 : index
    %79 = vector.load %arg2[%c2_70, %c0_71] : memref<9x512xbf16, #tpu.memory_space<vmem>>, vector<1x512xbf16>
    %80 = vector.broadcast %79 : vector<1x512xbf16> to vector<32x512xbf16>
    %81 = arith.mulf %78, %80 : vector<32x512xbf16>
    %c64_72 = arith.constant 64 : index
    %c0_73 = arith.constant 0 : index
    %82 = vector.load %arg11[%c64_72, %c0_73] : memref<288x512xbf16, #tpu.memory_space<vmem>>, vector<32x512xbf16>
    tpu.vector_store %arg11[%c64_72, %c0_73], %81 {strides = array<i32>} : memref<288x512xbf16, #tpu.memory_space<vmem>>, vector<32x512xbf16>,
    %c0_74 = arith.constant 0 : index
    %c16_75 = arith.constant 16 : index
    %83 = vector.load %arg10[%c0_74, %c16_75] : memref<32x546xbf16, #tpu.memory_space<vmem>>, vector<32x512xbf16>
    %c3_76 = arith.constant 3 : index
    %c0_77 = arith.constant 0 : index
    %84 = vector.load %arg2[%c3_76, %c0_77] : memref<9x512xbf16, #tpu.memory_space<vmem>>, vector<1x512xbf16>
    %85 = vector.broadcast %84 : vector<1x512xbf16> to vector<32x512xbf16>
    %86 = arith.mulf %83, %85 : vector<32x512xbf16>
    %c96_78 = arith.constant 96 : index
    %c0_79 = arith.constant 0 : index
    %87 = vector.load %arg11[%c96_78, %c0_79] : memref<288x512xbf16, #tpu.memory_space<vmem>>, vector<32x512xbf16>
    tpu.vector_store %arg11[%c96_78, %c0_79], %86 {strides = array<i32>} : memref<288x512xbf16, #tpu.memory_space<vmem>>, vector<32x512xbf16>,
    %c0_80 = arith.constant 0 : index
    %c17_81 = arith.constant 17 : index
    %88 = vector.load %arg10[%c0_80, %c17_81] : memref<32x546xbf16, #tpu.memory_space<vmem>>, vector<32x512xbf16>
    %c4_82 = arith.constant 4 : index
    %c0_83 = arith.constant 0 : index
    %89 = vector.load %arg2[%c4_82, %c0_83] : memref<9x512xbf16, #tpu.memory_space<vmem>>, vector<1x512xbf16>
    %90 = vector.broadcast %89 : vector<1x512xbf16> to vector<32x512xbf16>
    %91 = arith.mulf %88, %90 : vector<32x512xbf16>
    %c128_84 = arith.constant 128 : index
    %c0_85 = arith.constant 0 : index
    %92 = vector.load %arg11[%c128_84, %c0_85] : memref<288x512xbf16, #tpu.memory_space<vmem>>, vector<32x512xbf16>
    tpu.vector_store %arg11[%c128_84, %c0_85], %91 {strides = array<i32>} : memref<288x512xbf16, #tpu.memory_space<vmem>>, vector<32x512xbf16>,
    %c0_86 = arith.constant 0 : index
    %c18_87 = arith.constant 18 : index
    %93 = vector.load %arg10[%c0_86, %c18_87] : memref<32x546xbf16, #tpu.memory_space<vmem>>, vector<32x512xbf16>
    %c5_88 = arith.constant 5 : index
    %c0_89 = arith.constant 0 : index
    %94 = vector.load %arg2[%c5_88, %c0_89] : memref<9x512xbf16, #tpu.memory_space<vmem>>, vector<1x512xbf16>
    %95 = vector.broadcast %94 : vector<1x512xbf16> to vector<32x512xbf16>
    %96 = arith.mulf %93, %95 : vector<32x512xbf16>
    %c160 = arith.constant 160 : index
    %c0_90 = arith.constant 0 : index
    %97 = vector.load %arg11[%c160, %c0_90] : memref<288x512xbf16, #tpu.memory_space<vmem>>, vector<32x512xbf16>
    tpu.vector_store %arg11[%c160, %c0_90], %96 {strides = array<i32>} : memref<288x512xbf16, #tpu.memory_space<vmem>>, vector<32x512xbf16>,
    %c0_91 = arith.constant 0 : index
    %c32_92 = arith.constant 32 : index
    %98 = vector.load %arg10[%c0_91, %c32_92] : memref<32x546xbf16, #tpu.memory_space<vmem>>, vector<32x512xbf16>
    %c6_93 = arith.constant 6 : index
    %c0_94 = arith.constant 0 : index
    %99 = vector.load %arg2[%c6_93, %c0_94] : memref<9x512xbf16, #tpu.memory_space<vmem>>, vector<1x512xbf16>
    %100 = vector.broadcast %99 : vector<1x512xbf16> to vector<32x512xbf16>
    %101 = arith.mulf %98, %100 : vector<32x512xbf16>
    %c192 = arith.constant 192 : index
    %c0_95 = arith.constant 0 : index
    %102 = vector.load %arg11[%c192, %c0_95] : memref<288x512xbf16, #tpu.memory_space<vmem>>, vector<32x512xbf16>
    tpu.vector_store %arg11[%c192, %c0_95], %101 {strides = array<i32>} : memref<288x512xbf16, #tpu.memory_space<vmem>>, vector<32x512xbf16>,
    %c0_96 = arith.constant 0 : index
    %c33_97 = arith.constant 33 : index
    %103 = vector.load %arg10[%c0_96, %c33_97] : memref<32x546xbf16, #tpu.memory_space<vmem>>, vector<32x512xbf16>
    %c7_98 = arith.constant 7 : index
    %c0_99 = arith.constant 0 : index
    %104 = vector.load %arg2[%c7_98, %c0_99] : memref<9x512xbf16, #tpu.memory_space<vmem>>, vector<1x512xbf16>
    %105 = vector.broadcast %104 : vector<1x512xbf16> to vector<32x512xbf16>
    %106 = arith.mulf %103, %105 : vector<32x512xbf16>
    %c224 = arith.constant 224 : index
    %c0_100 = arith.constant 0 : index
    %107 = vector.load %arg11[%c224, %c0_100] : memref<288x512xbf16, #tpu.memory_space<vmem>>, vector<32x512xbf16>
    tpu.vector_store %arg11[%c224, %c0_100], %106 {strides = array<i32>} : memref<288x512xbf16, #tpu.memory_space<vmem>>, vector<32x512xbf16>,
    %c0_101 = arith.constant 0 : index
    %c34_102 = arith.constant 34 : index
    %108 = vector.load %arg10[%c0_101, %c34_102] : memref<32x546xbf16, #tpu.memory_space<vmem>>, vector<32x512xbf16>
    %c8_103 = arith.constant 8 : index
    %c0_104 = arith.constant 0 : index
    %109 = vector.load %arg2[%c8_103, %c0_104] : memref<9x512xbf16, #tpu.memory_space<vmem>>, vector<1x512xbf16>
    %110 = vector.broadcast %109 : vector<1x512xbf16> to vector<32x512xbf16>
    %111 = arith.mulf %108, %110 : vector<32x512xbf16>
    %c256 = arith.constant 256 : index
    %c0_105 = arith.constant 0 : index
    %112 = vector.load %arg11[%c256, %c0_105] : memref<288x512xbf16, #tpu.memory_space<vmem>>, vector<32x512xbf16>
    tpu.vector_store %arg11[%c256, %c0_105], %111 {strides = array<i32>} : memref<288x512xbf16, #tpu.memory_space<vmem>>, vector<32x512xbf16>,
    %c0_106 = arith.constant 0 : index
    %c0_107 = arith.constant 0 : index
    %113 = vector.load %arg5[%c0_106, %c0_107] : memref<32x288xbf16, #tpu.memory_space<vmem>>, vector<32x288xbf16>
    %c0_108 = arith.constant 0 : index
    %c0_109 = arith.constant 0 : index
    %114 = vector.load %arg11[%c0_108, %c0_109] : memref<288x512xbf16, #tpu.memory_space<vmem>>, vector<288x512xbf16>
    %cst_110 = arith.constant dense<0.000000e+00> : vector<32x512xf32>
    %115 = tpu.matmul %113, %114, %cst_110 {dimension_numbers = #tpu.dot_dimension_numbers<[1], [0], [0], [1], [0, 0, 1, 1], [], []>} : vector<32x288xbf16>, vector<288x512xbf16>, vector<32x512xf32> -> vector<32x512xf32>
    %c0_111 = arith.constant 0 : index
    %c0_112 = arith.constant 0 : index
    %116 = vector.load %arg6[%c0_111, %c0_112] : memref<32x1xf32, #tpu.memory_space<vmem>>, vector<32x1xf32>
    %117 = vector.broadcast %116 : vector<32x1xf32> to vector<32x512xf32>
    %118 = arith.addf %115, %117 : vector<32x512xf32>
    %cst_113 = arith.constant 0.000000e+00 : f32
    %119 = vector.broadcast %cst_113 : f32 to vector<32x512xf32>
    %120 = arith.maximumf %118, %119 : vector<32x512xf32>
    %c0_114 = arith.constant 0 : index
    %c0_115 = arith.constant 0 : index
    %121 = vector.load %arg7[%c0_114, %c0_115] : memref<512x2xf32, #tpu.memory_space<vmem>>, vector<512x2xf32>
    %cst_116 = arith.constant dense<0.000000e+00> : vector<32x2xf32>
    %122 = tpu.matmul %120, %121, %cst_116 {dimension_numbers = #tpu.dot_dimension_numbers<[1], [0], [0], [1], [0, 0, 1, 1], [], []>} : vector<32x512xf32>, vector<512x2xf32>, vector<32x2xf32> -> vector<32x2xf32>
    %c0_117 = arith.constant 0 : index
    %c0_118 = arith.constant 0 : index
    %c0_119 = arith.constant 0 : index
    %123 = vector.load %arg8[%c0_117, %c0_118, %c0_119] : memref<1x32x2xf32, #tpu.memory_space<vmem>>, vector<1x32x2xf32>
    %124 = vector.shape_cast %123 : vector<1x32x2xf32> to vector<32x2xf32>
    %125 = vector.shape_cast %122 : vector<32x2xf32> to vector<1x32x2xf32>
    tpu.vector_store %arg8[%c0_117, %c0_118, %c0_119], %125 {strides = array<i32>} : memref<1x32x2xf32, #tpu.memory_space<vmem>>, vector<1x32x2xf32>,
    return
  }
  func.func @transform_0(%arg0: i32) -> (i32, i32, i32) {
    %c0_i32 = arith.constant 0 : i32
    %c0_i32_0 = arith.constant 0 : i32
    %c0_i32_1 = arith.constant 0 : i32
    return %arg0, %c0_i32, %c0_i32_0 : i32, i32, i32
  }
  func.func @transform_1(%arg0: i32) -> (i32, i32) {
    %c0_i32 = arith.constant 0 : i32
    %c0_i32_0 = arith.constant 0 : i32
    %c0_i32_1 = arith.constant 0 : i32
    return %c0_i32, %c0_i32_0 : i32, i32
  }
  func.func @transform_2(%arg0: i32) -> (i32, i32) {
    %c0_i32 = arith.constant 0 : i32
    %c0_i32_0 = arith.constant 0 : i32
    %c0_i32_1 = arith.constant 0 : i32
    return %c0_i32, %c0_i32_0 : i32, i32
  }
  func.func @transform_3(%arg0: i32) -> (i32, i32) {
    %c0_i32 = arith.constant 0 : i32
    %c0_i32_0 = arith.constant 0 : i32
    %c0_i32_1 = arith.constant 0 : i32
    return %c0_i32, %c0_i32_0 : i32, i32
  }
  func.func @transform_4(%arg0: i32) -> (i32, i32) {
    %c0_i32 = arith.constant 0 : i32
    %c0_i32_0 = arith.constant 0 : i32
    %c0_i32_1 = arith.constant 0 : i32
    return %c0_i32, %c0_i32_0 : i32, i32
  }
  func.func @transform_5(%arg0: i32) -> (i32, i32) {
    %c0_i32 = arith.constant 0 : i32
    %c0_i32_0 = arith.constant 0 : i32
    %c0_i32_1 = arith.constant 0 : i32
    return %c0_i32, %c0_i32_0 : i32, i32
  }
  func.func @transform_6(%arg0: i32) -> (i32, i32) {
    %c0_i32 = arith.constant 0 : i32
    %c0_i32_0 = arith.constant 0 : i32
    %c0_i32_1 = arith.constant 0 : i32
    return %c0_i32, %c0_i32_0 : i32, i32
  }
  func.func @transform_7(%arg0: i32) -> (i32, i32, i32) {
    %c0_i32 = arith.constant 0 : i32
    %c0_i32_0 = arith.constant 0 : i32
    %c0_i32_1 = arith.constant 0 : i32
    return %arg0, %c0_i32, %c0_i32_0 : i32, i32, i32
  }
}

</mosaic_0001>

<llo_original>
// kernel: transparent_superpixel_encoder_forward.1
$region0: #{transparent_superpixel_encoder_forward.1}
  #allocation0 [shape = 'u32[]', space=smem, size = 0x4, offset = 0x4, fixed_abs, tag = 'smem constant byte address 0x4 - core index']
  #allocation1 [shape = 'u32[72,128]{1,0:T(1,128)}', space=vmem, size = 0x9000, scoped, tag = 'internal scratch']
  #allocation2 [shape = 'bf16[144,512]{1,0:T(8,128)(2,1)}', space=vmem, size = 0x24000, scoped, tag = 'scratch operand']
  #allocation3 [shape = 'bf16[32,546]{1,0:T(8,128)(2,1)}', space=vmem, size = 0xa000, scoped, tag = 'scratch operand']
  #allocation4 [shape = 'bf16[288,512]{1,0:T(8,128)(2,1)}', space=vmem, size = 0x48000, scoped, tag = 'scratch operand']
  %s0 = inlined_call_operand.vmem [shape: bf16[2,16,546], index: 0, kind: input, shape index: {}]
  %s1 = inlined_call_operand.vmem [shape: bf16[9,512], index: 1, kind: input, shape index: {}]
  %s2 = inlined_call_operand.vmem [shape: bf16[32,144], index: 2, kind: input, shape index: {}]
  %s3 = inlined_call_operand.vmem [shape: f32[32,1], index: 3, kind: input, shape index: {}]
  %s4 = inlined_call_operand.vmem [shape: bf16[32,288], index: 4, kind: input, shape index: {}]
  %s5 = inlined_call_operand.vmem [shape: f32[32,1], index: 5, kind: input, shape index: {}]
  %s6 = inlined_call_operand.vmem [shape: f32[512,2], index: 6, kind: input, shape index: {}]
  %s7 = inlined_call_operand.vmem [shape: f32[2,32,2], index: 7, kind: output, shape index: {}]
  %s8 = sld [smem:[#allocation0]]
  $region61: #{transparent_superpixel_encoder_forward.1} parent=0
    _
  %s10 = ssub.s32 1, %s8
  %s11 = scalar_select 0, %s10, %s8
  loop: start=0, step=1, limit=4
  $region2: #{transparent_superpixel_encoder_forward.1} parent=0 // loop_pre_header
    _
  $region3: #{transparent_superpixel_encoder_forward.1} parent=0 // loop_header
    %s13 = sphi 0, %s17
    %p14 = scmp.ge.s32.totalorder %s13, 4
    %s23 = sphi 0, %s25
    %s26 = sphi 0, %s23
    %s27 = sphi 0, %s26
    %s43 = sphi 0, %s27
    %s47 = sphi 0, %s47
    %s49 = sphi 0, %s47
    %s50 = sphi 0, %s49
    %s64 = sphi 0, %s50
    %s68 = sphi 0, %s68
    %s70 = sphi 0, %s68
    %s71 = sphi 0, %s70
    %s85 = sphi 0, %s71
    %s89 = sphi 0, %s89
    %s91 = sphi 0, %s89
    %s92 = sphi 0, %s91
    %s106 = sphi 0, %s92
    %s110 = sphi 0, %s110
    %s112 = sphi 0, %s110
    %s113 = sphi 0, %s112
    %s127 = sphi 0, %s113
    %s131 = sphi 0, %s131
    %s133 = sphi 0, %s131
    %s134 = sphi 0, %s133
    %s148 = sphi 0, %s134
    %s152 = sphi 0, %s152
    %s154 = sphi 0, %s152
    %s155 = sphi 0, %s154
    %s169 = sphi 0, %s155
    %s175 = sphi 0, %s177
    %s178 = sphi 0, %s175
    %s179 = sphi 0, %s178
    %s195 = sphi 0, %s179
  $region4: #{transparent_superpixel_encoder_forward.1} parent=0 // loop_header_branch
    %16 = sbr.rel (%p14) target = $region8
  $region5: #{transparent_superpixel_encoder_forward.1} parent=0 // loop_body
    %s18 = ssub.s32 %s13, 1
    %s19 = ssub.s32 %s13, 2
    %s20 = sadd.s32 %s13, 1
    %s21 = ssub.s32 %s13, %s20
    %p22 = scmp.eq.s32.totalorder %s21, 0
    %s24 = sadd.s32 %s23, 1
    %s25 = scalar_select %p22, %s23, %s24
    %p28 = pneg %p22
    %p29 = scmp.eq.s32.totalorder %s13, 1
    %p30 = por %p28, %p29
    %p31 = scmp.ne.s32.totalorder %s23, %s26
    %p32 = scmp.eq.s32.totalorder %s13, 0
    %p33 = por %p31, %p32
    %p34 = scmp.ne.s32.totalorder %s23, %s26
    %p35 = scmp.eq.s32.totalorder %s18, 1
    %p36 = por %p34, %p35
    %p37 = scmp.ne.s32.totalorder %s26, %s27
    %p38 = scmp.eq.s32.totalorder %s18, 0
    %p39 = por %p37, %p38
    %p40 = scmp.ne.s32.totalorder %s26, %s27
    %p41 = scmp.eq.s32.totalorder %s19, 1
    %p42 = por %p40, %p41
    %p44 = scmp.ne.s32.totalorder %s27, %s43
    %p45 = scmp.eq.s32.totalorder %s19, 0
    %p46 = por %p44, %p45
    %s48 = sadd.s32 %s47, 1
    %p51 = scmp.eq.s32.totalorder %s13, 1
    %p52 = scmp.ne.s32.totalorder %s47, %s49
    %p53 = scmp.eq.s32.totalorder %s13, 0
    %p54 = por %p52, %p53
    %p55 = scmp.ne.s32.totalorder %s47, %s49
    %p56 = scmp.eq.s32.totalorder %s18, 1
    %p57 = por %p55, %p56
    %p58 = scmp.ne.s32.totalorder %s49, %s50
    %p59 = scmp.eq.s32.totalorder %s18, 0
    %p60 = por %p58, %p59
    %p61 = scmp.ne.s32.totalorder %s49, %s50
    %p62 = scmp.eq.s32.totalorder %s19, 1
    %p63 = por %p61, %p62
    %p65 = scmp.ne.s32.totalorder %s50, %s64
    %p66 = scmp.eq.s32.totalorder %s19, 0
    %p67 = por %p65, %p66
    %s69 = sadd.s32 %s68, 1
    %p72 = scmp.eq.s32.totalorder %s13, 1
    %p73 = scmp.ne.s32.totalorder %s68, %s70
    %p74 = scmp.eq.s32.totalorder %s13, 0
    %p75 = por %p73, %p74
    %p76 = scmp.ne.s32.totalorder %s68, %s70
    %p77 = scmp.eq.s32.totalorder %s18, 1
    %p78 = por %p76, %p77
    %p79 = scmp.ne.s32.totalorder %s70, %s71
    %p80 = scmp.eq.s32.totalorder %s18, 0
    %p81 = por %p79, %p80
    %p82 = scmp.ne.s32.totalorder %s70, %s71
    %p83 = scmp.eq.s32.totalorder %s19, 1
    %p84 = por %p82, %p83
    %p86 = scmp.ne.s32.totalorder %s71, %s85
    %p87 = scmp.eq.s32.totalorder %s19, 0
    %p88 = por %p86, %p87
    %s90 = sadd.s32 %s89, 1
    %p93 = scmp.eq.s32.totalorder %s13, 1
    %p94 = scmp.ne.s32.totalorder %s89, %s91
    %p95 = scmp.eq.s32.totalorder %s13, 0
    %p96 = por %p94, %p95
    %p97 = scmp.ne.s32.totalorder %s89, %s91
    %p98 = scmp.eq.s32.totalorder %s18, 1
    %p99 = por %p97, %p98
    %p100 = scmp.ne.s32.totalorder %s91, %s92
    %p101 = scmp.eq.s32.totalorder %s18, 0
    %p102 = por %p100, %p101
    %p103 = scmp.ne.s32.totalorder %s91, %s92
    %p104 = scmp.eq.s32.totalorder %s19, 1
    %p105 = por %p103, %p104
    %p107 = scmp.ne.s32.totalorder %s92, %s106
    %p108 = scmp.eq.s32.totalorder %s19, 0
    %p109 = por %p107, %p108
    %s111 = sadd.s32 %s110, 1
    %p114 = scmp.eq.s32.totalorder %s13, 1
    %p115 = scmp.ne.s32.totalorder %s110, %s112
    %p116 = scmp.eq.s32.totalorder %s13, 0
    %p117 = por %p115, %p116
    %p118 = scmp.ne.s32.totalorder %s110, %s112
    %p119 = scmp.eq.s32.totalorder %s18, 1
    %p120 = por %p118, %p119
    %p121 = scmp.ne.s32.totalorder %s112, %s113
    %p122 = scmp.eq.s32.totalorder %s18, 0
    %p123 = por %p121, %p122
    %p124 = scmp.ne.s32.totalorder %s112, %s113
    %p125 = scmp.eq.s32.totalorder %s19, 1
    %p126 = por %p124, %p125
    %p128 = scmp.ne.s32.totalorder %s113, %s127
    %p129 = scmp.eq.s32.totalorder %s19, 0
    %p130 = por %p128, %p129
    %s132 = sadd.s32 %s131, 1
    %p135 = scmp.eq.s32.totalorder %s13, 1
    %p136 = scmp.ne.s32.totalorder %s131, %s133
    %p137 = scmp.eq.s32.totalorder %s13, 0
    %p138 = por %p136, %p137
    %p139 = scmp.ne.s32.totalorder %s131, %s133
    %p140 = scmp.eq.s32.totalorder %s18, 1
    %p141 = por %p139, %p140
    %p142 = scmp.ne.s32.totalorder %s133, %s134
    %p143 = scmp.eq.s32.totalorder %s18, 0
    %p144 = por %p142, %p143
    %p145 = scmp.ne.s32.totalorder %s133, %s134
    %p146 = scmp.eq.s32.totalorder %s19, 1
    %p147 = por %p145, %p146
    %p149 = scmp.ne.s32.totalorder %s134, %s148
    %p150 = scmp.eq.s32.totalorder %s19, 0
    %p151 = por %p149, %p150
    %s153 = sadd.s32 %s152, 1
    %p156 = scmp.eq.s32.totalorder %s13, 1
    %p157 = scmp.ne.s32.totalorder %s152, %s154
    %p158 = scmp.eq.s32.totalorder %s13, 0
    %p159 = por %p157, %p158
    %p160 = scmp.ne.s32.totalorder %s152, %s154
    %p161 = scmp.eq.s32.totalorder %s18, 1
    %p162 = por %p160, %p161
    %p163 = scmp.ne.s32.totalorder %s154, %s155
    %p164 = scmp.eq.s32.totalorder %s18, 0
    %p165 = por %p163, %p164
    %p166 = scmp.ne.s32.totalorder %s154, %s155
    %p167 = scmp.eq.s32.totalorder %s19, 1
    %p168 = por %p166, %p167
    %p170 = scmp.ne.s32.totalorder %s155, %s169
    %p171 = scmp.eq.s32.totalorder %s19, 0
    %p172 = por %p170, %p171
    %s173 = ssub.s32 %s13, %s20
    %p174 = scmp.eq.s32.totalorder %s173, 0
    %s176 = sadd.s32 %s175, 1
    %s177 = scalar_select %p174, %s175, %s176
    %p180 = pneg %p174
    %p181 = scmp.eq.s32.totalorder %s13, 1
    %p182 = por %p180, %p181
    %p183 = scmp.ne.s32.totalorder %s175, %s178
    %p184 = scmp.eq.s32.totalorder %s13, 0
    %p185 = por %p183, %p184
    %p186 = scmp.ne.s32.totalorder %s175, %s178
    %p187 = scmp.eq.s32.totalorder %s18, 1
    %p188 = por %p186, %p187
    %p189 = scmp.ne.s32.totalorder %s178, %s179
    %p190 = scmp.eq.s32.totalorder %s18, 0
    %p191 = por %p189, %p190
    %p192 = scmp.ne.s32.totalorder %s178, %s179
    %p193 = scmp.eq.s32.totalorder %s19, 1
    %p194 = por %p192, %p193
    %p196 = scmp.ne.s32.totalorder %s179, %s195
    %p197 = scmp.eq.s32.totalorder %s19, 0
    %p198 = por %p196, %p197
    %p199 = scmp.le.s32.totalorder 1, %s13
    %p200 = scmp.lt.s32.totalorder %s13, 3
    %p201 = pnand %p199, %p200
    %p202 = pneg %p201
    // Predicated region
    $region9: #{transparent_superpixel_encoder_forward.1} parent=5 // pred_check
      _
    $region10: #{transparent_superpixel_encoder_forward.1} parent=5 // pred_check_branch
      %204 = sbr.rel (%p201) target = $region12
    $region11: #{transparent_superpixel_encoder_forward.1} parent=5 // pred_region
      %s205 = ssub.s32 %s13, 1
      // Predicated region
      $region13: #{transparent_superpixel_encoder_forward.1} parent=11 // pred_check
        %p206 = pneg %p60
      $region14: #{transparent_superpixel_encoder_forward.1} parent=11 // pred_check_branch
        %208 = sbr.rel (%p206) target = $region16
      $region15: #{transparent_superpixel_encoder_forward.1} parent=11 // pred_region
        _
      $region16: #{transparent_superpixel_encoder_forward.1} parent=11 // pred_fallthru
        _
      // Predicated region
      $region17: #{transparent_superpixel_encoder_forward.1} parent=11 // pred_check
        %p209 = pneg %p81
      $region18: #{transparent_superpixel_encoder_forward.1} parent=11 // pred_check_branch
        %211 = sbr.rel (%p209) target = $region20
      $region19: #{transparent_superpixel_encoder_forward.1} parent=11 // pred_region
        _
      $region20: #{transparent_superpixel_encoder_forward.1} parent=11 // pred_fallthru
        _
      // Predicated region
      $region21: #{transparent_superpixel_encoder_forward.1} parent=11 // pred_check
        %p212 = pneg %p102
      $region22: #{transparent_superpixel_encoder_forward.1} parent=11 // pred_check_branch
        %214 = sbr.rel (%p212) target = $region24
      $region23: #{transparent_superpixel_encoder_forward.1} parent=11 // pred_region
        _
      $region24: #{transparent_superpixel_encoder_forward.1} parent=11 // pred_fallthru
        _
      // Predicated region
      $region25: #{transparent_superpixel_encoder_forward.1} parent=11 // pred_check
        %p215 = pneg %p123
      $region26: #{transparent_superpixel_encoder_forward.1} parent=11 // pred_check_branch
        %217 = sbr.rel (%p215) target = $region28
      $region27: #{transparent_superpixel_encoder_forward.1} parent=11 // pred_region
        _
      $region28: #{transparent_superpixel_encoder_forward.1} parent=11 // pred_fallthru
        _
      // Predicated region
      $region29: #{transparent_superpixel_encoder_forward.1} parent=11 // pred_check
        %p218 = pneg %p144
      $region30: #{transparent_superpixel_encoder_forward.1} parent=11 // pred_check_branch
        %220 = sbr.rel (%p218) target = $region32
      $region31: #{transparent_superpixel_encoder_forward.1} parent=11 // pred_region
        _
      $region32: #{transparent_superpixel_encoder_forward.1} parent=11 // pred_fallthru
        _
      // Predicated region
      $region33: #{transparent_superpixel_encoder_forward.1} parent=11 // pred_check
        %p221 = pneg %p165
      $region34: #{transparent_superpixel_encoder_forward.1} parent=11 // pred_check_branch
        %223 = sbr.rel (%p221) target = $region36
      $region35: #{transparent_superpixel_encoder_forward.1} parent=11 // pred_region
        _
      $region36: #{transparent_superpixel_encoder_forward.1} parent=11 // pred_fallthru
        _
    $region12: #{transparent_superpixel_encoder_forward.1} parent=5 // pred_fallthru
      _
    %p224 = scmp.lt.s32.totalorder %s13, 2
    // Predicated region
    $region37: #{transparent_superpixel_encoder_forward.1} parent=5 // pred_check
      %p225 = pneg %p224
    $region38: #{transparent_superpixel_encoder_forward.1} parent=5 // pred_check_branch
      %227 = sbr.rel (%p225) target = $region40
    $region39: #{transparent_superpixel_encoder_forward.1} parent=5 // pred_region
      // Predicated region
      $region41: #{transparent_superpixel_encoder_forward.1} parent=39 // pred_check
        %p228 = pneg %p33
      $region42: #{transparent_superpixel_encoder_forward.1} parent=39 // pred_check_branch
        %230 = sbr.rel (%p228) target = $region44
      $region43: #{transparent_superpixel_encoder_forward.1} parent=39 // pred_region
        %p231 = scmp.lt.s32.totalorder %s13, 1
        %s232 = scalar_select %p231, %s13, 1
        %s233 = smul.addr %s232, 10
        %s234 = smul.addr %s233, 4
        %s235 = scalar_lea.vmem %s0, %s234
      $region44: #{transparent_superpixel_encoder_forward.1} parent=39 // pred_fallthru
        _
    $region40: #{transparent_superpixel_encoder_forward.1} parent=5 // pred_fallthru
      _
    %p236 = scmp.le.s32.totalorder 1, %s13
    %p237 = scmp.lt.s32.totalorder %s13, 3
    %p238 = pnand %p236, %p237
    %p239 = pneg %p238
    // Predicated region
    $region45: #{transparent_superpixel_encoder_forward.1} parent=5 // pred_check
      _
    $region46: #{transparent_superpixel_encoder_forward.1} parent=5 // pred_check_branch
      %241 = sbr.rel (%p238) target = $region48
    $region47: #{transparent_superpixel_encoder_forward.1} parent=5 // pred_region
      %s242 = ssub.s32 %s13, 1
      %p243 = scmp.lt.s32.totalorder %s18, 1
      %s244 = scalar_select %p243, %s18, 1
      %s245 = smul.addr %s244, 10
      %s246 = smul.addr %s245, 4
      %s247 = scalar_lea.vmem %s0, %s246
      %p248 = pneg %p39
      %p249 = pneg %p36
      %p250 = pneg %p60
      %p251 = pneg %p57
      %p252 = pneg %p81
      %p253 = pneg %p78
      %p254 = pneg %p102
      %p255 = pneg %p99
      %p256 = pneg %p123
      %p257 = pneg %p120
      %p258 = pneg %p144
      %p259 = pneg %p141
      %p260 = pneg %p165
      %p261 = pneg %p162
      %p262 = pneg %p191
      %p263 = pneg %p188
      %p264 = scmp.lt.s32.totalorder %s18, 1
      %s265 = scalar_select %p264, %s18, 1
      %s266 = smul.addr %s265, 4
      %s267 = smul.addr %s266, 8
      %s268 = scalar_lea.vmem %s7, %s267
      %p269 = scmp.lt.s32.totalorder %s18, 1
      %s270 = scalar_select %p269, %s18, 1
      %s271 = smul.addr %s270, 10
      %s272 = smul.addr %s271, 4
      %s273 = scalar_lea.vmem %s0, %s272
      %p274 = scmp.lt.s32.totalorder %s18, 1
      %s275 = scalar_select %p274, %s18, 1
      %s276 = smul.addr %s275, 4
      %s277 = smul.addr %s276, 8
      %s278 = scalar_lea.vmem %s7, %s277
      %v280 = vld [vmem:[%s273] sm:$0xff]
      %v281 = vld [vmem:[%s273 + $0x8] sm:$0xff]
      %v282 = vld [vmem:[%s273 + $0x14] sm:$0xff]
      %v283 = vld [vmem:[%s273 + $0x1c] sm:$0xff]
      %v284 = vld [vmem:[%s1] sm:$0x11]
      %v285 = vld [vmem:[%s1 + $0x8] sm:$0x11]
      %v288 = vunpack.c.l.b16 %v284
      %v289 = vunpack.c.h.b16 %v284
      %v290 = vunpack.c.l.b16 %v285
      %v291 = vunpack.c.h.b16 %v285
      %v292 = vpack.c.b16 %v288, %v288
      %v293 = vpack.c.b16 %v289, %v289
      %v294 = vpack.c.b16 %v290, %v290
      %v295 = vpack.c.b16 %v291, %v291
      %v297 = vpack.i.b16 %v292, %v292
      %v299 = vperm.slane %v297, 0
      %v301 = vpack.i.b16 %v293, %v293
      %v303 = vperm.slane %v301, 0
      %v305 = vpack.i.b16 %v294, %v294
      %v307 = vperm.slane %v305, 0
      %v309 = vpack.i.b16 %v295, %v295
      %v311 = vperm.slane %v309, 0
      %v312 = vunpack.c.l.bf16 %v280
      %v313 = vunpack.c.h.bf16 %v280
      %v314 = vunpack.c.l.bf16 %v281
      %v315 = vunpack.c.h.bf16 %v281
      %v316 = vunpack.c.l.bf16 %v282
      %v317 = vunpack.c.h.bf16 %v282
      %v318 = vunpack.c.l.bf16 %v283
      %v319 = vunpack.c.h.bf16 %v283
      %v320 = vunpack.c.l.bf16 %v299
      %v321 = vunpack.c.l.bf16 %v303
      %v322 = vunpack.c.l.bf16 %v307
      %v323 = vunpack.c.l.bf16 %v311
      %v324 = vmul.f32 %v312, %v320
      %v325 = vmul.f32 %v313, %v321
      %v326 = vmul.f32 %v314, %v322
      %v327 = vmul.f32 %v315, %v323
      %v328 = vmul.f32 %v316, %v320
      %v329 = vmul.f32 %v317, %v321
      %v330 = vmul.f32 %v318, %v322
      %v331 = vmul.f32 %v319, %v323
      %v332 = vpack.c.bf16 %v325, %v324
      %v333 = vpack.c.bf16 %v327, %v326
      %v334 = vpack.c.bf16 %v329, %v328
      %v335 = vpack.c.bf16 %v331, %v330
      %336 = vst [vmem:[#allocation2] sm:$0xff] %v332
      %337 = vst [vmem:[#allocation2 + $0x8] sm:$0xff] %v333
      %338 = vst [vmem:[#allocation2 + $0x10] sm:$0xff] %v334
      %339 = vst [vmem:[#allocation2 + $0x18] sm:$0xff] %v335
      %v340 = vld [vmem:[%s273] sm:$0xff]
      %v341 = vld [vmem:[%s273 + $0x8] sm:$0xff]
      %v342 = vld [vmem:[%s273 + $0x10] sm:$0xf]
      %v343 = vld [vmem:[%s273 + $0x14] sm:$0xff]
      %v344 = vld [vmem:[%s273 + $0x1c] sm:$0xff]
      %v345 = vld [vmem:[%s273 + $0x24] sm:$0xf]
      %v346 = vld [vmem:[%s1] sm:$0x11]
      %v347 = vld [vmem:[%s1 + $0x8] sm:$0x11]
      %v350 = vunpack.c.l.b16 %v346
      %v351 = vunpack.c.h.b16 %v346
      %v352 = vunpack.c.l.b16 %v347
      %v353 = vunpack.c.h.b16 %v347
      %v354 = vpack.c.b16 %v350, %v350
      %v355 = vpack.c.b16 %v351, %v351
      %v356 = vpack.c.b16 %v352, %v352
      %v357 = vpack.c.b16 %v353, %v353
      %v359 = vshrl.u32 %v354, 16
      %v360 = vpack.i.b16 %v359, %v359
      %v362 = vperm.slane %v360, 0
      %v364 = vshrl.u32 %v355, 16
      %v365 = vpack.i.b16 %v364, %v364
      %v367 = vperm.slane %v365, 0
      %v369 = vshrl.u32 %v356, 16
      %v370 = vpack.i.b16 %v369, %v369
      %v372 = vperm.slane %v370, 0
      %v374 = vshrl.u32 %v357, 16
      %v375 = vpack.i.b16 %v374, %v374
      %v377 = vperm.slane %v375, 0
      %v378 = vunpack.c.l.bf16 %v340
      %v379 = vunpack.c.h.bf16 %v340
      %v380 = vunpack.c.l.bf16 %v341
      %v381 = vunpack.c.h.bf16 %v341
      %v382 = vunpack.c.l.bf16 %v342
      %v383 = vunpack.c.l.bf16 %v343
      %v384 = vunpack.c.h.bf16 %v343
      %v385 = vunpack.c.l.bf16 %v344
      %v386 = vunpack.c.h.bf16 %v344
      %v387 = vunpack.c.l.bf16 %v345
      %v388 = vunpack.c.l.bf16 %v362
      %v389 = vunpack.c.l.bf16 %v367
      %v390 = vunpack.c.l.bf16 %v372
      %v391 = vunpack.c.l.bf16 %v377
      %396 = vrot.lane.b32.xlu0 %v388, 1
      %v397 = vpop.permute.xlu0 %396
      %398 = vrot.lane.b32.xlu0 %v389, 1
      %v399 = vpop.permute.xlu0 %398
      %400 = vrot.lane.b32.xlu0 %v390, 1
      %v401 = vpop.permute.xlu0 %400
      %402 = vrot.lane.b32.xlu0 %v391, 1
      %v403 = vpop.permute.xlu0 %402
      %vm404 = vcmask 7168
      %v405 = vsel %vm404, %v397, %v399
      %v406 = vsel %vm404, %v399, %v401
      %v407 = vsel %vm404, %v401, %v403
      %v413 = vmul.f32 %v378, %v397
      %v414 = vmul.f32 %v379, %v405
      %v415 = vmul.f32 %v380, %v406
      %v416 = vmul.f32 %v381, %v407
      %v417 = vmul.f32 %v382, %v403
      %v418 = vmul.f32 %v383, %v397
      %v419 = vmul.f32 %v384, %v405
      %v420 = vmul.f32 %v385, %v406
      %v421 = vmul.f32 %v386, %v407
      %v422 = vmul.f32 %v387, %v403
      %v423 = vpack.c.bf16 %v414, %v413
      %v424 = vpack.c.bf16 %v416, %v415
      %v425 = vpack.c.bf16 %v417, %v417
      %v426 = vpack.c.bf16 %v419, %v418
      %v427 = vpack.c.bf16 %v421, %v420
      %v428 = vpack.c.bf16 %v422, %v422
      %435 = vrot.lane.b32.xlu0 %v423, 127
      %v436 = vpop.permute.xlu0 %435
      %437 = vrot.lane.b32.xlu0 %v424, 127
      %v438 = vpop.permute.xlu0 %437
      %439 = vrot.lane.b32.xlu0 %v425, 127
      %v440 = vpop.permute.xlu0 %439
      %441 = vrot.lane.b32.xlu0 %v426, 127
      %v442 = vpop.permute.xlu0 %441
      %443 = vrot.lane.b32.xlu0 %v427, 127
      %v444 = vpop.permute.xlu0 %443
      %445 = vrot.lane.b32.xlu0 %v428, 127
      %v446 = vpop.permute.xlu0 %445
      %v447 = vrot.slane %v436, 4
      %v448 = vrot.slane %v438, 4
      %v449 = vrot.slane %v440, 4
      %v450 = vrot.slane %v442, 4
      %v451 = vrot.slane %v444, 4
      %v452 = vrot.slane %v446, 4
      %vm453 = vcmask 1043456
      %v454 = vsel %vm453, %v447, %v448
      %vm455 = vcmask 1039360
      %v456 = vsel %vm455, %v436, %v454
      %v457 = vsel %vm453, %v448, %v449
      %v458 = vsel %vm455, %v438, %v457
      %v459 = vsel %vm453, %v450, %v451
      %v460 = vsel %vm455, %v442, %v459
      %v461 = vsel %vm453, %v451, %v452
      %v462 = vsel %vm455, %v444, %v461
      %467 = vst [vmem:[#allocation2 + $0x20] sm:$0xff] %v456
      %468 = vst [vmem:[#allocation2 + $0x28] sm:$0xff] %v458
      %469 = vst [vmem:[#allocation2 + $0x30] sm:$0xff] %v460
      %470 = vst [vmem:[#allocation2 + $0x38] sm:$0xff] %v462
      %v471 = vld [vmem:[%s273] sm:$0xff]
      %v472 = vld [vmem:[%s273 + $0x8] sm:$0xff]
      %v473 = vld [vmem:[%s273 + $0x10] sm:$0xf]
      %v474 = vld [vmem:[%s273 + $0x14] sm:$0xff]
      %v475 = vld [vmem:[%s273 + $0x1c] sm:$0xff]
      %v476 = vld [vmem:[%s273 + $0x24] sm:$0xf]
      %v477 = vld [vmem:[%s1] sm:$0x22]
      %v478 = vld [vmem:[%s1 + $0x8] sm:$0x22]
      %v481 = vunpack.c.l.b16 %v477
      %v482 = vunpack.c.h.b16 %v477
      %v483 = vunpack.c.l.b16 %v478
      %v484 = vunpack.c.h.b16 %v478
      %v485 = vpack.c.b16 %v481, %v481
      %v486 = vpack.c.b16 %v482, %v482
      %v487 = vpack.c.b16 %v483, %v483
      %v488 = vpack.c.b16 %v484, %v484
      %v490 = vpack.i.b16 %v485, %v485
      %v492 = vperm.slane %v490, 1
      %v494 = vpack.i.b16 %v486, %v486
      %v496 = vperm.slane %v494, 1
      %v498 = vpack.i.b16 %v487, %v487
      %v500 = vperm.slane %v498, 1
      %v502 = vpack.i.b16 %v488, %v488
      %v504 = vperm.slane %v502, 1
      %v505 = vunpack.c.l.bf16 %v471
      %v506 = vunpack.c.h.bf16 %v471
      %v507 = vunpack.c.l.bf16 %v472
      %v508 = vunpack.c.h.bf16 %v472
      %v509 = vunpack.c.l.bf16 %v473
      %v510 = vunpack.c.l.bf16 %v474
      %v511 = vunpack.c.h.bf16 %v474
      %v512 = vunpack.c.l.bf16 %v475
      %v513 = vunpack.c.h.bf16 %v475
      %v514 = vunpack.c.l.bf16 %v476
      %v515 = vunpack.c.l.bf16 %v492
      %v516 = vunpack.c.l.bf16 %v496
      %v517 = vunpack.c.l.bf16 %v500
      %v518 = vunpack.c.l.bf16 %v504
      %523 = vrot.lane.b32.xlu0 %v515, 2
      %v524 = vpop.permute.xlu0 %523
      %525 = vrot.lane.b32.xlu0 %v516, 2
      %v526 = vpop.permute.xlu0 %525
      %527 = vrot.lane.b32.xlu0 %v517, 2
      %v528 = vpop.permute.xlu0 %527
      %529 = vrot.lane.b32.xlu0 %v518, 2
      %v530 = vpop.permute.xlu0 %529
      %vm531 = vcmask 15360
      %v532 = vsel %vm531, %v524, %v526
      %v533 = vsel %vm531, %v526, %v528
      %v534 = vsel %vm531, %v528, %v530
      %v540 = vmul.f32 %v505, %v524
      %v541 = vmul.f32 %v506, %v532
      %v542 = vmul.f32 %v507, %v533
      %v543 = vmul.f32 %v508, %v534
      %v544 = vmul.f32 %v509, %v530
      %v545 = vmul.f32 %v510, %v524
      %v546 = vmul.f32 %v511, %v532
      %v547 = vmul.f32 %v512, %v533
      %v548 = vmul.f32 %v513, %v534
      %v549 = vmul.f32 %v514, %v530
      %v550 = vpack.c.bf16 %v541, %v540
      %v551 = vpack.c.bf16 %v543, %v542
      %v552 = vpack.c.bf16 %v544, %v544
      %v553 = vpack.c.bf16 %v546, %v545
      %v554 = vpack.c.bf16 %v548, %v547
      %v555 = vpack.c.bf16 %v549, %v549
      %562 = vrot.lane.b32.xlu0 %v550, 126
      %v563 = vpop.permute.xlu0 %562
      %564 = vrot.lane.b32.xlu0 %v551, 126
      %v565 = vpop.permute.xlu0 %564
      %566 = vrot.lane.b32.xlu0 %v552, 126
      %v567 = vpop.permute.xlu0 %566
      %568 = vrot.lane.b32.xlu0 %v553, 126
      %v569 = vpop.permute.xlu0 %568
      %570 = vrot.lane.b32.xlu0 %v554, 126
      %v571 = vpop.permute.xlu0 %570
      %572 = vrot.lane.b32.xlu0 %v555, 126
      %v573 = vpop.permute.xlu0 %572
      %v574 = vrot.slane %v563, 4
      %v575 = vrot.slane %v565, 4
      %v576 = vrot.slane %v567, 4
      %v577 = vrot.slane %v569, 4
      %v578 = vrot.slane %v571, 4
      %v579 = vrot.slane %v573, 4
      %v580 = vsel %vm453, %v574, %v575
      %vm581 = vcmask 1031168
      %v582 = vsel %vm581, %v563, %v580
      %v583 = vsel %vm453, %v575, %v576
      %v584 = vsel %vm581, %v565, %v583
      %v585 = vsel %vm453, %v577, %v578
      %v586 = vsel %vm581, %v569, %v585
      %v587 = vsel %vm453, %v578, %v579
      %v588 = vsel %vm581, %v571, %v587
      %593 = vst [vmem:[#allocation2 + $0x40] sm:$0xff] %v582
      %594 = vst [vmem:[#allocation2 + $0x48] sm:$0xff] %v584
      %595 = vst [vmem:[#allocation2 + $0x50] sm:$0xff] %v586
      %596 = vst [vmem:[#allocation2 + $0x58] sm:$0xff] %v588
      %v597 = vld [vmem:[%s273] sm:$0xff]
      %v598 = vld [vmem:[%s273 + $0x8] sm:$0xff]
      %v599 = vld [vmem:[%s273 + $0x10] sm:$0xf]
      %v600 = vld [vmem:[%s273 + $0x14] sm:$0xff]
      %v601 = vld [vmem:[%s273 + $0x1c] sm:$0xff]
      %v602 = vld [vmem:[%s273 + $0x24] sm:$0xf]
      %v603 = vld [vmem:[%s1] sm:$0x22]
      %v604 = vld [vmem:[%s1 + $0x8] sm:$0x22]
      %v607 = vunpack.c.l.b16 %v603
      %v608 = vunpack.c.h.b16 %v603
      %v609 = vunpack.c.l.b16 %v604
      %v610 = vunpack.c.h.b16 %v604
      %v611 = vpack.c.b16 %v607, %v607
      %v612 = vpack.c.b16 %v608, %v608
      %v613 = vpack.c.b16 %v609, %v609
      %v614 = vpack.c.b16 %v610, %v610
      %v616 = vshrl.u32 %v611, 16
      %v617 = vpack.i.b16 %v616, %v616
      %v619 = vperm.slane %v617, 1
      %v621 = vshrl.u32 %v612, 16
      %v622 = vpack.i.b16 %v621, %v621
      %v624 = vperm.slane %v622, 1
      %v626 = vshrl.u32 %v613, 16
      %v627 = vpack.i.b16 %v626, %v626
      %v629 = vperm.slane %v627, 1
      %v631 = vshrl.u32 %v614, 16
      %v632 = vpack.i.b16 %v631, %v631
      %v634 = vperm.slane %v632, 1
      %v635 = vunpack.c.l.bf16 %v597
      %v636 = vunpack.c.h.bf16 %v597
      %v637 = vunpack.c.l.bf16 %v598
      %v638 = vunpack.c.h.bf16 %v598
      %v639 = vunpack.c.l.bf16 %v599
      %v640 = vunpack.c.l.bf16 %v600
      %v641 = vunpack.c.h.bf16 %v600
      %v642 = vunpack.c.l.bf16 %v601
      %v643 = vunpack.c.h.bf16 %v601
      %v644 = vunpack.c.l.bf16 %v602
      %v645 = vunpack.c.l.bf16 %v619
      %v646 = vunpack.c.l.bf16 %v624
      %v647 = vunpack.c.l.bf16 %v629
      %v648 = vunpack.c.l.bf16 %v634
      %653 = vrot.lane.b32.xlu0 %v645, 16
      %v654 = vpop.permute.xlu0 %653
      %655 = vrot.lane.b32.xlu0 %v646, 16
      %v656 = vpop.permute.xlu0 %655
      %657 = vrot.lane.b32.xlu0 %v647, 16
      %v658 = vpop.permute.xlu0 %657
      %659 = vrot.lane.b32.xlu0 %v648, 16
      %v660 = vpop.permute.xlu0 %659
      %vm661 = vcmask 130048
      %v662 = vsel %vm661, %v654, %v656
      %v663 = vsel %vm661, %v656, %v658
      %v664 = vsel %vm661, %v658, %v660
      %v670 = vmul.f32 %v635, %v654
      %v671 = vmul.f32 %v636, %v662
      %v672 = vmul.f32 %v637, %v663
      %v673 = vmul.f32 %v638, %v664
      %v674 = vmul.f32 %v639, %v660
      %v675 = vmul.f32 %v640, %v654
      %v676 = vmul.f32 %v641, %v662
      %v677 = vmul.f32 %v642, %v663
      %v678 = vmul.f32 %v643, %v664
      %v679 = vmul.f32 %v644, %v660
      %v680 = vpack.c.bf16 %v671, %v670
      %v681 = vpack.c.bf16 %v673, %v672
      %v682 = vpack.c.bf16 %v674, %v674
      %v683 = vpack.c.bf16 %v676, %v675
      %v684 = vpack.c.bf16 %v678, %v677
      %v685 = vpack.c.bf16 %v679, %v679
      %692 = vrot.lane.b32.xlu0 %v680, 112
      %v693 = vpop.permute.xlu0 %692
      %694 = vrot.lane.b32.xlu0 %v681, 112
      %v695 = vpop.permute.xlu0 %694
      %696 = vrot.lane.b32.xlu0 %v682, 112
      %v697 = vpop.permute.xlu0 %696
      %698 = vrot.lane.b32.xlu0 %v683, 112
      %v699 = vpop.permute.xlu0 %698
      %700 = vrot.lane.b32.xlu0 %v684, 112
      %v701 = vpop.permute.xlu0 %700
      %702 = vrot.lane.b32.xlu0 %v685, 112
      %v703 = vpop.permute.xlu0 %702
      %v704 = vrot.slane %v693, 4
      %v705 = vrot.slane %v695, 4
      %v706 = vrot.slane %v697, 4
      %v707 = vrot.slane %v699, 4
      %v708 = vrot.slane %v701, 4
      %v709 = vrot.slane %v703, 4
      %v710 = vsel %vm453, %v704, %v705
      %vm711 = vcmask 916480
      %v712 = vsel %vm711, %v693, %v710
      %v713 = vsel %vm453, %v705, %v706
      %v714 = vsel %vm711, %v695, %v713
      %v715 = vsel %vm453, %v707, %v708
      %v716 = vsel %vm711, %v699, %v715
      %v717 = vsel %vm453, %v708, %v709
      %v718 = vsel %vm711, %v701, %v717
      %723 = vst [vmem:[#allocation2 + $0x60] sm:$0xff] %v712
      %724 = vst [vmem:[#allocation2 + $0x68] sm:$0xff] %v714
      %725 = vst [vmem:[#allocation2 + $0x70] sm:$0xff] %v716
      %726 = vst [vmem:[#allocation2 + $0x78] sm:$0xff] %v718
      %v727 = vld [vmem:[%s273] sm:$0xff]
      %v728 = vld [vmem:[%s273 + $0x8] sm:$0xff]
      %v729 = vld [vmem:[%s273 + $0x10] sm:$0xf]
      %v730 = vld [vmem:[%s273 + $0x14] sm:$0xff]
      %v731 = vld [vmem:[%s273 + $0x1c] sm:$0xff]
      %v732 = vld [vmem:[%s273 + $0x24] sm:$0xf]
      %v733 = vld [vmem:[%s1] sm:$0x44]
      %v734 = vld [vmem:[%s1 + $0x8] sm:$0x44]
      %v737 = vunpack.c.l.b16 %v733
      %v738 = vunpack.c.h.b16 %v733
      %v739 = vunpack.c.l.b16 %v734
      %v740 = vunpack.c.h.b16 %v734
      %v741 = vpack.c.b16 %v737, %v737
      %v742 = vpack.c.b16 %v738, %v738
      %v743 = vpack.c.b16 %v739, %v739
      %v744 = vpack.c.b16 %v740, %v740
      %v746 = vpack.i.b16 %v741, %v741
      %v748 = vperm.slane %v746, 2
      %v750 = vpack.i.b16 %v742, %v742
      %v752 = vperm.slane %v750, 2
      %v754 = vpack.i.b16 %v743, %v743
      %v756 = vperm.slane %v754, 2
      %v758 = vpack.i.b16 %v744, %v744
      %v760 = vperm.slane %v758, 2
      %v761 = vunpack.c.l.bf16 %v727
      %v762 = vunpack.c.h.bf16 %v727
      %v763 = vunpack.c.l.bf16 %v728
      %v764 = vunpack.c.h.bf16 %v728
      %v765 = vunpack.c.l.bf16 %v729
      %v766 = vunpack.c.l.bf16 %v730
      %v767 = vunpack.c.h.bf16 %v730
      %v768 = vunpack.c.l.bf16 %v731
      %v769 = vunpack.c.h.bf16 %v731
      %v770 = vunpack.c.l.bf16 %v732
      %v771 = vunpack.c.l.bf16 %v748
      %v772 = vunpack.c.l.bf16 %v752
      %v773 = vunpack.c.l.bf16 %v756
      %v774 = vunpack.c.l.bf16 %v760
      %779 = vrot.lane.b32.xlu0 %v771, 17
      %v780 = vpop.permute.xlu0 %779
      %781 = vrot.lane.b32.xlu0 %v772, 17
      %v782 = vpop.permute.xlu0 %781
      %783 = vrot.lane.b32.xlu0 %v773, 17
      %v784 = vpop.permute.xlu0 %783
      %785 = vrot.lane.b32.xlu0 %v774, 17
      %v786 = vpop.permute.xlu0 %785
      %vm787 = vcmask 138240
      %v788 = vsel %vm787, %v780, %v782
      %v789 = vsel %vm787, %v782, %v784
      %v790 = vsel %vm787, %v784, %v786
      %v796 = vmul.f32 %v761, %v780
      %v797 = vmul.f32 %v762, %v788
      %v798 = vmul.f32 %v763, %v789
      %v799 = vmul.f32 %v764, %v790
      %v800 = vmul.f32 %v765, %v786
      %v801 = vmul.f32 %v766, %v780
      %v802 = vmul.f32 %v767, %v788
      %v803 = vmul.f32 %v768, %v789
      %v804 = vmul.f32 %v769, %v790
      %v805 = vmul.f32 %v770, %v786
      %v806 = vpack.c.bf16 %v797, %v796
      %v807 = vpack.c.bf16 %v799, %v798
      %v808 = vpack.c.bf16 %v800, %v800
      %v809 = vpack.c.bf16 %v802, %v801
      %v810 = vpack.c.bf16 %v804, %v803
      %v811 = vpack.c.bf16 %v805, %v805
      %818 = vrot.lane.b32.xlu0 %v806, 111
      %v819 = vpop.permute.xlu0 %818
      %820 = vrot.lane.b32.xlu0 %v807, 111
      %v821 = vpop.permute.xlu0 %820
      %822 = vrot.lane.b32.xlu0 %v808, 111
      %v823 = vpop.permute.xlu0 %822
      %824 = vrot.lane.b32.xlu0 %v809, 111
      %v825 = vpop.permute.xlu0 %824
      %826 = vrot.lane.b32.xlu0 %v810, 111
      %v827 = vpop.permute.xlu0 %826
      %828 = vrot.lane.b32.xlu0 %v811, 111
      %v829 = vpop.permute.xlu0 %828
      %v830 = vrot.slane %v819, 4
      %v831 = vrot.slane %v821, 4
      %v832 = vrot.slane %v823, 4
      %v833 = vrot.slane %v825, 4
      %v834 = vrot.slane %v827, 4
      %v835 = vrot.slane %v829, 4
      %v836 = vsel %vm453, %v830, %v831
      %vm837 = vcmask 908288
      %v838 = vsel %vm837, %v819, %v836
      %v839 = vsel %vm453, %v831, %v832
      %v840 = vsel %vm837, %v821, %v839
      %v841 = vsel %vm453, %v833, %v834
      %v842 = vsel %vm837, %v825, %v841
      %v843 = vsel %vm453, %v834, %v835
      %v844 = vsel %vm837, %v827, %v843
      %849 = vst [vmem:[#allocation2 + $0x80] sm:$0xff] %v838
      %850 = vst [vmem:[#allocation2 + $0x88] sm:$0xff] %v840
      %851 = vst [vmem:[#allocation2 + $0x90] sm:$0xff] %v842
      %852 = vst [vmem:[#allocation2 + $0x98] sm:$0xff] %v844
      %v853 = vld [vmem:[%s273] sm:$0xff]
      %v854 = vld [vmem:[%s273 + $0x8] sm:$0xff]
      %v855 = vld [vmem:[%s273 + $0x10] sm:$0xf]
      %v856 = vld [vmem:[%s273 + $0x14] sm:$0xff]
      %v857 = vld [vmem:[%s273 + $0x1c] sm:$0xff]
      %v858 = vld [vmem:[%s273 + $0x24] sm:$0xf]
      %v859 = vld [vmem:[%s1] sm:$0x44]
      %v860 = vld [vmem:[%s1 + $0x8] sm:$0x44]
      %v863 = vunpack.c.l.b16 %v859
      %v864 = vunpack.c.h.b16 %v859
      %v865 = vunpack.c.l.b16 %v860
      %v866 = vunpack.c.h.b16 %v860
      %v867 = vpack.c.b16 %v863, %v863
      %v868 = vpack.c.b16 %v864, %v864
      %v869 = vpack.c.b16 %v865, %v865
      %v870 = vpack.c.b16 %v866, %v866
      %v872 = vshrl.u32 %v867, 16
      %v873 = vpack.i.b16 %v872, %v872
      %v875 = vperm.slane %v873, 2
      %v877 = vshrl.u32 %v868, 16
      %v878 = vpack.i.b16 %v877, %v877
      %v880 = vperm.slane %v878, 2
      %v882 = vshrl.u32 %v869, 16
      %v883 = vpack.i.b16 %v882, %v882
      %v885 = vperm.slane %v883, 2
      %v887 = vshrl.u32 %v870, 16
      %v888 = vpack.i.b16 %v887, %v887
      %v890 = vperm.slane %v888, 2
      %v891 = vunpack.c.l.bf16 %v853
      %v892 = vunpack.c.h.bf16 %v853
      %v893 = vunpack.c.l.bf16 %v854
      %v894 = vunpack.c.h.bf16 %v854
      %v895 = vunpack.c.l.bf16 %v855
      %v896 = vunpack.c.l.bf16 %v856
      %v897 = vunpack.c.h.bf16 %v856
      %v898 = vunpack.c.l.bf16 %v857
      %v899 = vunpack.c.h.bf16 %v857
      %v900 = vunpack.c.l.bf16 %v858
      %v901 = vunpack.c.l.bf16 %v875
      %v902 = vunpack.c.l.bf16 %v880
      %v903 = vunpack.c.l.bf16 %v885
      %v904 = vunpack.c.l.bf16 %v890
      %909 = vrot.lane.b32.xlu0 %v901, 18
      %v910 = vpop.permute.xlu0 %909
      %911 = vrot.lane.b32.xlu0 %v902, 18
      %v912 = vpop.permute.xlu0 %911
      %913 = vrot.lane.b32.xlu0 %v903, 18
      %v914 = vpop.permute.xlu0 %913
      %915 = vrot.lane.b32.xlu0 %v904, 18
      %v916 = vpop.permute.xlu0 %915
      %vm917 = vcmask 146432
      %v918 = vsel %vm917, %v910, %v912
      %v919 = vsel %vm917, %v912, %v914
      %v920 = vsel %vm917, %v914, %v916
      %v926 = vmul.f32 %v891, %v910
      %v927 = vmul.f32 %v892, %v918
      %v928 = vmul.f32 %v893, %v919
      %v929 = vmul.f32 %v894, %v920
      %v930 = vmul.f32 %v895, %v916
      %v931 = vmul.f32 %v896, %v910
      %v932 = vmul.f32 %v897, %v918
      %v933 = vmul.f32 %v898, %v919
      %v934 = vmul.f32 %v899, %v920
      %v935 = vmul.f32 %v900, %v916
      %v936 = vpack.c.bf16 %v927, %v926
      %v937 = vpack.c.bf16 %v929, %v928
      %v938 = vpack.c.bf16 %v930, %v930
      %v939 = vpack.c.bf16 %v932, %v931
      %v940 = vpack.c.bf16 %v934, %v933
      %v941 = vpack.c.bf16 %v935, %v935
      %948 = vrot.lane.b32.xlu0 %v936, 110
      %v949 = vpop.permute.xlu0 %948
      %950 = vrot.lane.b32.xlu0 %v937, 110
      %v951 = vpop.permute.xlu0 %950
      %952 = vrot.lane.b32.xlu0 %v938, 110
      %v953 = vpop.permute.xlu0 %952
      %954 = vrot.lane.b32.xlu0 %v939, 110
      %v955 = vpop.permute.xlu0 %954
      %956 = vrot.lane.b32.xlu0 %v940, 110
      %v957 = vpop.permute.xlu0 %956
      %958 = vrot.lane.b32.xlu0 %v941, 110
      %v959 = vpop.permute.xlu0 %958
      %v960 = vrot.slane %v949, 4
      %v961 = vrot.slane %v951, 4
      %v962 = vrot.slane %v953, 4
      %v963 = vrot.slane %v955, 4
      %v964 = vrot.slane %v957, 4
      %v965 = vrot.slane %v959, 4
      %v966 = vsel %vm453, %v960, %v961
      %vm967 = vcmask 900096
      %v968 = vsel %vm967, %v949, %v966
      %v969 = vsel %vm453, %v961, %v962
      %v970 = vsel %vm967, %v951, %v969
      %v971 = vsel %vm453, %v963, %v964
      %v972 = vsel %vm967, %v955, %v971
      %v973 = vsel %vm453, %v964, %v965
      %v974 = vsel %vm967, %v957, %v973
      %979 = vst [vmem:[#allocation2 + $0xa0] sm:$0xff] %v968
      %980 = vst [vmem:[#allocation2 + $0xa8] sm:$0xff] %v970
      %981 = vst [vmem:[#allocation2 + $0xb0] sm:$0xff] %v972
      %982 = vst [vmem:[#allocation2 + $0xb8] sm:$0xff] %v974
      %v983 = vld [vmem:[%s273] sm:$0xff]
      %v984 = vld [vmem:[%s273 + $0x8] sm:$0xff]
      %v985 = vld [vmem:[%s273 + $0x10] sm:$0xf]
      %v986 = vld [vmem:[%s273 + $0x14] sm:$0xff]
      %v987 = vld [vmem:[%s273 + $0x1c] sm:$0xff]
      %v988 = vld [vmem:[%s273 + $0x24] sm:$0xf]
      %v989 = vld [vmem:[%s1] sm:$0x88]
      %v990 = vld [vmem:[%s1 + $0x8] sm:$0x88]
      %v993 = vunpack.c.l.b16 %v989
      %v994 = vunpack.c.h.b16 %v989
      %v995 = vunpack.c.l.b16 %v990
      %v996 = vunpack.c.h.b16 %v990
      %v997 = vpack.c.b16 %v993, %v993
      %v998 = vpack.c.b16 %v994, %v994
      %v999 = vpack.c.b16 %v995, %v995
      %v1000 = vpack.c.b16 %v996, %v996
      %v1002 = vpack.i.b16 %v997, %v997
      %v1004 = vperm.slane %v1002, 3
      %v1006 = vpack.i.b16 %v998, %v998
      %v1008 = vperm.slane %v1006, 3
      %v1010 = vpack.i.b16 %v999, %v999
      %v1012 = vperm.slane %v1010, 3
      %v1014 = vpack.i.b16 %v1000, %v1000
      %v1016 = vperm.slane %v1014, 3
      %v1017 = vunpack.c.l.bf16 %v983
      %v1018 = vunpack.c.h.bf16 %v983
      %v1019 = vunpack.c.l.bf16 %v984
      %v1020 = vunpack.c.h.bf16 %v984
      %v1021 = vunpack.c.l.bf16 %v985
      %v1022 = vunpack.c.l.bf16 %v986
      %v1023 = vunpack.c.h.bf16 %v986
      %v1024 = vunpack.c.l.bf16 %v987
      %v1025 = vunpack.c.h.bf16 %v987
      %v1026 = vunpack.c.l.bf16 %v988
      %v1027 = vunpack.c.l.bf16 %v1004
      %v1028 = vunpack.c.l.bf16 %v1008
      %v1029 = vunpack.c.l.bf16 %v1012
      %v1030 = vunpack.c.l.bf16 %v1016
      %1035 = vrot.lane.b32.xlu0 %v1027, 32
      %v1036 = vpop.permute.xlu0 %1035
      %1037 = vrot.lane.b32.xlu0 %v1028, 32
      %v1038 = vpop.permute.xlu0 %1037
      %1039 = vrot.lane.b32.xlu0 %v1029, 32
      %v1040 = vpop.permute.xlu0 %1039
      %1041 = vrot.lane.b32.xlu0 %v1030, 32
      %v1042 = vpop.permute.xlu0 %1041
      %vm1043 = vcmask 261120
      %v1044 = vsel %vm1043, %v1036, %v1038
      %v1045 = vsel %vm1043, %v1038, %v1040
      %v1046 = vsel %vm1043, %v1040, %v1042
      %v1052 = vmul.f32 %v1017, %v1036
      %v1053 = vmul.f32 %v1018, %v1044
      %v1054 = vmul.f32 %v1019, %v1045
      %v1055 = vmul.f32 %v1020, %v1046
      %v1056 = vmul.f32 %v1021, %v1042
      %v1057 = vmul.f32 %v1022, %v1036
      %v1058 = vmul.f32 %v1023, %v1044
      %v1059 = vmul.f32 %v1024, %v1045
      %v1060 = vmul.f32 %v1025, %v1046
      %v1061 = vmul.f32 %v1026, %v1042
      %v1062 = vpack.c.bf16 %v1053, %v1052
      %v1063 = vpack.c.bf16 %v1055, %v1054
      %v1064 = vpack.c.bf16 %v1056, %v1056
      %v1065 = vpack.c.bf16 %v1058, %v1057
      %v1066 = vpack.c.bf16 %v1060, %v1059
      %v1067 = vpack.c.bf16 %v1061, %v1061
      %1074 = vrot.lane.b32.xlu0 %v1062, 96
      %v1075 = vpop.permute.xlu0 %1074
      %1076 = vrot.lane.b32.xlu0 %v1063, 96
      %v1077 = vpop.permute.xlu0 %1076
      %1078 = vrot.lane.b32.xlu0 %v1064, 96
      %v1079 = vpop.permute.xlu0 %1078
      %1080 = vrot.lane.b32.xlu0 %v1065, 96
      %v1081 = vpop.permute.xlu0 %1080
      %1082 = vrot.lane.b32.xlu0 %v1066, 96
      %v1083 = vpop.permute.xlu0 %1082
      %1084 = vrot.lane.b32.xlu0 %v1067, 96
      %v1085 = vpop.permute.xlu0 %1084
      %v1086 = vrot.slane %v1075, 4
      %v1087 = vrot.slane %v1077, 4
      %v1088 = vrot.slane %v1079, 4
      %v1089 = vrot.slane %v1081, 4
      %v1090 = vrot.slane %v1083, 4
      %v1091 = vrot.slane %v1085, 4
      %v1092 = vsel %vm453, %v1086, %v1087
      %vm1093 = vcmask 785408
      %v1094 = vsel %vm1093, %v1075, %v1092
      %v1095 = vsel %vm453, %v1087, %v1088
      %v1096 = vsel %vm1093, %v1077, %v1095
      %v1097 = vsel %vm453, %v1089, %v1090
      %v1098 = vsel %vm1093, %v1081, %v1097
      %v1099 = vsel %vm453, %v1090, %v1091
      %v1100 = vsel %vm1093, %v1083, %v1099
      %1105 = vst [vmem:[#allocation2 + $0xc0] sm:$0xff] %v1094
      %1106 = vst [vmem:[#allocation2 + $0xc8] sm:$0xff] %v1096
      %1107 = vst [vmem:[#allocation2 + $0xd0] sm:$0xff] %v1098
      %1108 = vst [vmem:[#allocation2 + $0xd8] sm:$0xff] %v1100
      %v1109 = vld [vmem:[%s273] sm:$0xff]
      %v1110 = vld [vmem:[%s273 + $0x8] sm:$0xff]
      %v1111 = vld [vmem:[%s273 + $0x10] sm:$0xf]
      %v1112 = vld [vmem:[%s273 + $0x14] sm:$0xff]
      %v1113 = vld [vmem:[%s273 + $0x1c] sm:$0xff]
      %v1114 = vld [vmem:[%s273 + $0x24] sm:$0xf]
      %v1115 = vld [vmem:[%s1] sm:$0x88]
      %v1116 = vld [vmem:[%s1 + $0x8] sm:$0x88]
      %v1119 = vunpack.c.l.b16 %v1115
      %v1120 = vunpack.c.h.b16 %v1115
      %v1121 = vunpack.c.l.b16 %v1116
      %v1122 = vunpack.c.h.b16 %v1116
      %v1123 = vpack.c.b16 %v1119, %v1119
      %v1124 = vpack.c.b16 %v1120, %v1120
      %v1125 = vpack.c.b16 %v1121, %v1121
      %v1126 = vpack.c.b16 %v1122, %v1122
      %v1128 = vshrl.u32 %v1123, 16
      %v1129 = vpack.i.b16 %v1128, %v1128
      %v1131 = vperm.slane %v1129, 3
      %v1133 = vshrl.u32 %v1124, 16
      %v1134 = vpack.i.b16 %v1133, %v1133
      %v1136 = vperm.slane %v1134, 3
      %v1138 = vshrl.u32 %v1125, 16
      %v1139 = vpack.i.b16 %v1138, %v1138
      %v1141 = vperm.slane %v1139, 3
      %v1143 = vshrl.u32 %v1126, 16
      %v1144 = vpack.i.b16 %v1143, %v1143
      %v1146 = vperm.slane %v1144, 3
      %v1147 = vunpack.c.l.bf16 %v1109
      %v1148 = vunpack.c.h.bf16 %v1109
      %v1149 = vunpack.c.l.bf16 %v1110
      %v1150 = vunpack.c.h.bf16 %v1110
      %v1151 = vunpack.c.l.bf16 %v1111
      %v1152 = vunpack.c.l.bf16 %v1112
      %v1153 = vunpack.c.h.bf16 %v1112
      %v1154 = vunpack.c.l.bf16 %v1113
      %v1155 = vunpack.c.h.bf16 %v1113
      %v1156 = vunpack.c.l.bf16 %v1114
      %v1157 = vunpack.c.l.bf16 %v1131
      %v1158 = vunpack.c.l.bf16 %v1136
      %v1159 = vunpack.c.l.bf16 %v1141
      %v1160 = vunpack.c.l.bf16 %v1146
      %1165 = vrot.lane.b32.xlu0 %v1157, 33
      %v1166 = vpop.permute.xlu0 %1165
      %1167 = vrot.lane.b32.xlu0 %v1158, 33
      %v1168 = vpop.permute.xlu0 %1167
      %1169 = vrot.lane.b32.xlu0 %v1159, 33
      %v1170 = vpop.permute.xlu0 %1169
      %1171 = vrot.lane.b32.xlu0 %v1160, 33
      %v1172 = vpop.permute.xlu0 %1171
      %vm1173 = vcmask 269312
      %v1174 = vsel %vm1173, %v1166, %v1168
      %v1175 = vsel %vm1173, %v1168, %v1170
      %v1176 = vsel %vm1173, %v1170, %v1172
      %v1182 = vmul.f32 %v1147, %v1166
      %v1183 = vmul.f32 %v1148, %v1174
      %v1184 = vmul.f32 %v1149, %v1175
      %v1185 = vmul.f32 %v1150, %v1176
      %v1186 = vmul.f32 %v1151, %v1172
      %v1187 = vmul.f32 %v1152, %v1166
      %v1188 = vmul.f32 %v1153, %v1174
      %v1189 = vmul.f32 %v1154, %v1175
      %v1190 = vmul.f32 %v1155, %v1176
      %v1191 = vmul.f32 %v1156, %v1172
      %v1192 = vpack.c.bf16 %v1183, %v1182
      %v1193 = vpack.c.bf16 %v1185, %v1184
      %v1194 = vpack.c.bf16 %v1186, %v1186
      %v1195 = vpack.c.bf16 %v1188, %v1187
      %v1196 = vpack.c.bf16 %v1190, %v1189
      %v1197 = vpack.c.bf16 %v1191, %v1191
      %1204 = vrot.lane.b32.xlu0 %v1192, 95
      %v1205 = vpop.permute.xlu0 %1204
      %1206 = vrot.lane.b32.xlu0 %v1193, 95
      %v1207 = vpop.permute.xlu0 %1206
      %1208 = vrot.lane.b32.xlu0 %v1194, 95
      %v1209 = vpop.permute.xlu0 %1208
      %1210 = vrot.lane.b32.xlu0 %v1195, 95
      %v1211 = vpop.permute.xlu0 %1210
      %1212 = vrot.lane.b32.xlu0 %v1196, 95
      %v1213 = vpop.permute.xlu0 %1212
      %1214 = vrot.lane.b32.xlu0 %v1197, 95
      %v1215 = vpop.permute.xlu0 %1214
      %v1216 = vrot.slane %v1205, 4
      %v1217 = vrot.slane %v1207, 4
      %v1218 = vrot.slane %v1209, 4
      %v1219 = vrot.slane %v1211, 4
      %v1220 = vrot.slane %v1213, 4
      %v1221 = vrot.slane %v1215, 4
      %v1222 = vsel %vm453, %v1216, %v1217
      %vm1223 = vcmask 777216
      %v1224 = vsel %vm1223, %v1205, %v1222
      %v1225 = vsel %vm453, %v1217, %v1218
      %v1226 = vsel %vm1223, %v1207, %v1225
      %v1227 = vsel %vm453, %v1219, %v1220
      %v1228 = vsel %vm1223, %v1211, %v1227
      %v1229 = vsel %vm453, %v1220, %v1221
      %v1230 = vsel %vm1223, %v1213, %v1229
      %1235 = vst [vmem:[#allocation2 + $0xe0] sm:$0xff] %v1224
      %1236 = vst [vmem:[#allocation2 + $0xe8] sm:$0xff] %v1226
      %1237 = vst [vmem:[#allocation2 + $0xf0] sm:$0xff] %v1228
      %1238 = vst [vmem:[#allocation2 + $0xf8] sm:$0xff] %v1230
      %v1239 = vld [vmem:[%s273] sm:$0xff]
      %v1240 = vld [vmem:[%s273 + $0x8] sm:$0xff]
      %v1241 = vld [vmem:[%s273 + $0x10] sm:$0xf]
      %v1242 = vld [vmem:[%s273 + $0x14] sm:$0xff]
      %v1243 = vld [vmem:[%s273 + $0x1c] sm:$0xff]
      %v1244 = vld [vmem:[%s273 + $0x24] sm:$0xf]
      %v1245 = vld [vmem:[%s1 + $0x10] sm:$0x11]
      %v1246 = vld [vmem:[%s1 + $0x18] sm:$0x11]
      %v1249 = vunpack.c.l.b16 %v1245
      %v1250 = vunpack.c.h.b16 %v1245
      %v1251 = vunpack.c.l.b16 %v1246
      %v1252 = vunpack.c.h.b16 %v1246
      %v1253 = vpack.c.b16 %v1249, %v1249
      %v1254 = vpack.c.b16 %v1250, %v1250
      %v1255 = vpack.c.b16 %v1251, %v1251
      %v1256 = vpack.c.b16 %v1252, %v1252
      %v1258 = vpack.i.b16 %v1253, %v1253
      %v1260 = vperm.slane %v1258, 0
      %v1262 = vpack.i.b16 %v1254, %v1254
      %v1264 = vperm.slane %v1262, 0
      %v1266 = vpack.i.b16 %v1255, %v1255
      %v1268 = vperm.slane %v1266, 0
      %v1270 = vpack.i.b16 %v1256, %v1256
      %v1272 = vperm.slane %v1270, 0
      %v1273 = vunpack.c.l.bf16 %v1239
      %v1274 = vunpack.c.h.bf16 %v1239
      %v1275 = vunpack.c.l.bf16 %v1240
      %v1276 = vunpack.c.h.bf16 %v1240
      %v1277 = vunpack.c.l.bf16 %v1241
      %v1278 = vunpack.c.l.bf16 %v1242
      %v1279 = vunpack.c.h.bf16 %v1242
      %v1280 = vunpack.c.l.bf16 %v1243
      %v1281 = vunpack.c.h.bf16 %v1243
      %v1282 = vunpack.c.l.bf16 %v1244
      %v1283 = vunpack.c.l.bf16 %v1260
      %v1284 = vunpack.c.l.bf16 %v1264
      %v1285 = vunpack.c.l.bf16 %v1268
      %v1286 = vunpack.c.l.bf16 %v1272
      %1291 = vrot.lane.b32.xlu0 %v1283, 34
      %v1292 = vpop.permute.xlu0 %1291
      %1293 = vrot.lane.b32.xlu0 %v1284, 34
      %v1294 = vpop.permute.xlu0 %1293
      %1295 = vrot.lane.b32.xlu0 %v1285, 34
      %v1296 = vpop.permute.xlu0 %1295
      %1297 = vrot.lane.b32.xlu0 %v1286, 34
      %v1298 = vpop.permute.xlu0 %1297
      %vm1299 = vcmask 277504
      %v1300 = vsel %vm1299, %v1292, %v1294
      %v1301 = vsel %vm1299, %v1294, %v1296
      %v1302 = vsel %vm1299, %v1296, %v1298
      %v1308 = vmul.f32 %v1273, %v1292
      %v1309 = vmul.f32 %v1274, %v1300
      %v1310 = vmul.f32 %v1275, %v1301
      %v1311 = vmul.f32 %v1276, %v1302
      %v1312 = vmul.f32 %v1277, %v1298
      %v1313 = vmul.f32 %v1278, %v1292
      %v1314 = vmul.f32 %v1279, %v1300
      %v1315 = vmul.f32 %v1280, %v1301
      %v1316 = vmul.f32 %v1281, %v1302
      %v1317 = vmul.f32 %v1282, %v1298
      %v1318 = vpack.c.bf16 %v1309, %v1308
      %v1319 = vpack.c.bf16 %v1311, %v1310
      %v1320 = vpack.c.bf16 %v1312, %v1312
      %v1321 = vpack.c.bf16 %v1314, %v1313
      %v1322 = vpack.c.bf16 %v1316, %v1315
      %v1323 = vpack.c.bf16 %v1317, %v1317
      %1330 = vrot.lane.b32.xlu0 %v1318, 94
      %v1331 = vpop.permute.xlu0 %1330
      %1332 = vrot.lane.b32.xlu0 %v1319, 94
      %v1333 = vpop.permute.xlu0 %1332
      %1334 = vrot.lane.b32.xlu0 %v1320, 94
      %v1335 = vpop.permute.xlu0 %1334
      %1336 = vrot.lane.b32.xlu0 %v1321, 94
      %v1337 = vpop.permute.xlu0 %1336
      %1338 = vrot.lane.b32.xlu0 %v1322, 94
      %v1339 = vpop.permute.xlu0 %1338
      %1340 = vrot.lane.b32.xlu0 %v1323, 94
      %v1341 = vpop.permute.xlu0 %1340
      %v1342 = vrot.slane %v1331, 4
      %v1343 = vrot.slane %v1333, 4
      %v1344 = vrot.slane %v1335, 4
      %v1345 = vrot.slane %v1337, 4
      %v1346 = vrot.slane %v1339, 4
      %v1347 = vrot.slane %v1341, 4
      %v1348 = vsel %vm453, %v1342, %v1343
      %vm1349 = vcmask 769024
      %v1350 = vsel %vm1349, %v1331, %v1348
      %v1351 = vsel %vm453, %v1343, %v1344
      %v1352 = vsel %vm1349, %v1333, %v1351
      %v1353 = vsel %vm453, %v1345, %v1346
      %v1354 = vsel %vm1349, %v1337, %v1353
      %v1355 = vsel %vm453, %v1346, %v1347
      %v1356 = vsel %vm1349, %v1339, %v1355
      %1361 = vst [vmem:[#allocation2 + $0x100] sm:$0xff] %v1350
      %1362 = vst [vmem:[#allocation2 + $0x108] sm:$0xff] %v1352
      %1363 = vst [vmem:[#allocation2 + $0x110] sm:$0xff] %v1354
      %1364 = vst [vmem:[#allocation2 + $0x118] sm:$0xff] %v1356
      %v1365 = vld [vmem:[%s2] sm:$0xff]
      %v1366 = vld [vmem:[%s2 + $0x8] sm:$0xff]
      %v1367 = vld [vmem:[%s2 + $0x10] sm:$0xff]
      %v1368 = vld [vmem:[%s2 + $0x18] sm:$0xff]
      %v1369 = vld [vmem:[#allocation2] sm:$0xff]
      %v1370 = vld [vmem:[#allocation2 + $0x8] sm:$0xff]
      %v1371 = vld [vmem:[#allocation2 + $0x10] sm:$0xff]
      %v1372 = vld [vmem:[#allocation2 + $0x18] sm:$0xff]
      %v1373 = vld [vmem:[#allocation2 + $0x20] sm:$0xff]
      %v1374 = vld [vmem:[#allocation2 + $0x28] sm:$0xff]
      %v1375 = vld [vmem:[#allocation2 + $0x30] sm:$0xff]
      %v1376 = vld [vmem:[#allocation2 + $0x38] sm:$0xff]
      %v1377 = vld [vmem:[#allocation2 + $0x40] sm:$0xff]
      %v1378 = vld [vmem:[#allocation2 + $0x48] sm:$0xff]
      %v1379 = vld [vmem:[#allocation2 + $0x50] sm:$0xff]
      %v1380 = vld [vmem:[#allocation2 + $0x58] sm:$0xff]
      %v1381 = vld [vmem:[#allocation2 + $0x60] sm:$0xff]
      %v1382 = vld [vmem:[#allocation2 + $0x68] sm:$0xff]
      %v1383 = vld [vmem:[#allocation2 + $0x70] sm:$0xff]
      %v1384 = vld [vmem:[#allocation2 + $0x78] sm:$0xff]
      %v1385 = vld [vmem:[#allocation2 + $0x80] sm:$0xff]
      %v1386 = vld [vmem:[#allocation2 + $0x88] sm:$0xff]
      %v1387 = vld [vmem:[#allocation2 + $0x90] sm:$0xff]
      %v1388 = vld [vmem:[#allocation2 + $0x98] sm:$0xff]
      %v1389 = vld [vmem:[#allocation2 + $0xa0] sm:$0xff]
      %v1390 = vld [vmem:[#allocation2 + $0xa8] sm:$0xff]
      %v1391 = vld [vmem:[#allocation2 + $0xb0] sm:$0xff]
      %v1392 = vld [vmem:[#allocation2 + $0xb8] sm:$0xff]
      %v1393 = vld [vmem:[#allocation2 + $0xc0] sm:$0xff]
      %v1394 = vld [vmem:[#allocation2 + $0xc8] sm:$0xff]
      %v1395 = vld [vmem:[#allocation2 + $0xd0] sm:$0xff]
      %v1396 = vld [vmem:[#allocation2 + $0xd8] sm:$0xff]
      %v1397 = vld [vmem:[#allocation2 + $0xe0] sm:$0xff]
      %v1398 = vld [vmem:[#allocation2 + $0xe8] sm:$0xff]
      %v1399 = vld [vmem:[#allocation2 + $0xf0] sm:$0xff]
      %v1400 = vld [vmem:[#allocation2 + $0xf8] sm:$0xff]
      %v1401 = vld [vmem:[#allocation2 + $0x100] sm:$0xff]
      %v1402 = vld [vmem:[#allocation2 + $0x108] sm:$0xff]
      %v1403 = vld [vmem:[#allocation2 + $0x110] sm:$0xff]
      %v1404 = vld [vmem:[#allocation2 + $0x118] sm:$0xff]
      %v1405 = vld [vmem:[%s3] sm:$0xff]
      %v1406 = vld [vmem:[%s3 + $0x8] sm:$0xff]
      %v1407 = vld [vmem:[%s3 + $0x10] sm:$0xff]
      %v1408 = vld [vmem:[%s3 + $0x18] sm:$0xff]
      %1410 = vset.pattern.permute.xlu0 0
      %1411 = vperm.xlu0 %1410, %v1405
      %v1412 = vpop.permute.xlu0 %1411
      %1415 = vset.pattern.permute.xlu0 0
      %1416 = vperm.xlu0 %1415, %v1406
      %v1417 = vpop.permute.xlu0 %1416
      %1420 = vset.pattern.permute.xlu0 0
      %1421 = vperm.xlu0 %1420, %v1407
      %v1422 = vpop.permute.xlu0 %1421
      %1425 = vset.pattern.permute.xlu0 0
      %1426 = vperm.xlu0 %1425, %v1408
      %v1427 = vpop.permute.xlu0 %1426
      %v1433 = vunpack.c.l.b16 %v1365
      %v1434 = vunpack.c.h.b16 %v1365
      %v1435 = vunpack.c.l.b16 %v1366
      %v1436 = vunpack.c.h.b16 %v1366
      %v1437 = vunpack.c.l.b16 %v1367
      %v1438 = vunpack.c.h.b16 %v1367
      %v1439 = vunpack.c.l.b16 %v1368
      %v1440 = vunpack.c.h.b16 %v1368
      %v1441 = vpack.c.b16 %v1435, %v1433
      %v1442 = vpack.c.b16 %v1436, %v1434
      %v1443 = vpack.c.b16 %v1439, %v1437
      %v1444 = vpack.c.b16 %v1440, %v1438
      %v1483 = vunpack.c.l.b16 %v1369
      %v1484 = vunpack.c.h.b16 %v1369
      %v1485 = vunpack.c.l.b16 %v1370
      %v1486 = vunpack.c.h.b16 %v1370
      %v1487 = vunpack.c.l.b16 %v1371
      %v1488 = vunpack.c.h.b16 %v1371
      %v1489 = vunpack.c.l.b16 %v1372
      %v1490 = vunpack.c.h.b16 %v1372
      %v1491 = vunpack.c.l.b16 %v1373
      %v1492 = vunpack.c.h.b16 %v1373
      %v1493 = vunpack.c.l.b16 %v1374
      %v1494 = vunpack.c.h.b16 %v1374
      %v1495 = vunpack.c.l.b16 %v1375
      %v1496 = vunpack.c.h.b16 %v1375
      %v1497 = vunpack.c.l.b16 %v1376
      %v1498 = vunpack.c.h.b16 %v1376
      %v1499 = vunpack.c.l.b16 %v1377
      %v1500 = vunpack.c.h.b16 %v1377
      %v1501 = vunpack.c.l.b16 %v1378
      %v1502 = vunpack.c.h.b16 %v1378
      %v1503 = vunpack.c.l.b16 %v1379
      %v1504 = vunpack.c.h.b16 %v1379
      %v1505 = vunpack.c.l.b16 %v1380
      %v1506 = vunpack.c.h.b16 %v1380
      %v1507 = vunpack.c.l.b16 %v1381
      %v1508 = vunpack.c.h.b16 %v1381
      %v1509 = vunpack.c.l.b16 %v1382
      %v1510 = vunpack.c.h.b16 %v1382
      %v1511 = vunpack.c.l.b16 %v1383
      %v1512 = vunpack.c.h.b16 %v1383
      %v1513 = vunpack.c.l.b16 %v1384
      %v1514 = vunpack.c.h.b16 %v1384
      %v1515 = vunpack.c.l.b16 %v1385
      %v1516 = vunpack.c.h.b16 %v1385
      %v1517 = vunpack.c.l.b16 %v1386
      %v1518 = vunpack.c.h.b16 %v1386
      %v1519 = vunpack.c.l.b16 %v1387
      %v1520 = vunpack.c.h.b16 %v1387
      %v1521 = vunpack.c.l.b16 %v1388
      %v1522 = vunpack.c.h.b16 %v1388
      %v1523 = vunpack.c.l.b16 %v1389
      %v1524 = vunpack.c.h.b16 %v1389
      %v1525 = vunpack.c.l.b16 %v1390
      %v1526 = vunpack.c.h.b16 %v1390
      %v1527 = vunpack.c.l.b16 %v1391
      %v1528 = vunpack.c.h.b16 %v1391
      %v1529 = vunpack.c.l.b16 %v1392
      %v1530 = vunpack.c.h.b16 %v1392
      %v1531 = vunpack.c.l.b16 %v1393
      %v1532 = vunpack.c.h.b16 %v1393
      %v1533 = vunpack.c.l.b16 %v1394
      %v1534 = vunpack.c.h.b16 %v1394
      %v1535 = vunpack.c.l.b16 %v1395
      %v1536 = vunpack.c.h.b16 %v1395
      %v1537 = vunpack.c.l.b16 %v1396
      %v1538 = vunpack.c.h.b16 %v1396
      %v1539 = vunpack.c.l.b16 %v1397
      %v1540 = vunpack.c.h.b16 %v1397
      %v1541 = vunpack.c.l.b16 %v1398
      %v1542 = vunpack.c.h.b16 %v1398
      %v1543 = vunpack.c.l.b16 %v1399
      %v1544 = vunpack.c.h.b16 %v1399
      %v1545 = vunpack.c.l.b16 %v1400
      %v1546 = vunpack.c.h.b16 %v1400
      %v1547 = vunpack.c.l.b16 %v1401
      %v1548 = vunpack.c.h.b16 %v1401
      %v1549 = vunpack.c.l.b16 %v1402
      %v1550 = vunpack.c.h.b16 %v1402
      %v1551 = vunpack.c.l.b16 %v1403
      %v1552 = vunpack.c.h.b16 %v1403
      %v1553 = vunpack.c.l.b16 %v1404
      %v1554 = vunpack.c.h.b16 %v1404
      %v1555 = vpack.c.b16 %v1487, %v1483
      %v1556 = vpack.c.b16 %v1488, %v1484
      %v1557 = vpack.c.b16 %v1489, %v1485
      %v1558 = vpack.c.b16 %v1490, %v1486
      %v1559 = vpack.c.b16 %v1495, %v1491
      %v1560 = vpack.c.b16 %v1496, %v1492
      %v1561 = vpack.c.b16 %v1497, %v1493
      %v1562 = vpack.c.b16 %v1498, %v1494
      %v1563 = vpack.c.b16 %v1503, %v1499
      %v1564 = vpack.c.b16 %v1504, %v1500
      %v1565 = vpack.c.b16 %v1505, %v1501
      %v1566 = vpack.c.b16 %v1506, %v1502
      %v1567 = vpack.c.b16 %v1511, %v1507
      %v1568 = vpack.c.b16 %v1512, %v1508
      %v1569 = vpack.c.b16 %v1513, %v1509
      %v1570 = vpack.c.b16 %v1514, %v1510
      %v1571 = vpack.c.b16 %v1519, %v1515
      %v1572 = vpack.c.b16 %v1520, %v1516
      %v1573 = vpack.c.b16 %v1521, %v1517
      %v1574 = vpack.c.b16 %v1522, %v1518
      %v1575 = vpack.c.b16 %v1527, %v1523
      %v1576 = vpack.c.b16 %v1528, %v1524
      %v1577 = vpack.c.b16 %v1529, %v1525
      %v1578 = vpack.c.b16 %v1530, %v1526
      %v1579 = vpack.c.b16 %v1535, %v1531
      %v1580 = vpack.c.b16 %v1536, %v1532
      %v1581 = vpack.c.b16 %v1537, %v1533
      %v1582 = vpack.c.b16 %v1538, %v1534
      %v1583 = vpack.c.b16 %v1543, %v1539
      %v1584 = vpack.c.b16 %v1544, %v1540
      %v1585 = vpack.c.b16 %v1545, %v1541
      %v1586 = vpack.c.b16 %v1546, %v1542
      %v1587 = vpack.c.b16 %v1551, %v1547
      %v1588 = vpack.c.b16 %v1552, %v1548
      %v1589 = vpack.c.b16 %v1553, %v1549
      %v1590 = vpack.c.b16 %v1554, %v1550
      %v1628 = vsel %vm661, %v1442, 0
      %v1631 = vsel %vm661, %v1444, 0
      %1633 = vmatpush.bf16.msra.mxu0 %v1583
      %1634 = vmatpush.bf16.msra.mxu0 %v1579
      %1635 = vmatpush.bf16.msra.mxu0 %v1575
      %1636 = vmatpush.bf16.msra.mxu0 %v1571
      %1637 = vmatpush.bf16.msra.mxu0 %v1567
      %1638 = vmatpush.bf16.msra.mxu0 %v1563
      %1639 = vmatpush.bf16.msra.mxu0 %v1559
      %1640 = vmatpush.bf16.msra.mxu0 %v1555
      %1641 = vmatmul.bf16.gmra.mxu0 %v1441
      %v1642 = vpop.f32.mrf.mxu0
      %v1643 = vadd.f32 %v1412, %v1642
      %v1644 = vpop.f32.mrf.mxu0
      %v1645 = vadd.f32 %v1417, %v1644
      %1646 = vmatmul.bf16.gmra.mxu0 %v1443
      %v1647 = vpop.f32.mrf.mxu0
      %v1648 = vadd.f32 %v1422, %v1647
      %v1649 = vpop.f32.mrf.mxu0
      %v1650 = vadd.f32 %v1427, %v1649
      %1651 = vdwg.mxu0
      %1652 = vmatpush.bf16.msra.mxu0 0
      %1653 = vmatpush.bf16.msra.mxu0 0
      %1654 = vmatpush.bf16.msra.mxu0 0
      %1655 = vmatpush.bf16.msra.mxu0 0
      %1656 = vmatpush.bf16.msra.mxu0 0
      %1657 = vmatpush.bf16.msra.mxu0 0
      %1658 = vmatpush.bf16.msra.mxu0 0
      %1659 = vmatpush.bf16.msra.mxu0 %v1587
      %1660 = vmatmul.bf16.gmra.mxu0 %v1628
      %v1661 = vpop.f32.mrf.mxu0
      %v1662 = vadd.f32 %v1643, %v1661
      %v1663 = vpop.f32.mrf.mxu0
      %v1664 = vadd.f32 %v1645, %v1663
      %1665 = vmatmul.bf16.gmra.mxu0 %v1631
      %v1666 = vpop.f32.mrf.mxu0
      %v1667 = vadd.f32 %v1648, %v1666
      %v1668 = vpop.f32.mrf.mxu0
      %v1669 = vadd.f32 %v1650, %v1668
      %1670 = vdwg.mxu0
      %1671 = vmatpush.bf16.msra.mxu0 %v1584
      %1672 = vmatpush.bf16.msra.mxu0 %v1580
      %1673 = vmatpush.bf16.msra.mxu0 %v1576
      %1674 = vmatpush.bf16.msra.mxu0 %v1572
      %1675 = vmatpush.bf16.msra.mxu0 %v1568
      %1676 = vmatpush.bf16.msra.mxu0 %v1564
      %1677 = vmatpush.bf16.msra.mxu0 %v1560
      %1678 = vmatpush.bf16.msra.mxu0 %v1556
      %1679 = vmatmul.bf16.gmra.mxu0 %v1441
      %v1680 = vpop.f32.mrf.mxu0
      %v1681 = vadd.f32 %v1412, %v1680
      %v1682 = vpop.f32.mrf.mxu0
      %v1683 = vadd.f32 %v1417, %v1682
      %1684 = vmatmul.bf16.gmra.mxu0 %v1443
      %v1685 = vpop.f32.mrf.mxu0
      %v1686 = vadd.f32 %v1422, %v1685
      %v1687 = vpop.f32.mrf.mxu0
      %v1688 = vadd.f32 %v1427, %v1687
      %1689 = vdwg.mxu0
      %1690 = vmatpush.bf16.msra.mxu0 0
      %1691 = vmatpush.bf16.msra.mxu0 0
      %1692 = vmatpush.bf16.msra.mxu0 0
      %1693 = vmatpush.bf16.msra.mxu0 0
      %1694 = vmatpush.bf16.msra.mxu0 0
      %1695 = vmatpush.bf16.msra.mxu0 0
      %1696 = vmatpush.bf16.msra.mxu0 0
      %1697 = vmatpush.bf16.msra.mxu0 %v1588
      %1698 = vmatmul.bf16.gmra.mxu0 %v1628
      %v1699 = vpop.f32.mrf.mxu0
      %v1700 = vadd.f32 %v1681, %v1699
      %v1701 = vpop.f32.mrf.mxu0
      %v1702 = vadd.f32 %v1683, %v1701
      %1703 = vmatmul.bf16.gmra.mxu0 %v1631
      %v1704 = vpop.f32.mrf.mxu0
      %v1705 = vadd.f32 %v1686, %v1704
      %v1706 = vpop.f32.mrf.mxu0
      %v1707 = vadd.f32 %v1688, %v1706
      %1708 = vdwg.mxu0
      %1709 = vmatpush.bf16.msra.mxu0 %v1585
      %1710 = vmatpush.bf16.msra.mxu0 %v1581
      %1711 = vmatpush.bf16.msra.mxu0 %v1577
      %1712 = vmatpush.bf16.msra.mxu0 %v1573
      %1713 = vmatpush.bf16.msra.mxu0 %v1569
      %1714 = vmatpush.bf16.msra.mxu0 %v1565
      %1715 = vmatpush.bf16.msra.mxu0 %v1561
      %1716 = vmatpush.bf16.msra.mxu0 %v1557
      %1717 = vmatmul.bf16.gmra.mxu0 %v1441
      %v1718 = vpop.f32.mrf.mxu0
      %v1719 = vadd.f32 %v1412, %v1718
      %v1720 = vpop.f32.mrf.mxu0
      %v1721 = vadd.f32 %v1417, %v1720
      %1722 = vmatmul.bf16.gmra.mxu0 %v1443
      %v1723 = vpop.f32.mrf.mxu0
      %v1724 = vadd.f32 %v1422, %v1723
      %v1725 = vpop.f32.mrf.mxu0
      %v1726 = vadd.f32 %v1427, %v1725
      %1727 = vdwg.mxu0
      %1728 = vmatpush.bf16.msra.mxu0 0
      %1729 = vmatpush.bf16.msra.mxu0 0
      %1730 = vmatpush.bf16.msra.mxu0 0
      %1731 = vmatpush.bf16.msra.mxu0 0
      %1732 = vmatpush.bf16.msra.mxu0 0
      %1733 = vmatpush.bf16.msra.mxu0 0
      %1734 = vmatpush.bf16.msra.mxu0 0
      %1735 = vmatpush.bf16.msra.mxu0 %v1589
      %1736 = vmatmul.bf16.gmra.mxu0 %v1628
      %v1737 = vpop.f32.mrf.mxu0
      %v1738 = vadd.f32 %v1719, %v1737
      %v1739 = vpop.f32.mrf.mxu0
      %v1740 = vadd.f32 %v1721, %v1739
      %1741 = vmatmul.bf16.gmra.mxu0 %v1631
      %v1742 = vpop.f32.mrf.mxu0
      %v1743 = vadd.f32 %v1724, %v1742
      %v1744 = vpop.f32.mrf.mxu0
      %v1745 = vadd.f32 %v1726, %v1744
      %1746 = vdwg.mxu0
      %1747 = vmatpush.bf16.msra.mxu0 %v1586
      %1748 = vmatpush.bf16.msra.mxu0 %v1582
      %1749 = vmatpush.bf16.msra.mxu0 %v1578
      %1750 = vmatpush.bf16.msra.mxu0 %v1574
      %1751 = vmatpush.bf16.msra.mxu0 %v1570
      %1752 = vmatpush.bf16.msra.mxu0 %v1566
      %1753 = vmatpush.bf16.msra.mxu0 %v1562
      %1754 = vmatpush.bf16.msra.mxu0 %v1558
      %1755 = vmatmul.bf16.gmra.mxu0 %v1441
      %v1756 = vpop.f32.mrf.mxu0
      %v1757 = vadd.f32 %v1412, %v1756
      %v1758 = vpop.f32.mrf.mxu0
      %v1759 = vadd.f32 %v1417, %v1758
      %1760 = vmatmul.bf16.gmra.mxu0 %v1443
      %v1761 = vpop.f32.mrf.mxu0
      %v1762 = vadd.f32 %v1422, %v1761
      %v1763 = vpop.f32.mrf.mxu0
      %v1764 = vadd.f32 %v1427, %v1763
      %1765 = vdwg.mxu0
      %1766 = vmatpush.bf16.msra.mxu0 0
      %1767 = vmatpush.bf16.msra.mxu0 0
      %1768 = vmatpush.bf16.msra.mxu0 0
      %1769 = vmatpush.bf16.msra.mxu0 0
      %1770 = vmatpush.bf16.msra.mxu0 0
      %1771 = vmatpush.bf16.msra.mxu0 0
      %1772 = vmatpush.bf16.msra.mxu0 0
      %1773 = vmatpush.bf16.msra.mxu0 %v1590
      %1774 = vmatmul.bf16.gmra.mxu0 %v1628
      %v1775 = vpop.f32.mrf.mxu0
      %v1776 = vadd.f32 %v1757, %v1775
      %v1777 = vpop.f32.mrf.mxu0
      %v1778 = vadd.f32 %v1759, %v1777
      %1779 = vmatmul.bf16.gmra.mxu0 %v1631
      %v1780 = vpop.f32.mrf.mxu0
      %v1781 = vadd.f32 %v1762, %v1780
      %v1782 = vpop.f32.mrf.mxu0
      %v1783 = vadd.f32 %v1764, %v1782
      %1784 = vdwg.mxu0
      %v1785 = vmax.f32 %v1662, 0.0
      %v1786 = vmax.f32 %v1700, 0.0
      %v1787 = vmax.f32 %v1738, 0.0
      %v1788 = vmax.f32 %v1776, 0.0
      %v1789 = vmax.f32 %v1664, 0.0
      %v1790 = vmax.f32 %v1702, 0.0
      %v1791 = vmax.f32 %v1740, 0.0
      %v1792 = vmax.f32 %v1778, 0.0
      %v1793 = vmax.f32 %v1667, 0.0
      %v1794 = vmax.f32 %v1705, 0.0
      %v1795 = vmax.f32 %v1743, 0.0
      %v1796 = vmax.f32 %v1781, 0.0
      %v1797 = vmax.f32 %v1669, 0.0
      %v1798 = vmax.f32 %v1707, 0.0
      %v1799 = vmax.f32 %v1745, 0.0
      %v1800 = vmax.f32 %v1783, 0.0
      %vm1801 = vcmask 134144
      %1802 = vst.msk [vmem:[#allocation3] sm:$0xf] %vm1801, 0
      %1803 = vst.msk [vmem:[#allocation3 + $0x14] sm:$0xf] %vm1801, 0
      %1804 = vst.msk [vmem:[#allocation3 + $0x28] sm:$0xf] %vm1801, 0
      %1805 = vst.msk [vmem:[#allocation3 + $0x3c] sm:$0xf] %vm1801, 0
      %vm1806 = vcmask 273544
      %1807 = vst.msk [vmem:[#allocation3 + $0x10] sm:$0xf] %vm1806, 0
      %1808 = vst.msk [vmem:[#allocation3 + $0x24] sm:$0xf] %vm1806, 0
      %1809 = vst.msk [vmem:[#allocation3 + $0x38] sm:$0xf] %vm1806, 0
      %1810 = vst.msk [vmem:[#allocation3 + $0x4c] sm:$0xf] %vm1806, 0
      %v1811 = vpack.c.bf16 %v1786, %v1785
      %v1812 = vpack.c.bf16 %v1788, %v1787
      %v1813 = vpack.c.bf16 %v1790, %v1789
      %v1814 = vpack.c.bf16 %v1792, %v1791
      %v1815 = vpack.c.bf16 %v1794, %v1793
      %v1816 = vpack.c.bf16 %v1796, %v1795
      %v1817 = vpack.c.bf16 %v1798, %v1797
      %v1818 = vpack.c.bf16 %v1800, %v1799
      %1827 = vrot.lane.b32.xlu0 %v1811, 17
      %v1828 = vpop.permute.xlu0 %1827
      %1829 = vrot.lane.b32.xlu0 %v1812, 17
      %v1830 = vpop.permute.xlu0 %1829
      %1831 = vrot.lane.b32.xlu0 %v1813, 17
      %v1832 = vpop.permute.xlu0 %1831
      %1833 = vrot.lane.b32.xlu0 %v1814, 17
      %v1834 = vpop.permute.xlu0 %1833
      %1835 = vrot.lane.b32.xlu0 %v1815, 17
      %v1836 = vpop.permute.xlu0 %1835
      %1837 = vrot.lane.b32.xlu0 %v1816, 17
      %v1838 = vpop.permute.xlu0 %1837
      %1839 = vrot.lane.b32.xlu0 %v1817, 17
      %v1840 = vpop.permute.xlu0 %1839
      %1841 = vrot.lane.b32.xlu0 %v1818, 17
      %v1842 = vpop.permute.xlu0 %1841
      %v1843 = vrot.slane %v1828, 4
      %v1844 = vrot.slane %v1830, 4
      %v1845 = vrot.slane %v1832, 4
      %v1846 = vrot.slane %v1834, 4
      %v1847 = vrot.slane %v1836, 4
      %v1848 = vrot.slane %v1838, 4
      %v1849 = vrot.slane %v1840, 4
      %v1850 = vrot.slane %v1842, 4
      %vm1851 = vcmask 138240
      %v1852 = vsel %vm1851, %v1843, %v1828
      %v1853 = vsel %vm453, %v1843, %v1844
      %v1854 = vsel %vm1851, %v1853, %v1830
      %v1855 = vsel %vm1851, %v1845, %v1832
      %v1856 = vsel %vm453, %v1845, %v1846
      %v1857 = vsel %vm1851, %v1856, %v1834
      %v1858 = vsel %vm1851, %v1847, %v1836
      %v1859 = vsel %vm453, %v1847, %v1848
      %v1860 = vsel %vm1851, %v1859, %v1838
      %v1861 = vsel %vm1851, %v1849, %v1840
      %v1862 = vsel %vm453, %v1849, %v1850
      %v1863 = vsel %vm1851, %v1862, %v1842
      %vm1876 = vcmask 1043592
      %vm1877 = vcmask 1047556
      %vm1878 = vmor %vm1877, %vm1876
      %1879 = vst.msk [vmem:[#allocation3] sm:$0xff] %vm1878, %v1852
      %1880 = vst [vmem:[#allocation3 + $0x8] sm:$0xff] %v1854
      %1881 = vst.msk [vmem:[#allocation3 + $0x10] sm:$0xf] %vm1801, %v1844
      %1882 = vst.msk [vmem:[#allocation3 + $0x14] sm:$0xff] %vm1878, %v1855
      %1883 = vst [vmem:[#allocation3 + $0x1c] sm:$0xff] %v1857
      %1884 = vst.msk [vmem:[#allocation3 + $0x24] sm:$0xf] %vm1801, %v1846
      %1885 = vst.msk [vmem:[#allocation3 + $0x28] sm:$0xff] %vm1878, %v1858
      %1886 = vst [vmem:[#allocation3 + $0x30] sm:$0xff] %v1860
      %1887 = vst.msk [vmem:[#allocation3 + $0x38] sm:$0xf] %vm1801, %v1848
      %1888 = vst.msk [vmem:[#allocation3 + $0x3c] sm:$0xff] %vm1878, %v1861
      %1889 = vst [vmem:[#allocation3 + $0x44] sm:$0xff] %v1863
      %1890 = vst.msk [vmem:[#allocation3 + $0x4c] sm:$0xf] %vm1801, %v1850
      %v1891 = vld [vmem:[#allocation3] sm:$0xff]
      %v1892 = vld [vmem:[#allocation3 + $0x8] sm:$0xff]
      %v1893 = vld [vmem:[#allocation3 + $0x14] sm:$0xff]
      %v1894 = vld [vmem:[#allocation3 + $0x1c] sm:$0xff]
      %v1895 = vld [vmem:[#allocation3 + $0x28] sm:$0xff]
      %v1896 = vld [vmem:[#allocation3 + $0x30] sm:$0xff]
      %v1897 = vld [vmem:[#allocation3 + $0x3c] sm:$0xff]
      %v1898 = vld [vmem:[#allocation3 + $0x44] sm:$0xff]
      %v1899 = vld [vmem:[%s1] sm:$0x11]
      %v1900 = vld [vmem:[%s1 + $0x8] sm:$0x11]
      %v1903 = vunpack.c.l.b16 %v1899
      %v1904 = vunpack.c.h.b16 %v1899
      %v1905 = vunpack.c.l.b16 %v1900
      %v1906 = vunpack.c.h.b16 %v1900
      %v1907 = vpack.c.b16 %v1903, %v1903
      %v1908 = vpack.c.b16 %v1904, %v1904
      %v1909 = vpack.c.b16 %v1905, %v1905
      %v1910 = vpack.c.b16 %v1906, %v1906
      %v1912 = vpack.i.b16 %v1907, %v1907
      %v1914 = vperm.slane %v1912, 0
      %v1916 = vpack.i.b16 %v1908, %v1908
      %v1918 = vperm.slane %v1916, 0
      %v1920 = vpack.i.b16 %v1909, %v1909
      %v1922 = vperm.slane %v1920, 0
      %v1924 = vpack.i.b16 %v1910, %v1910
      %v1926 = vperm.slane %v1924, 0
      %v1927 = vunpack.c.l.bf16 %v1891
      %v1928 = vunpack.c.h.bf16 %v1891
      %v1929 = vunpack.c.l.bf16 %v1892
      %v1930 = vunpack.c.h.bf16 %v1892
      %v1931 = vunpack.c.l.bf16 %v1893
      %v1932 = vunpack.c.h.bf16 %v1893
      %v1933 = vunpack.c.l.bf16 %v1894
      %v1934 = vunpack.c.h.bf16 %v1894
      %v1935 = vunpack.c.l.bf16 %v1895
      %v1936 = vunpack.c.h.bf16 %v1895
      %v1937 = vunpack.c.l.bf16 %v1896
      %v1938 = vunpack.c.h.bf16 %v1896
      %v1939 = vunpack.c.l.bf16 %v1897
      %v1940 = vunpack.c.h.bf16 %v1897
      %v1941 = vunpack.c.l.bf16 %v1898
      %v1942 = vunpack.c.h.bf16 %v1898
      %v1943 = vunpack.c.l.bf16 %v1914
      %v1944 = vunpack.c.l.bf16 %v1918
      %v1945 = vunpack.c.l.bf16 %v1922
      %v1946 = vunpack.c.l.bf16 %v1926
      %v1947 = vmul.f32 %v1927, %v1943
      %v1948 = vmul.f32 %v1928, %v1944
      %v1949 = vmul.f32 %v1929, %v1945
      %v1950 = vmul.f32 %v1930, %v1946
      %v1951 = vmul.f32 %v1931, %v1943
      %v1952 = vmul.f32 %v1932, %v1944
      %v1953 = vmul.f32 %v1933, %v1945
      %v1954 = vmul.f32 %v1934, %v1946
      %v1955 = vmul.f32 %v1935, %v1943
      %v1956 = vmul.f32 %v1936, %v1944
      %v1957 = vmul.f32 %v1937, %v1945
      %v1958 = vmul.f32 %v1938, %v1946
      %v1959 = vmul.f32 %v1939, %v1943
      %v1960 = vmul.f32 %v1940, %v1944
      %v1961 = vmul.f32 %v1941, %v1945
      %v1962 = vmul.f32 %v1942, %v1946
      %v1963 = vpack.c.bf16 %v1948, %v1947
      %v1964 = vpack.c.bf16 %v1950, %v1949
      %v1965 = vpack.c.bf16 %v1952, %v1951
      %v1966 = vpack.c.bf16 %v1954, %v1953
      %v1967 = vpack.c.bf16 %v1956, %v1955
      %v1968 = vpack.c.bf16 %v1958, %v1957
      %v1969 = vpack.c.bf16 %v1960, %v1959
      %v1970 = vpack.c.bf16 %v1962, %v1961
      %1971 = vst [vmem:[#allocation4] sm:$0xff] %v1963
      %1972 = vst [vmem:[#allocation4 + $0x8] sm:$0xff] %v1964
      %1973 = vst [vmem:[#allocation4 + $0x10] sm:$0xff] %v1965
      %1974 = vst [vmem:[#allocation4 + $0x18] sm:$0xff] %v1966
      %1975 = vst [vmem:[#allocation4 + $0x20] sm:$0xff] %v1967
      %1976 = vst [vmem:[#allocation4 + $0x28] sm:$0xff] %v1968
      %1977 = vst [vmem:[#allocation4 + $0x30] sm:$0xff] %v1969
      %1978 = vst [vmem:[#allocation4 + $0x38] sm:$0xff] %v1970
      %v1979 = vld [vmem:[#allocation3] sm:$0xff]
      %v1980 = vld [vmem:[#allocation3 + $0x8] sm:$0xff]
      %v1981 = vld [vmem:[#allocation3 + $0x10] sm:$0xf]
      %v1982 = vld [vmem:[#allocation3 + $0x14] sm:$0xff]
      %v1983 = vld [vmem:[#allocation3 + $0x1c] sm:$0xff]
      %v1984 = vld [vmem:[#allocation3 + $0x24] sm:$0xf]
      %v1985 = vld [vmem:[#allocation3 + $0x28] sm:$0xff]
      %v1986 = vld [vmem:[#allocation3 + $0x30] sm:$0xff]
      %v1987 = vld [vmem:[#allocation3 + $0x38] sm:$0xf]
      %v1988 = vld [vmem:[#allocation3 + $0x3c] sm:$0xff]
      %v1989 = vld [vmem:[#allocation3 + $0x44] sm:$0xff]
      %v1990 = vld [vmem:[#allocation3 + $0x4c] sm:$0xf]
      %v1991 = vld [vmem:[%s1] sm:$0x11]
      %v1992 = vld [vmem:[%s1 + $0x8] sm:$0x11]
      %v1995 = vunpack.c.l.b16 %v1991
      %v1996 = vunpack.c.h.b16 %v1991
      %v1997 = vunpack.c.l.b16 %v1992
      %v1998 = vunpack.c.h.b16 %v1992
      %v1999 = vpack.c.b16 %v1995, %v1995
      %v2000 = vpack.c.b16 %v1996, %v1996
      %v2001 = vpack.c.b16 %v1997, %v1997
      %v2002 = vpack.c.b16 %v1998, %v1998
      %v2004 = vshrl.u32 %v1999, 16
      %v2005 = vpack.i.b16 %v2004, %v2004
      %v2007 = vperm.slane %v2005, 0
      %v2009 = vshrl.u32 %v2000, 16
      %v2010 = vpack.i.b16 %v2009, %v2009
      %v2012 = vperm.slane %v2010, 0
      %v2014 = vshrl.u32 %v2001, 16
      %v2015 = vpack.i.b16 %v2014, %v2014
      %v2017 = vperm.slane %v2015, 0
      %v2019 = vshrl.u32 %v2002, 16
      %v2020 = vpack.i.b16 %v2019, %v2019
      %v2022 = vperm.slane %v2020, 0
      %v2023 = vunpack.c.l.bf16 %v1979
      %v2024 = vunpack.c.h.bf16 %v1979
      %v2025 = vunpack.c.l.bf16 %v1980
      %v2026 = vunpack.c.h.bf16 %v1980
      %v2027 = vunpack.c.l.bf16 %v1981
      %v2028 = vunpack.c.l.bf16 %v1982
      %v2029 = vunpack.c.h.bf16 %v1982
      %v2030 = vunpack.c.l.bf16 %v1983
      %v2031 = vunpack.c.h.bf16 %v1983
      %v2032 = vunpack.c.l.bf16 %v1984
      %v2033 = vunpack.c.l.bf16 %v1985
      %v2034 = vunpack.c.h.bf16 %v1985
      %v2035 = vunpack.c.l.bf16 %v1986
      %v2036 = vunpack.c.h.bf16 %v1986
      %v2037 = vunpack.c.l.bf16 %v1987
      %v2038 = vunpack.c.l.bf16 %v1988
      %v2039 = vunpack.c.h.bf16 %v1988
      %v2040 = vunpack.c.l.bf16 %v1989
      %v2041 = vunpack.c.h.bf16 %v1989
      %v2042 = vunpack.c.l.bf16 %v1990
      %v2043 = vunpack.c.l.bf16 %v2007
      %v2044 = vunpack.c.l.bf16 %v2012
      %v2045 = vunpack.c.l.bf16 %v2017
      %v2046 = vunpack.c.l.bf16 %v2022
      %2051 = vrot.lane.b32.xlu0 %v2043, 1
      %v2052 = vpop.permute.xlu0 %2051
      %2053 = vrot.lane.b32.xlu0 %v2044, 1
      %v2054 = vpop.permute.xlu0 %2053
      %2055 = vrot.lane.b32.xlu0 %v2045, 1
      %v2056 = vpop.permute.xlu0 %2055
      %2057 = vrot.lane.b32.xlu0 %v2046, 1
      %v2058 = vpop.permute.xlu0 %2057
      %v2059 = vsel %vm404, %v2052, %v2054
      %v2060 = vsel %vm404, %v2054, %v2056
      %v2061 = vsel %vm404, %v2056, %v2058
      %v2067 = vmul.f32 %v2023, %v2052
      %v2068 = vmul.f32 %v2024, %v2059
      %v2069 = vmul.f32 %v2025, %v2060
      %v2070 = vmul.f32 %v2026, %v2061
      %v2071 = vmul.f32 %v2027, %v2058
      %v2072 = vmul.f32 %v2028, %v2052
      %v2073 = vmul.f32 %v2029, %v2059
      %v2074 = vmul.f32 %v2030, %v2060
      %v2075 = vmul.f32 %v2031, %v2061
      %v2076 = vmul.f32 %v2032, %v2058
      %v2077 = vmul.f32 %v2033, %v2052
      %v2078 = vmul.f32 %v2034, %v2059
      %v2079 = vmul.f32 %v2035, %v2060
      %v2080 = vmul.f32 %v2036, %v2061
      %v2081 = vmul.f32 %v2037, %v2058
      %v2082 = vmul.f32 %v2038, %v2052
      %v2083 = vmul.f32 %v2039, %v2059
      %v2084 = vmul.f32 %v2040, %v2060
      %v2085 = vmul.f32 %v2041, %v2061
      %v2086 = vmul.f32 %v2042, %v2058
      %v2087 = vpack.c.bf16 %v2068, %v2067
      %v2088 = vpack.c.bf16 %v2070, %v2069
      %v2089 = vpack.c.bf16 %v2071, %v2071
      %v2090 = vpack.c.bf16 %v2073, %v2072
      %v2091 = vpack.c.bf16 %v2075, %v2074
      %v2092 = vpack.c.bf16 %v2076, %v2076
      %v2093 = vpack.c.bf16 %v2078, %v2077
      %v2094 = vpack.c.bf16 %v2080, %v2079
      %v2095 = vpack.c.bf16 %v2081, %v2081
      %v2096 = vpack.c.bf16 %v2083, %v2082
      %v2097 = vpack.c.bf16 %v2085, %v2084
      %v2098 = vpack.c.bf16 %v2086, %v2086
      %2111 = vrot.lane.b32.xlu0 %v2087, 127
      %v2112 = vpop.permute.xlu0 %2111
      %2113 = vrot.lane.b32.xlu0 %v2088, 127
      %v2114 = vpop.permute.xlu0 %2113
      %2115 = vrot.lane.b32.xlu0 %v2089, 127
      %v2116 = vpop.permute.xlu0 %2115
      %2117 = vrot.lane.b32.xlu0 %v2090, 127
      %v2118 = vpop.permute.xlu0 %2117
      %2119 = vrot.lane.b32.xlu0 %v2091, 127
      %v2120 = vpop.permute.xlu0 %2119
      %2121 = vrot.lane.b32.xlu0 %v2092, 127
      %v2122 = vpop.permute.xlu0 %2121
      %2123 = vrot.lane.b32.xlu0 %v2093, 127
      %v2124 = vpop.permute.xlu0 %2123
      %2125 = vrot.lane.b32.xlu0 %v2094, 127
      %v2126 = vpop.permute.xlu0 %2125
      %2127 = vrot.lane.b32.xlu0 %v2095, 127
      %v2128 = vpop.permute.xlu0 %2127
      %2129 = vrot.lane.b32.xlu0 %v2096, 127
      %v2130 = vpop.permute.xlu0 %2129
      %2131 = vrot.lane.b32.xlu0 %v2097, 127
      %v2132 = vpop.permute.xlu0 %2131
      %2133 = vrot.lane.b32.xlu0 %v2098, 127
      %v2134 = vpop.permute.xlu0 %2133
      %v2135 = vrot.slane %v2112, 4
      %v2136 = vrot.slane %v2114, 4
      %v2137 = vrot.slane %v2116, 4
      %v2138 = vrot.slane %v2118, 4
      %v2139 = vrot.slane %v2120, 4
      %v2140 = vrot.slane %v2122, 4
      %v2141 = vrot.slane %v2124, 4
      %v2142 = vrot.slane %v2126, 4
      %v2143 = vrot.slane %v2128, 4
      %v2144 = vrot.slane %v2130, 4
      %v2145 = vrot.slane %v2132, 4
      %v2146 = vrot.slane %v2134, 4
      %v2147 = vsel %vm453, %v2135, %v2136
      %v2148 = vsel %vm455, %v2112, %v2147
      %v2149 = vsel %vm453, %v2136, %v2137
      %v2150 = vsel %vm455, %v2114, %v2149
      %v2151 = vsel %vm453, %v2138, %v2139
      %v2152 = vsel %vm455, %v2118, %v2151
      %v2153 = vsel %vm453, %v2139, %v2140
      %v2154 = vsel %vm455, %v2120, %v2153
      %v2155 = vsel %vm453, %v2141, %v2142
      %v2156 = vsel %vm455, %v2124, %v2155
      %v2157 = vsel %vm453, %v2142, %v2143
      %v2158 = vsel %vm455, %v2126, %v2157
      %v2159 = vsel %vm453, %v2144, %v2145
      %v2160 = vsel %vm455, %v2130, %v2159
      %v2161 = vsel %vm453, %v2145, %v2146
      %v2162 = vsel %vm455, %v2132, %v2161
      %2171 = vst [vmem:[#allocation4 + $0x40] sm:$0xff] %v2148
      %2172 = vst [vmem:[#allocation4 + $0x48] sm:$0xff] %v2150
      %2173 = vst [vmem:[#allocation4 + $0x50] sm:$0xff] %v2152
      %2174 = vst [vmem:[#allocation4 + $0x58] sm:$0xff] %v2154
      %2175 = vst [vmem:[#allocation4 + $0x60] sm:$0xff] %v2156
      %2176 = vst [vmem:[#allocation4 + $0x68] sm:$0xff] %v2158
      %2177 = vst [vmem:[#allocation4 + $0x70] sm:$0xff] %v2160
      %2178 = vst [vmem:[#allocation4 + $0x78] sm:$0xff] %v2162
      %v2179 = vld [vmem:[#allocation3] sm:$0xff]
      %v2180 = vld [vmem:[#allocation3 + $0x8] sm:$0xff]
      %v2181 = vld [vmem:[#allocation3 + $0x10] sm:$0xf]
      %v2182 = vld [vmem:[#allocation3 + $0x14] sm:$0xff]
      %v2183 = vld [vmem:[#allocation3 + $0x1c] sm:$0xff]
      %v2184 = vld [vmem:[#allocation3 + $0x24] sm:$0xf]
      %v2185 = vld [vmem:[#allocation3 + $0x28] sm:$0xff]
      %v2186 = vld [vmem:[#allocation3 + $0x30] sm:$0xff]
      %v2187 = vld [vmem:[#allocation3 + $0x38] sm:$0xf]
      %v2188 = vld [vmem:[#allocation3 + $0x3c] sm:$0xff]
      %v2189 = vld [vmem:[#allocation3 + $0x44] sm:$0xff]
      %v2190 = vld [vmem:[#allocation3 + $0x4c] sm:$0xf]
      %v2191 = vld [vmem:[%s1] sm:$0x22]
      %v2192 = vld [vmem:[%s1 + $0x8] sm:$0x22]
      %v2195 = vunpack.c.l.b16 %v2191
      %v2196 = vunpack.c.h.b16 %v2191
      %v2197 = vunpack.c.l.b16 %v2192
      %v2198 = vunpack.c.h.b16 %v2192
      %v2199 = vpack.c.b16 %v2195, %v2195
      %v2200 = vpack.c.b16 %v2196, %v2196
      %v2201 = vpack.c.b16 %v2197, %v2197
      %v2202 = vpack.c.b16 %v2198, %v2198
      %v2204 = vpack.i.b16 %v2199, %v2199
      %v2206 = vperm.slane %v2204, 1
      %v2208 = vpack.i.b16 %v2200, %v2200
      %v2210 = vperm.slane %v2208, 1
      %v2212 = vpack.i.b16 %v2201, %v2201
      %v2214 = vperm.slane %v2212, 1
      %v2216 = vpack.i.b16 %v2202, %v2202
      %v2218 = vperm.slane %v2216, 1
      %v2219 = vunpack.c.l.bf16 %v2179
      %v2220 = vunpack.c.h.bf16 %v2179
      %v2221 = vunpack.c.l.bf16 %v2180
      %v2222 = vunpack.c.h.bf16 %v2180
      %v2223 = vunpack.c.l.bf16 %v2181
      %v2224 = vunpack.c.l.bf16 %v2182
      %v2225 = vunpack.c.h.bf16 %v2182
      %v2226 = vunpack.c.l.bf16 %v2183
      %v2227 = vunpack.c.h.bf16 %v2183
      %v2228 = vunpack.c.l.bf16 %v2184
      %v2229 = vunpack.c.l.bf16 %v2185
      %v2230 = vunpack.c.h.bf16 %v2185
      %v2231 = vunpack.c.l.bf16 %v2186
      %v2232 = vunpack.c.h.bf16 %v2186
      %v2233 = vunpack.c.l.bf16 %v2187
      %v2234 = vunpack.c.l.bf16 %v2188
      %v2235 = vunpack.c.h.bf16 %v2188
      %v2236 = vunpack.c.l.bf16 %v2189
      %v2237 = vunpack.c.h.bf16 %v2189
      %v2238 = vunpack.c.l.bf16 %v2190
      %v2239 = vunpack.c.l.bf16 %v2206
      %v2240 = vunpack.c.l.bf16 %v2210
      %v2241 = vunpack.c.l.bf16 %v2214
      %v2242 = vunpack.c.l.bf16 %v2218
      %2247 = vrot.lane.b32.xlu0 %v2239, 2
      %v2248 = vpop.permute.xlu0 %2247
      %2249 = vrot.lane.b32.xlu0 %v2240, 2
      %v2250 = vpop.permute.xlu0 %2249
      %2251 = vrot.lane.b32.xlu0 %v2241, 2
      %v2252 = vpop.permute.xlu0 %2251
      %2253 = vrot.lane.b32.xlu0 %v2242, 2
      %v2254 = vpop.permute.xlu0 %2253
      %v2255 = vsel %vm531, %v2248, %v2250
      %v2256 = vsel %vm531, %v2250, %v2252
      %v2257 = vsel %vm531, %v2252, %v2254
      %v2263 = vmul.f32 %v2219, %v2248
      %v2264 = vmul.f32 %v2220, %v2255
      %v2265 = vmul.f32 %v2221, %v2256
      %v2266 = vmul.f32 %v2222, %v2257
      %v2267 = vmul.f32 %v2223, %v2254
      %v2268 = vmul.f32 %v2224, %v2248
      %v2269 = vmul.f32 %v2225, %v2255
      %v2270 = vmul.f32 %v2226, %v2256
      %v2271 = vmul.f32 %v2227, %v2257
      %v2272 = vmul.f32 %v2228, %v2254
      %v2273 = vmul.f32 %v2229, %v2248
      %v2274 = vmul.f32 %v2230, %v2255
      %v2275 = vmul.f32 %v2231, %v2256
      %v2276 = vmul.f32 %v2232, %v2257
      %v2277 = vmul.f32 %v2233, %v2254
      %v2278 = vmul.f32 %v2234, %v2248
      %v2279 = vmul.f32 %v2235, %v2255
      %v2280 = vmul.f32 %v2236, %v2256
      %v2281 = vmul.f32 %v2237, %v2257
      %v2282 = vmul.f32 %v2238, %v2254
      %v2283 = vpack.c.bf16 %v2264, %v2263
      %v2284 = vpack.c.bf16 %v2266, %v2265
      %v2285 = vpack.c.bf16 %v2267, %v2267
      %v2286 = vpack.c.bf16 %v2269, %v2268
      %v2287 = vpack.c.bf16 %v2271, %v2270
      %v2288 = vpack.c.bf16 %v2272, %v2272
      %v2289 = vpack.c.bf16 %v2274, %v2273
      %v2290 = vpack.c.bf16 %v2276, %v2275
      %v2291 = vpack.c.bf16 %v2277, %v2277
      %v2292 = vpack.c.bf16 %v2279, %v2278
      %v2293 = vpack.c.bf16 %v2281, %v2280
      %v2294 = vpack.c.bf16 %v2282, %v2282
      %2307 = vrot.lane.b32.xlu0 %v2283, 126
      %v2308 = vpop.permute.xlu0 %2307
      %2309 = vrot.lane.b32.xlu0 %v2284, 126
      %v2310 = vpop.permute.xlu0 %2309
      %2311 = vrot.lane.b32.xlu0 %v2285, 126
      %v2312 = vpop.permute.xlu0 %2311
      %2313 = vrot.lane.b32.xlu0 %v2286, 126
      %v2314 = vpop.permute.xlu0 %2313
      %2315 = vrot.lane.b32.xlu0 %v2287, 126
      %v2316 = vpop.permute.xlu0 %2315
      %2317 = vrot.lane.b32.xlu0 %v2288, 126
      %v2318 = vpop.permute.xlu0 %2317
      %2319 = vrot.lane.b32.xlu0 %v2289, 126
      %v2320 = vpop.permute.xlu0 %2319
      %2321 = vrot.lane.b32.xlu0 %v2290, 126
      %v2322 = vpop.permute.xlu0 %2321
      %2323 = vrot.lane.b32.xlu0 %v2291, 126
      %v2324 = vpop.permute.xlu0 %2323
      %2325 = vrot.lane.b32.xlu0 %v2292, 126
      %v2326 = vpop.permute.xlu0 %2325
      %2327 = vrot.lane.b32.xlu0 %v2293, 126
      %v2328 = vpop.permute.xlu0 %2327
      %2329 = vrot.lane.b32.xlu0 %v2294, 126
      %v2330 = vpop.permute.xlu0 %2329
      %v2331 = vrot.slane %v2308, 4
      %v2332 = vrot.slane %v2310, 4
      %v2333 = vrot.slane %v2312, 4
      %v2334 = vrot.slane %v2314, 4
      %v2335 = vrot.slane %v2316, 4
      %v2336 = vrot.slane %v2318, 4
      %v2337 = vrot.slane %v2320, 4
      %v2338 = vrot.slane %v2322, 4
      %v2339 = vrot.slane %v2324, 4
      %v2340 = vrot.slane %v2326, 4
      %v2341 = vrot.slane %v2328, 4
      %v2342 = vrot.slane %v2330, 4
      %v2343 = vsel %vm453, %v2331, %v2332
      %v2344 = vsel %vm581, %v2308, %v2343
      %v2345 = vsel %vm453, %v2332, %v2333
      %v2346 = vsel %vm581, %v2310, %v2345
      %v2347 = vsel %vm453, %v2334, %v2335
      %v2348 = vsel %vm581, %v2314, %v2347
      %v2349 = vsel %vm453, %v2335, %v2336
      %v2350 = vsel %vm581, %v2316, %v2349
      %v2351 = vsel %vm453, %v2337, %v2338
      %v2352 = vsel %vm581, %v2320, %v2351
      %v2353 = vsel %vm453, %v2338, %v2339
      %v2354 = vsel %vm581, %v2322, %v2353
      %v2355 = vsel %vm453, %v2340, %v2341
      %v2356 = vsel %vm581, %v2326, %v2355
      %v2357 = vsel %vm453, %v2341, %v2342
      %v2358 = vsel %vm581, %v2328, %v2357
      %2367 = vst [vmem:[#allocation4 + $0x80] sm:$0xff] %v2344
      %2368 = vst [vmem:[#allocation4 + $0x88] sm:$0xff] %v2346
      %2369 = vst [vmem:[#allocation4 + $0x90] sm:$0xff] %v2348
      %2370 = vst [vmem:[#allocation4 + $0x98] sm:$0xff] %v2350
      %2371 = vst [vmem:[#allocation4 + $0xa0] sm:$0xff] %v2352
      %2372 = vst [vmem:[#allocation4 + $0xa8] sm:$0xff] %v2354
      %2373 = vst [vmem:[#allocation4 + $0xb0] sm:$0xff] %v2356
      %2374 = vst [vmem:[#allocation4 + $0xb8] sm:$0xff] %v2358
      %v2375 = vld [vmem:[#allocation3] sm:$0xff]
      %v2376 = vld [vmem:[#allocation3 + $0x8] sm:$0xff]
      %v2377 = vld [vmem:[#allocation3 + $0x10] sm:$0xf]
      %v2378 = vld [vmem:[#allocation3 + $0x14] sm:$0xff]
      %v2379 = vld [vmem:[#allocation3 + $0x1c] sm:$0xff]
      %v2380 = vld [vmem:[#allocation3 + $0x24] sm:$0xf]
      %v2381 = vld [vmem:[#allocation3 + $0x28] sm:$0xff]
      %v2382 = vld [vmem:[#allocation3 + $0x30] sm:$0xff]
      %v2383 = vld [vmem:[#allocation3 + $0x38] sm:$0xf]
      %v2384 = vld [vmem:[#allocation3 + $0x3c] sm:$0xff]
      %v2385 = vld [vmem:[#allocation3 + $0x44] sm:$0xff]
      %v2386 = vld [vmem:[#allocation3 + $0x4c] sm:$0xf]
      %v2387 = vld [vmem:[%s1] sm:$0x22]
      %v2388 = vld [vmem:[%s1 + $0x8] sm:$0x22]
      %v2391 = vunpack.c.l.b16 %v2387
      %v2392 = vunpack.c.h.b16 %v2387
      %v2393 = vunpack.c.l.b16 %v2388
      %v2394 = vunpack.c.h.b16 %v2388
      %v2395 = vpack.c.b16 %v2391, %v2391
      %v2396 = vpack.c.b16 %v2392, %v2392
      %v2397 = vpack.c.b16 %v2393, %v2393
      %v2398 = vpack.c.b16 %v2394, %v2394
      %v2400 = vshrl.u32 %v2395, 16
      %v2401 = vpack.i.b16 %v2400, %v2400
      %v2403 = vperm.slane %v2401, 1
      %v2405 = vshrl.u32 %v2396, 16
      %v2406 = vpack.i.b16 %v2405, %v2405
      %v2408 = vperm.slane %v2406, 1
      %v2410 = vshrl.u32 %v2397, 16
      %v2411 = vpack.i.b16 %v2410, %v2410
      %v2413 = vperm.slane %v2411, 1
      %v2415 = vshrl.u32 %v2398, 16
      %v2416 = vpack.i.b16 %v2415, %v2415
      %v2418 = vperm.slane %v2416, 1
      %v2419 = vunpack.c.l.bf16 %v2375
      %v2420 = vunpack.c.h.bf16 %v2375
      %v2421 = vunpack.c.l.bf16 %v2376
      %v2422 = vunpack.c.h.bf16 %v2376
      %v2423 = vunpack.c.l.bf16 %v2377
      %v2424 = vunpack.c.l.bf16 %v2378
      %v2425 = vunpack.c.h.bf16 %v2378
      %v2426 = vunpack.c.l.bf16 %v2379
      %v2427 = vunpack.c.h.bf16 %v2379
      %v2428 = vunpack.c.l.bf16 %v2380
      %v2429 = vunpack.c.l.bf16 %v2381
      %v2430 = vunpack.c.h.bf16 %v2381
      %v2431 = vunpack.c.l.bf16 %v2382
      %v2432 = vunpack.c.h.bf16 %v2382
      %v2433 = vunpack.c.l.bf16 %v2383
      %v2434 = vunpack.c.l.bf16 %v2384
      %v2435 = vunpack.c.h.bf16 %v2384
      %v2436 = vunpack.c.l.bf16 %v2385
      %v2437 = vunpack.c.h.bf16 %v2385
      %v2438 = vunpack.c.l.bf16 %v2386
      %v2439 = vunpack.c.l.bf16 %v2403
      %v2440 = vunpack.c.l.bf16 %v2408
      %v2441 = vunpack.c.l.bf16 %v2413
      %v2442 = vunpack.c.l.bf16 %v2418
      %2447 = vrot.lane.b32.xlu0 %v2439, 16
      %v2448 = vpop.permute.xlu0 %2447
      %2449 = vrot.lane.b32.xlu0 %v2440, 16
      %v2450 = vpop.permute.xlu0 %2449
      %2451 = vrot.lane.b32.xlu0 %v2441, 16
      %v2452 = vpop.permute.xlu0 %2451
      %2453 = vrot.lane.b32.xlu0 %v2442, 16
      %v2454 = vpop.permute.xlu0 %2453
      %v2455 = vsel %vm661, %v2448, %v2450
      %v2456 = vsel %vm661, %v2450, %v2452
      %v2457 = vsel %vm661, %v2452, %v2454
      %v2463 = vmul.f32 %v2419, %v2448
      %v2464 = vmul.f32 %v2420, %v2455
      %v2465 = vmul.f32 %v2421, %v2456
      %v2466 = vmul.f32 %v2422, %v2457
      %v2467 = vmul.f32 %v2423, %v2454
      %v2468 = vmul.f32 %v2424, %v2448
      %v2469 = vmul.f32 %v2425, %v2455
      %v2470 = vmul.f32 %v2426, %v2456
      %v2471 = vmul.f32 %v2427, %v2457
      %v2472 = vmul.f32 %v2428, %v2454
      %v2473 = vmul.f32 %v2429, %v2448
      %v2474 = vmul.f32 %v2430, %v2455
      %v2475 = vmul.f32 %v2431, %v2456
      %v2476 = vmul.f32 %v2432, %v2457
      %v2477 = vmul.f32 %v2433, %v2454
      %v2478 = vmul.f32 %v2434, %v2448
      %v2479 = vmul.f32 %v2435, %v2455
      %v2480 = vmul.f32 %v2436, %v2456
      %v2481 = vmul.f32 %v2437, %v2457
      %v2482 = vmul.f32 %v2438, %v2454
      %v2483 = vpack.c.bf16 %v2464, %v2463
      %v2484 = vpack.c.bf16 %v2466, %v2465
      %v2485 = vpack.c.bf16 %v2467, %v2467
      %v2486 = vpack.c.bf16 %v2469, %v2468
      %v2487 = vpack.c.bf16 %v2471, %v2470
      %v2488 = vpack.c.bf16 %v2472, %v2472
      %v2489 = vpack.c.bf16 %v2474, %v2473
      %v2490 = vpack.c.bf16 %v2476, %v2475
      %v2491 = vpack.c.bf16 %v2477, %v2477
      %v2492 = vpack.c.bf16 %v2479, %v2478
      %v2493 = vpack.c.bf16 %v2481, %v2480
      %v2494 = vpack.c.bf16 %v2482, %v2482
      %2507 = vrot.lane.b32.xlu0 %v2483, 112
      %v2508 = vpop.permute.xlu0 %2507
      %2509 = vrot.lane.b32.xlu0 %v2484, 112
      %v2510 = vpop.permute.xlu0 %2509
      %2511 = vrot.lane.b32.xlu0 %v2485, 112
      %v2512 = vpop.permute.xlu0 %2511
      %2513 = vrot.lane.b32.xlu0 %v2486, 112
      %v2514 = vpop.permute.xlu0 %2513
      %2515 = vrot.lane.b32.xlu0 %v2487, 112
      %v2516 = vpop.permute.xlu0 %2515
      %2517 = vrot.lane.b32.xlu0 %v2488, 112
      %v2518 = vpop.permute.xlu0 %2517
      %2519 = vrot.lane.b32.xlu0 %v2489, 112
      %v2520 = vpop.permute.xlu0 %2519
      %2521 = vrot.lane.b32.xlu0 %v2490, 112
      %v2522 = vpop.permute.xlu0 %2521
      %2523 = vrot.lane.b32.xlu0 %v2491, 112
      %v2524 = vpop.permute.xlu0 %2523
      %2525 = vrot.lane.b32.xlu0 %v2492, 112
      %v2526 = vpop.permute.xlu0 %2525
      %2527 = vrot.lane.b32.xlu0 %v2493, 112
      %v2528 = vpop.permute.xlu0 %2527
      %2529 = vrot.lane.b32.xlu0 %v2494, 112
      %v2530 = vpop.permute.xlu0 %2529
      %v2531 = vrot.slane %v2508, 4
      %v2532 = vrot.slane %v2510, 4
      %v2533 = vrot.slane %v2512, 4
      %v2534 = vrot.slane %v2514, 4
      %v2535 = vrot.slane %v2516, 4
      %v2536 = vrot.slane %v2518, 4
      %v2537 = vrot.slane %v2520, 4
      %v2538 = vrot.slane %v2522, 4
      %v2539 = vrot.slane %v2524, 4
      %v2540 = vrot.slane %v2526, 4
      %v2541 = vrot.slane %v2528, 4
      %v2542 = vrot.slane %v2530, 4
      %v2543 = vsel %vm453, %v2531, %v2532
      %v2544 = vsel %vm711, %v2508, %v2543
      %v2545 = vsel %vm453, %v2532, %v2533
      %v2546 = vsel %vm711, %v2510, %v2545
      %v2547 = vsel %vm453, %v2534, %v2535
      %v2548 = vsel %vm711, %v2514, %v2547
      %v2549 = vsel %vm453, %v2535, %v2536
      %v2550 = vsel %vm711, %v2516, %v2549
      %v2551 = vsel %vm453, %v2537, %v2538
      %v2552 = vsel %vm711, %v2520, %v2551
      %v2553 = vsel %vm453, %v2538, %v2539
      %v2554 = vsel %vm711, %v2522, %v2553
      %v2555 = vsel %vm453, %v2540, %v2541
      %v2556 = vsel %vm711, %v2526, %v2555
      %v2557 = vsel %vm453, %v2541, %v2542
      %v2558 = vsel %vm711, %v2528, %v2557
      %2567 = vst [vmem:[#allocation4 + $0xc0] sm:$0xff] %v2544
      %2568 = vst [vmem:[#allocation4 + $0xc8] sm:$0xff] %v2546
      %2569 = vst [vmem:[#allocation4 + $0xd0] sm:$0xff] %v2548
      %2570 = vst [vmem:[#allocation4 + $0xd8] sm:$0xff] %v2550
      %2571 = vst [vmem:[#allocation4 + $0xe0] sm:$0xff] %v2552
      %2572 = vst [vmem:[#allocation4 + $0xe8] sm:$0xff] %v2554
      %2573 = vst [vmem:[#allocation4 + $0xf0] sm:$0xff] %v2556
      %2574 = vst [vmem:[#allocation4 + $0xf8] sm:$0xff] %v2558
      %v2575 = vld [vmem:[#allocation3] sm:$0xff]
      %v2576 = vld [vmem:[#allocation3 + $0x8] sm:$0xff]
      %v2577 = vld [vmem:[#allocation3 + $0x10] sm:$0xf]
      %v2578 = vld [vmem:[#allocation3 + $0x14] sm:$0xff]
      %v2579 = vld [vmem:[#allocation3 + $0x1c] sm:$0xff]
      %v2580 = vld [vmem:[#allocation3 + $0x24] sm:$0xf]
      %v2581 = vld [vmem:[#allocation3 + $0x28] sm:$0xff]
      %v2582 = vld [vmem:[#allocation3 + $0x30] sm:$0xff]
      %v2583 = vld [vmem:[#allocation3 + $0x38] sm:$0xf]
      %v2584 = vld [vmem:[#allocation3 + $0x3c] sm:$0xff]
      %v2585 = vld [vmem:[#allocation3 + $0x44] sm:$0xff]
      %v2586 = vld [vmem:[#allocation3 + $0x4c] sm:$0xf]
      %v2587 = vld [vmem:[%s1] sm:$0x44]
      %v2588 = vld [vmem:[%s1 + $0x8] sm:$0x44]
      %v2591 = vunpack.c.l.b16 %v2587
      %v2592 = vunpack.c.h.b16 %v2587
      %v2593 = vunpack.c.l.b16 %v2588
      %v2594 = vunpack.c.h.b16 %v2588
      %v2595 = vpack.c.b16 %v2591, %v2591
      %v2596 = vpack.c.b16 %v2592, %v2592
      %v2597 = vpack.c.b16 %v2593, %v2593
      %v2598 = vpack.c.b16 %v2594, %v2594
      %v2600 = vpack.i.b16 %v2595, %v2595
      %v2602 = vperm.slane %v2600, 2
      %v2604 = vpack.i.b16 %v2596, %v2596
      %v2606 = vperm.slane %v2604, 2
      %v2608 = vpack.i.b16 %v2597, %v2597
      %v2610 = vperm.slane %v2608, 2
      %v2612 = vpack.i.b16 %v2598, %v2598
      %v2614 = vperm.slane %v2612, 2
      %v2615 = vunpack.c.l.bf16 %v2575
      %v2616 = vunpack.c.h.bf16 %v2575
      %v2617 = vunpack.c.l.bf16 %v2576
      %v2618 = vunpack.c.h.bf16 %v2576
      %v2619 = vunpack.c.l.bf16 %v2577
      %v2620 = vunpack.c.l.bf16 %v2578
      %v2621 = vunpack.c.h.bf16 %v2578
      %v2622 = vunpack.c.l.bf16 %v2579
      %v2623 = vunpack.c.h.bf16 %v2579
      %v2624 = vunpack.c.l.bf16 %v2580
      %v2625 = vunpack.c.l.bf16 %v2581
      %v2626 = vunpack.c.h.bf16 %v2581
      %v2627 = vunpack.c.l.bf16 %v2582
      %v2628 = vunpack.c.h.bf16 %v2582
      %v2629 = vunpack.c.l.bf16 %v2583
      %v2630 = vunpack.c.l.bf16 %v2584
      %v2631 = vunpack.c.h.bf16 %v2584
      %v2632 = vunpack.c.l.bf16 %v2585
      %v2633 = vunpack.c.h.bf16 %v2585
      %v2634 = vunpack.c.l.bf16 %v2586
      %v2635 = vunpack.c.l.bf16 %v2602
      %v2636 = vunpack.c.l.bf16 %v2606
      %v2637 = vunpack.c.l.bf16 %v2610
      %v2638 = vunpack.c.l.bf16 %v2614
      %2643 = vrot.lane.b32.xlu0 %v2635, 17
      %v2644 = vpop.permute.xlu0 %2643
      %2645 = vrot.lane.b32.xlu0 %v2636, 17
      %v2646 = vpop.permute.xlu0 %2645
      %2647 = vrot.lane.b32.xlu0 %v2637, 17
      %v2648 = vpop.permute.xlu0 %2647
      %2649 = vrot.lane.b32.xlu0 %v2638, 17
      %v2650 = vpop.permute.xlu0 %2649
      %v2651 = vsel %vm787, %v2644, %v2646
      %v2652 = vsel %vm787, %v2646, %v2648
      %v2653 = vsel %vm787, %v2648, %v2650
      %v2659 = vmul.f32 %v2615, %v2644
      %v2660 = vmul.f32 %v2616, %v2651
      %v2661 = vmul.f32 %v2617, %v2652
      %v2662 = vmul.f32 %v2618, %v2653
      %v2663 = vmul.f32 %v2619, %v2650
      %v2664 = vmul.f32 %v2620, %v2644
      %v2665 = vmul.f32 %v2621, %v2651
      %v2666 = vmul.f32 %v2622, %v2652
      %v2667 = vmul.f32 %v2623, %v2653
      %v2668 = vmul.f32 %v2624, %v2650
      %v2669 = vmul.f32 %v2625, %v2644
      %v2670 = vmul.f32 %v2626, %v2651
      %v2671 = vmul.f32 %v2627, %v2652
      %v2672 = vmul.f32 %v2628, %v2653
      %v2673 = vmul.f32 %v2629, %v2650
      %v2674 = vmul.f32 %v2630, %v2644
      %v2675 = vmul.f32 %v2631, %v2651
      %v2676 = vmul.f32 %v2632, %v2652
      %v2677 = vmul.f32 %v2633, %v2653
      %v2678 = vmul.f32 %v2634, %v2650
      %v2679 = vpack.c.bf16 %v2660, %v2659
      %v2680 = vpack.c.bf16 %v2662, %v2661
      %v2681 = vpack.c.bf16 %v2663, %v2663
      %v2682 = vpack.c.bf16 %v2665, %v2664
      %v2683 = vpack.c.bf16 %v2667, %v2666
      %v2684 = vpack.c.bf16 %v2668, %v2668
      %v2685 = vpack.c.bf16 %v2670, %v2669
      %v2686 = vpack.c.bf16 %v2672, %v2671
      %v2687 = vpack.c.bf16 %v2673, %v2673
      %v2688 = vpack.c.bf16 %v2675, %v2674
      %v2689 = vpack.c.bf16 %v2677, %v2676
      %v2690 = vpack.c.bf16 %v2678, %v2678
      %2703 = vrot.lane.b32.xlu0 %v2679, 111
      %v2704 = vpop.permute.xlu0 %2703
      %2705 = vrot.lane.b32.xlu0 %v2680, 111
      %v2706 = vpop.permute.xlu0 %2705
      %2707 = vrot.lane.b32.xlu0 %v2681, 111
      %v2708 = vpop.permute.xlu0 %2707
      %2709 = vrot.lane.b32.xlu0 %v2682, 111
      %v2710 = vpop.permute.xlu0 %2709
      %2711 = vrot.lane.b32.xlu0 %v2683, 111
      %v2712 = vpop.permute.xlu0 %2711
      %2713 = vrot.lane.b32.xlu0 %v2684, 111
      %v2714 = vpop.permute.xlu0 %2713
      %2715 = vrot.lane.b32.xlu0 %v2685, 111
      %v2716 = vpop.permute.xlu0 %2715
      %2717 = vrot.lane.b32.xlu0 %v2686, 111
      %v2718 = vpop.permute.xlu0 %2717
      %2719 = vrot.lane.b32.xlu0 %v2687, 111
      %v2720 = vpop.permute.xlu0 %2719
      %2721 = vrot.lane.b32.xlu0 %v2688, 111
      %v2722 = vpop.permute.xlu0 %2721
      %2723 = vrot.lane.b32.xlu0 %v2689, 111
      %v2724 = vpop.permute.xlu0 %2723
      %2725 = vrot.lane.b32.xlu0 %v2690, 111
      %v2726 = vpop.permute.xlu0 %2725
      %v2727 = vrot.slane %v2704, 4
      %v2728 = vrot.slane %v2706, 4
      %v2729 = vrot.slane %v2708, 4
      %v2730 = vrot.slane %v2710, 4
      %v2731 = vrot.slane %v2712, 4
      %v2732 = vrot.slane %v2714, 4
      %v2733 = vrot.slane %v2716, 4
      %v2734 = vrot.slane %v2718, 4
      %v2735 = vrot.slane %v2720, 4
      %v2736 = vrot.slane %v2722, 4
      %v2737 = vrot.slane %v2724, 4
      %v2738 = vrot.slane %v2726, 4
      %v2739 = vsel %vm453, %v2727, %v2728
      %v2740 = vsel %vm837, %v2704, %v2739
      %v2741 = vsel %vm453, %v2728, %v2729
      %v2742 = vsel %vm837, %v2706, %v2741
      %v2743 = vsel %vm453, %v2730, %v2731
      %v2744 = vsel %vm837, %v2710, %v2743
      %v2745 = vsel %vm453, %v2731, %v2732
      %v2746 = vsel %vm837, %v2712, %v2745
      %v2747 = vsel %vm453, %v2733, %v2734
      %v2748 = vsel %vm837, %v2716, %v2747
      %v2749 = vsel %vm453, %v2734, %v2735
      %v2750 = vsel %vm837, %v2718, %v2749
      %v2751 = vsel %vm453, %v2736, %v2737
      %v2752 = vsel %vm837, %v2722, %v2751
      %v2753 = vsel %vm453, %v2737, %v2738
      %v2754 = vsel %vm837, %v2724, %v2753
      %2763 = vst [vmem:[#allocation4 + $0x100] sm:$0xff] %v2740
      %2764 = vst [vmem:[#allocation4 + $0x108] sm:$0xff] %v2742
      %2765 = vst [vmem:[#allocation4 + $0x110] sm:$0xff] %v2744
      %2766 = vst [vmem:[#allocation4 + $0x118] sm:$0xff] %v2746
      %2767 = vst [vmem:[#allocation4 + $0x120] sm:$0xff] %v2748
      %2768 = vst [vmem:[#allocation4 + $0x128] sm:$0xff] %v2750
      %2769 = vst [vmem:[#allocation4 + $0x130] sm:$0xff] %v2752
      %2770 = vst [vmem:[#allocation4 + $0x138] sm:$0xff] %v2754
      %v2771 = vld [vmem:[#allocation3] sm:$0xff]
      %v2772 = vld [vmem:[#allocation3 + $0x8] sm:$0xff]
      %v2773 = vld [vmem:[#allocation3 + $0x10] sm:$0xf]
      %v2774 = vld [vmem:[#allocation3 + $0x14] sm:$0xff]
      %v2775 = vld [vmem:[#allocation3 + $0x1c] sm:$0xff]
      %v2776 = vld [vmem:[#allocation3 + $0x24] sm:$0xf]
      %v2777 = vld [vmem:[#allocation3 + $0x28] sm:$0xff]
      %v2778 = vld [vmem:[#allocation3 + $0x30] sm:$0xff]
      %v2779 = vld [vmem:[#allocation3 + $0x38] sm:$0xf]
      %v2780 = vld [vmem:[#allocation3 + $0x3c] sm:$0xff]
      %v2781 = vld [vmem:[#allocation3 + $0x44] sm:$0xff]
      %v2782 = vld [vmem:[#allocation3 + $0x4c] sm:$0xf]
      %v2783 = vld [vmem:[%s1] sm:$0x44]
      %v2784 = vld [vmem:[%s1 + $0x8] sm:$0x44]
      %v2787 = vunpack.c.l.b16 %v2783
      %v2788 = vunpack.c.h.b16 %v2783
      %v2789 = vunpack.c.l.b16 %v2784
      %v2790 = vunpack.c.h.b16 %v2784
      %v2791 = vpack.c.b16 %v2787, %v2787
      %v2792 = vpack.c.b16 %v2788, %v2788
      %v2793 = vpack.c.b16 %v2789, %v2789
      %v2794 = vpack.c.b16 %v2790, %v2790
      %v2796 = vshrl.u32 %v2791, 16
      %v2797 = vpack.i.b16 %v2796, %v2796
      %v2799 = vperm.slane %v2797, 2
      %v2801 = vshrl.u32 %v2792, 16
      %v2802 = vpack.i.b16 %v2801, %v2801
      %v2804 = vperm.slane %v2802, 2
      %v2806 = vshrl.u32 %v2793, 16
      %v2807 = vpack.i.b16 %v2806, %v2806
      %v2809 = vperm.slane %v2807, 2
      %v2811 = vshrl.u32 %v2794, 16
      %v2812 = vpack.i.b16 %v2811, %v2811
      %v2814 = vperm.slane %v2812, 2
      %v2815 = vunpack.c.l.bf16 %v2771
      %v2816 = vunpack.c.h.bf16 %v2771
      %v2817 = vunpack.c.l.bf16 %v2772
      %v2818 = vunpack.c.h.bf16 %v2772
      %v2819 = vunpack.c.l.bf16 %v2773
      %v2820 = vunpack.c.l.bf16 %v2774
      %v2821 = vunpack.c.h.bf16 %v2774
      %v2822 = vunpack.c.l.bf16 %v2775
      %v2823 = vunpack.c.h.bf16 %v2775
      %v2824 = vunpack.c.l.bf16 %v2776
      %v2825 = vunpack.c.l.bf16 %v2777
      %v2826 = vunpack.c.h.bf16 %v2777
      %v2827 = vunpack.c.l.bf16 %v2778
      %v2828 = vunpack.c.h.bf16 %v2778
      %v2829 = vunpack.c.l.bf16 %v2779
      %v2830 = vunpack.c.l.bf16 %v2780
      %v2831 = vunpack.c.h.bf16 %v2780
      %v2832 = vunpack.c.l.bf16 %v2781
      %v2833 = vunpack.c.h.bf16 %v2781
      %v2834 = vunpack.c.l.bf16 %v2782
      %v2835 = vunpack.c.l.bf16 %v2799
      %v2836 = vunpack.c.l.bf16 %v2804
      %v2837 = vunpack.c.l.bf16 %v2809
      %v2838 = vunpack.c.l.bf16 %v2814
      %2843 = vrot.lane.b32.xlu0 %v2835, 18
      %v2844 = vpop.permute.xlu0 %2843
      %2845 = vrot.lane.b32.xlu0 %v2836, 18
      %v2846 = vpop.permute.xlu0 %2845
      %2847 = vrot.lane.b32.xlu0 %v2837, 18
      %v2848 = vpop.permute.xlu0 %2847
      %2849 = vrot.lane.b32.xlu0 %v2838, 18
      %v2850 = vpop.permute.xlu0 %2849
      %v2851 = vsel %vm917, %v2844, %v2846
      %v2852 = vsel %vm917, %v2846, %v2848
      %v2853 = vsel %vm917, %v2848, %v2850
      %v2859 = vmul.f32 %v2815, %v2844
      %v2860 = vmul.f32 %v2816, %v2851
      %v2861 = vmul.f32 %v2817, %v2852
      %v2862 = vmul.f32 %v2818, %v2853
      %v2863 = vmul.f32 %v2819, %v2850
      %v2864 = vmul.f32 %v2820, %v2844
      %v2865 = vmul.f32 %v2821, %v2851
      %v2866 = vmul.f32 %v2822, %v2852
      %v2867 = vmul.f32 %v2823, %v2853
      %v2868 = vmul.f32 %v2824, %v2850
      %v2869 = vmul.f32 %v2825, %v2844
      %v2870 = vmul.f32 %v2826, %v2851
      %v2871 = vmul.f32 %v2827, %v2852
      %v2872 = vmul.f32 %v2828, %v2853
      %v2873 = vmul.f32 %v2829, %v2850
      %v2874 = vmul.f32 %v2830, %v2844
      %v2875 = vmul.f32 %v2831, %v2851
      %v2876 = vmul.f32 %v2832, %v2852
      %v2877 = vmul.f32 %v2833, %v2853
      %v2878 = vmul.f32 %v2834, %v2850
      %v2879 = vpack.c.bf16 %v2860, %v2859
      %v2880 = vpack.c.bf16 %v2862, %v2861
      %v2881 = vpack.c.bf16 %v2863, %v2863
      %v2882 = vpack.c.bf16 %v2865, %v2864
      %v2883 = vpack.c.bf16 %v2867, %v2866
      %v2884 = vpack.c.bf16 %v2868, %v2868
      %v2885 = vpack.c.bf16 %v2870, %v2869
      %v2886 = vpack.c.bf16 %v2872, %v2871
      %v2887 = vpack.c.bf16 %v2873, %v2873
      %v2888 = vpack.c.bf16 %v2875, %v2874
      %v2889 = vpack.c.bf16 %v2877, %v2876
      %v2890 = vpack.c.bf16 %v2878, %v2878
      %2903 = vrot.lane.b32.xlu0 %v2879, 110
      %v2904 = vpop.permute.xlu0 %2903
      %2905 = vrot.lane.b32.xlu0 %v2880, 110
      %v2906 = vpop.permute.xlu0 %2905
      %2907 = vrot.lane.b32.xlu0 %v2881, 110
      %v2908 = vpop.permute.xlu0 %2907
      %2909 = vrot.lane.b32.xlu0 %v2882, 110
      %v2910 = vpop.permute.xlu0 %2909
      %2911 = vrot.lane.b32.xlu0 %v2883, 110
      %v2912 = vpop.permute.xlu0 %2911
      %2913 = vrot.lane.b32.xlu0 %v2884, 110
      %v2914 = vpop.permute.xlu0 %2913
      %2915 = vrot.lane.b32.xlu0 %v2885, 110
      %v2916 = vpop.permute.xlu0 %2915
      %2917 = vrot.lane.b32.xlu0 %v2886, 110
      %v2918 = vpop.permute.xlu0 %2917
      %2919 = vrot.lane.b32.xlu0 %v2887, 110
      %v2920 = vpop.permute.xlu0 %2919
      %2921 = vrot.lane.b32.xlu0 %v2888, 110
      %v2922 = vpop.permute.xlu0 %2921
      %2923 = vrot.lane.b32.xlu0 %v2889, 110
      %v2924 = vpop.permute.xlu0 %2923
      %2925 = vrot.lane.b32.xlu0 %v2890, 110
      %v2926 = vpop.permute.xlu0 %2925
      %v2927 = vrot.slane %v2904, 4
      %v2928 = vrot.slane %v2906, 4
      %v2929 = vrot.slane %v2908, 4
      %v2930 = vrot.slane %v2910, 4
      %v2931 = vrot.slane %v2912, 4
      %v2932 = vrot.slane %v2914, 4
      %v2933 = vrot.slane %v2916, 4
      %v2934 = vrot.slane %v2918, 4
      %v2935 = vrot.slane %v2920, 4
      %v2936 = vrot.slane %v2922, 4
      %v2937 = vrot.slane %v2924, 4
      %v2938 = vrot.slane %v2926, 4
      %v2939 = vsel %vm453, %v2927, %v2928
      %v2940 = vsel %vm967, %v2904, %v2939
      %v2941 = vsel %vm453, %v2928, %v2929
      %v2942 = vsel %vm967, %v2906, %v2941
      %v2943 = vsel %vm453, %v2930, %v2931
      %v2944 = vsel %vm967, %v2910, %v2943
      %v2945 = vsel %vm453, %v2931, %v2932
      %v2946 = vsel %vm967, %v2912, %v2945
      %v2947 = vsel %vm453, %v2933, %v2934
      %v2948 = vsel %vm967, %v2916, %v2947
      %v2949 = vsel %vm453, %v2934, %v2935
      %v2950 = vsel %vm967, %v2918, %v2949
      %v2951 = vsel %vm453, %v2936, %v2937
      %v2952 = vsel %vm967, %v2922, %v2951
      %v2953 = vsel %vm453, %v2937, %v2938
      %v2954 = vsel %vm967, %v2924, %v2953
      %2963 = vst [vmem:[#allocation4 + $0x140] sm:$0xff] %v2940
      %2964 = vst [vmem:[#allocation4 + $0x148] sm:$0xff] %v2942
      %2965 = vst [vmem:[#allocation4 + $0x150] sm:$0xff] %v2944
      %2966 = vst [vmem:[#allocation4 + $0x158] sm:$0xff] %v2946
      %2967 = vst [vmem:[#allocation4 + $0x160] sm:$0xff] %v2948
      %2968 = vst [vmem:[#allocation4 + $0x168] sm:$0xff] %v2950
      %2969 = vst [vmem:[#allocation4 + $0x170] sm:$0xff] %v2952
      %2970 = vst [vmem:[#allocation4 + $0x178] sm:$0xff] %v2954
      %v2971 = vld [vmem:[#allocation3] sm:$0xff]
      %v2972 = vld [vmem:[#allocation3 + $0x8] sm:$0xff]
      %v2973 = vld [vmem:[#allocation3 + $0x10] sm:$0xf]
      %v2974 = vld [vmem:[#allocation3 + $0x14] sm:$0xff]
      %v2975 = vld [vmem:[#allocation3 + $0x1c] sm:$0xff]
      %v2976 = vld [vmem:[#allocation3 + $0x24] sm:$0xf]
      %v2977 = vld [vmem:[#allocation3 + $0x28] sm:$0xff]
      %v2978 = vld [vmem:[#allocation3 + $0x30] sm:$0xff]
      %v2979 = vld [vmem:[#allocation3 + $0x38] sm:$0xf]
      %v2980 = vld [vmem:[#allocation3 + $0x3c] sm:$0xff]
      %v2981 = vld [vmem:[#allocation3 + $0x44] sm:$0xff]
      %v2982 = vld [vmem:[#allocation3 + $0x4c] sm:$0xf]
      %v2983 = vld [vmem:[%s1] sm:$0x88]
      %v2984 = vld [vmem:[%s1 + $0x8] sm:$0x88]
      %v2987 = vunpack.c.l.b16 %v2983
      %v2988 = vunpack.c.h.b16 %v2983
      %v2989 = vunpack.c.l.b16 %v2984
      %v2990 = vunpack.c.h.b16 %v2984
      %v2991 = vpack.c.b16 %v2987, %v2987
      %v2992 = vpack.c.b16 %v2988, %v2988
      %v2993 = vpack.c.b16 %v2989, %v2989
      %v2994 = vpack.c.b16 %v2990, %v2990
      %v2996 = vpack.i.b16 %v2991, %v2991
      %v2998 = vperm.slane %v2996, 3
      %v3000 = vpack.i.b16 %v2992, %v2992
      %v3002 = vperm.slane %v3000, 3
      %v3004 = vpack.i.b16 %v2993, %v2993
      %v3006 = vperm.slane %v3004, 3
      %v3008 = vpack.i.b16 %v2994, %v2994
      %v3010 = vperm.slane %v3008, 3
      %v3011 = vunpack.c.l.bf16 %v2971
      %v3012 = vunpack.c.h.bf16 %v2971
      %v3013 = vunpack.c.l.bf16 %v2972
      %v3014 = vunpack.c.h.bf16 %v2972
      %v3015 = vunpack.c.l.bf16 %v2973
      %v3016 = vunpack.c.l.bf16 %v2974
      %v3017 = vunpack.c.h.bf16 %v2974
      %v3018 = vunpack.c.l.bf16 %v2975
      %v3019 = vunpack.c.h.bf16 %v2975
      %v3020 = vunpack.c.l.bf16 %v2976
      %v3021 = vunpack.c.l.bf16 %v2977
      %v3022 = vunpack.c.h.bf16 %v2977
      %v3023 = vunpack.c.l.bf16 %v2978
      %v3024 = vunpack.c.h.bf16 %v2978
      %v3025 = vunpack.c.l.bf16 %v2979
      %v3026 = vunpack.c.l.bf16 %v2980
      %v3027 = vunpack.c.h.bf16 %v2980
      %v3028 = vunpack.c.l.bf16 %v2981
      %v3029 = vunpack.c.h.bf16 %v2981
      %v3030 = vunpack.c.l.bf16 %v2982
      %v3031 = vunpack.c.l.bf16 %v2998
      %v3032 = vunpack.c.l.bf16 %v3002
      %v3033 = vunpack.c.l.bf16 %v3006
      %v3034 = vunpack.c.l.bf16 %v3010
      %3039 = vrot.lane.b32.xlu0 %v3031, 32
      %v3040 = vpop.permute.xlu0 %3039
      %3041 = vrot.lane.b32.xlu0 %v3032, 32
      %v3042 = vpop.permute.xlu0 %3041
      %3043 = vrot.lane.b32.xlu0 %v3033, 32
      %v3044 = vpop.permute.xlu0 %3043
      %3045 = vrot.lane.b32.xlu0 %v3034, 32
      %v3046 = vpop.permute.xlu0 %3045
      %v3047 = vsel %vm1043, %v3040, %v3042
      %v3048 = vsel %vm1043, %v3042, %v3044
      %v3049 = vsel %vm1043, %v3044, %v3046
      %v3055 = vmul.f32 %v3011, %v3040
      %v3056 = vmul.f32 %v3012, %v3047
      %v3057 = vmul.f32 %v3013, %v3048
      %v3058 = vmul.f32 %v3014, %v3049
      %v3059 = vmul.f32 %v3015, %v3046
      %v3060 = vmul.f32 %v3016, %v3040
      %v3061 = vmul.f32 %v3017, %v3047
      %v3062 = vmul.f32 %v3018, %v3048
      %v3063 = vmul.f32 %v3019, %v3049
      %v3064 = vmul.f32 %v3020, %v3046
      %v3065 = vmul.f32 %v3021, %v3040
      %v3066 = vmul.f32 %v3022, %v3047
      %v3067 = vmul.f32 %v3023, %v3048
      %v3068 = vmul.f32 %v3024, %v3049
      %v3069 = vmul.f32 %v3025, %v3046
      %v3070 = vmul.f32 %v3026, %v3040
      %v3071 = vmul.f32 %v3027, %v3047
      %v3072 = vmul.f32 %v3028, %v3048
      %v3073 = vmul.f32 %v3029, %v3049
      %v3074 = vmul.f32 %v3030, %v3046
      %v3075 = vpack.c.bf16 %v3056, %v3055
      %v3076 = vpack.c.bf16 %v3058, %v3057
      %v3077 = vpack.c.bf16 %v3059, %v3059
      %v3078 = vpack.c.bf16 %v3061, %v3060
      %v3079 = vpack.c.bf16 %v3063, %v3062
      %v3080 = vpack.c.bf16 %v3064, %v3064
      %v3081 = vpack.c.bf16 %v3066, %v3065
      %v3082 = vpack.c.bf16 %v3068, %v3067
      %v3083 = vpack.c.bf16 %v3069, %v3069
      %v3084 = vpack.c.bf16 %v3071, %v3070
      %v3085 = vpack.c.bf16 %v3073, %v3072
      %v3086 = vpack.c.bf16 %v3074, %v3074
      %3099 = vrot.lane.b32.xlu0 %v3075, 96
      %v3100 = vpop.permute.xlu0 %3099
      %3101 = vrot.lane.b32.xlu0 %v3076, 96
      %v3102 = vpop.permute.xlu0 %3101
      %3103 = vrot.lane.b32.xlu0 %v3077, 96
      %v3104 = vpop.permute.xlu0 %3103
      %3105 = vrot.lane.b32.xlu0 %v3078, 96
      %v3106 = vpop.permute.xlu0 %3105
      %3107 = vrot.lane.b32.xlu0 %v3079, 96
      %v3108 = vpop.permute.xlu0 %3107
      %3109 = vrot.lane.b32.xlu0 %v3080, 96
      %v3110 = vpop.permute.xlu0 %3109
      %3111 = vrot.lane.b32.xlu0 %v3081, 96
      %v3112 = vpop.permute.xlu0 %3111
      %3113 = vrot.lane.b32.xlu0 %v3082, 96
      %v3114 = vpop.permute.xlu0 %3113
      %3115 = vrot.lane.b32.xlu0 %v3083, 96
      %v3116 = vpop.permute.xlu0 %3115
      %3117 = vrot.lane.b32.xlu0 %v3084, 96
      %v3118 = vpop.permute.xlu0 %3117
      %3119 = vrot.lane.b32.xlu0 %v3085, 96
      %v3120 = vpop.permute.xlu0 %3119
      %3121 = vrot.lane.b32.xlu0 %v3086, 96
      %v3122 = vpop.permute.xlu0 %3121
      %v3123 = vrot.slane %v3100, 4
      %v3124 = vrot.slane %v3102, 4
      %v3125 = vrot.slane %v3104, 4
      %v3126 = vrot.slane %v3106, 4
      %v3127 = vrot.slane %v3108, 4
      %v3128 = vrot.slane %v3110, 4
      %v3129 = vrot.slane %v3112, 4
      %v3130 = vrot.slane %v3114, 4
      %v3131 = vrot.slane %v3116, 4
      %v3132 = vrot.slane %v3118, 4
      %v3133 = vrot.slane %v3120, 4
      %v3134 = vrot.slane %v3122, 4
      %v3135 = vsel %vm453, %v3123, %v3124
      %v3136 = vsel %vm1093, %v3100, %v3135
      %v3137 = vsel %vm453, %v3124, %v3125
      %v3138 = vsel %vm1093, %v3102, %v3137
      %v3139 = vsel %vm453, %v3126, %v3127
      %v3140 = vsel %vm1093, %v3106, %v3139
      %v3141 = vsel %vm453, %v3127, %v3128
      %v3142 = vsel %vm1093, %v3108, %v3141
      %v3143 = vsel %vm453, %v3129, %v3130
      %v3144 = vsel %vm1093, %v3112, %v3143
      %v3145 = vsel %vm453, %v3130, %v3131
      %v3146 = vsel %vm1093, %v3114, %v3145
      %v3147 = vsel %vm453, %v3132, %v3133
      %v3148 = vsel %vm1093, %v3118, %v3147
      %v3149 = vsel %vm453, %v3133, %v3134
      %v3150 = vsel %vm1093, %v3120, %v3149
      %3159 = vst [vmem:[#allocation4 + $0x180] sm:$0xff] %v3136
      %3160 = vst [vmem:[#allocation4 + $0x188] sm:$0xff] %v3138
      %3161 = vst [vmem:[#allocation4 + $0x190] sm:$0xff] %v3140
      %3162 = vst [vmem:[#allocation4 + $0x198] sm:$0xff] %v3142
      %3163 = vst [vmem:[#allocation4 + $0x1a0] sm:$0xff] %v3144
      %3164 = vst [vmem:[#allocation4 + $0x1a8] sm:$0xff] %v3146
      %3165 = vst [vmem:[#allocation4 + $0x1b0] sm:$0xff] %v3148
      %3166 = vst [vmem:[#allocation4 + $0x1b8] sm:$0xff] %v3150
      %v3167 = vld [vmem:[#allocation3] sm:$0xff]
      %v3168 = vld [vmem:[#allocation3 + $0x8] sm:$0xff]
      %v3169 = vld [vmem:[#allocation3 + $0x10] sm:$0xf]
      %v3170 = vld [vmem:[#allocation3 + $0x14] sm:$0xff]
      %v3171 = vld [vmem:[#allocation3 + $0x1c] sm:$0xff]
      %v3172 = vld [vmem:[#allocation3 + $0x24] sm:$0xf]
      %v3173 = vld [vmem:[#allocation3 + $0x28] sm:$0xff]
      %v3174 = vld [vmem:[#allocation3 + $0x30] sm:$0xff]
      %v3175 = vld [vmem:[#allocation3 + $0x38] sm:$0xf]
      %v3176 = vld [vmem:[#allocation3 + $0x3c] sm:$0xff]
      %v3177 = vld [vmem:[#allocation3 + $0x44] sm:$0xff]
      %v3178 = vld [vmem:[#allocation3 + $0x4c] sm:$0xf]
      %v3179 = vld [vmem:[%s1] sm:$0x88]
      %v3180 = vld [vmem:[%s1 + $0x8] sm:$0x88]
      %v3183 = vunpack.c.l.b16 %v3179
      %v3184 = vunpack.c.h.b16 %v3179
      %v3185 = vunpack.c.l.b16 %v3180
      %v3186 = vunpack.c.h.b16 %v3180
      %v3187 = vpack.c.b16 %v3183, %v3183
      %v3188 = vpack.c.b16 %v3184, %v3184
      %v3189 = vpack.c.b16 %v3185, %v3185
      %v3190 = vpack.c.b16 %v3186, %v3186
      %v3192 = vshrl.u32 %v3187, 16
      %v3193 = vpack.i.b16 %v3192, %v3192
      %v3195 = vperm.slane %v3193, 3
      %v3197 = vshrl.u32 %v3188, 16
      %v3198 = vpack.i.b16 %v3197, %v3197
      %v3200 = vperm.slane %v3198, 3
      %v3202 = vshrl.u32 %v3189, 16
      %v3203 = vpack.i.b16 %v3202, %v3202
      %v3205 = vperm.slane %v3203, 3
      %v3207 = vshrl.u32 %v3190, 16
      %v3208 = vpack.i.b16 %v3207, %v3207
      %v3210 = vperm.slane %v3208, 3
      %v3211 = vunpack.c.l.bf16 %v3167
      %v3212 = vunpack.c.h.bf16 %v3167
      %v3213 = vunpack.c.l.bf16 %v3168
      %v3214 = vunpack.c.h.bf16 %v3168
      %v3215 = vunpack.c.l.bf16 %v3169
      %v3216 = vunpack.c.l.bf16 %v3170
      %v3217 = vunpack.c.h.bf16 %v3170
      %v3218 = vunpack.c.l.bf16 %v3171
      %v3219 = vunpack.c.h.bf16 %v3171
      %v3220 = vunpack.c.l.bf16 %v3172
      %v3221 = vunpack.c.l.bf16 %v3173
      %v3222 = vunpack.c.h.bf16 %v3173
      %v3223 = vunpack.c.l.bf16 %v3174
      %v3224 = vunpack.c.h.bf16 %v3174
      %v3225 = vunpack.c.l.bf16 %v3175
      %v3226 = vunpack.c.l.bf16 %v3176
      %v3227 = vunpack.c.h.bf16 %v3176
      %v3228 = vunpack.c.l.bf16 %v3177
      %v3229 = vunpack.c.h.bf16 %v3177
      %v3230 = vunpack.c.l.bf16 %v3178
      %v3231 = vunpack.c.l.bf16 %v3195
      %v3232 = vunpack.c.l.bf16 %v3200
      %v3233 = vunpack.c.l.bf16 %v3205
      %v3234 = vunpack.c.l.bf16 %v3210
      %3239 = vrot.lane.b32.xlu0 %v3231, 33
      %v3240 = vpop.permute.xlu0 %3239
      %3241 = vrot.lane.b32.xlu0 %v3232, 33
      %v3242 = vpop.permute.xlu0 %3241
      %3243 = vrot.lane.b32.xlu0 %v3233, 33
      %v3244 = vpop.permute.xlu0 %3243
      %3245 = vrot.lane.b32.xlu0 %v3234, 33
      %v3246 = vpop.permute.xlu0 %3245
      %v3247 = vsel %vm1173, %v3240, %v3242
      %v3248 = vsel %vm1173, %v3242, %v3244
      %v3249 = vsel %vm1173, %v3244, %v3246
      %v3255 = vmul.f32 %v3211, %v3240
      %v3256 = vmul.f32 %v3212, %v3247
      %v3257 = vmul.f32 %v3213, %v3248
      %v3258 = vmul.f32 %v3214, %v3249
      %v3259 = vmul.f32 %v3215, %v3246
      %v3260 = vmul.f32 %v3216, %v3240
      %v3261 = vmul.f32 %v3217, %v3247
      %v3262 = vmul.f32 %v3218, %v3248
      %v3263 = vmul.f32 %v3219, %v3249
      %v3264 = vmul.f32 %v3220, %v3246
      %v3265 = vmul.f32 %v3221, %v3240
      %v3266 = vmul.f32 %v3222, %v3247
      %v3267 = vmul.f32 %v3223, %v3248
      %v3268 = vmul.f32 %v3224, %v3249
      %v3269 = vmul.f32 %v3225, %v3246
      %v3270 = vmul.f32 %v3226, %v3240
      %v3271 = vmul.f32 %v3227, %v3247
      %v3272 = vmul.f32 %v3228, %v3248
      %v3273 = vmul.f32 %v3229, %v3249
      %v3274 = vmul.f32 %v3230, %v3246
      %v3275 = vpack.c.bf16 %v3256, %v3255
      %v3276 = vpack.c.bf16 %v3258, %v3257
      %v3277 = vpack.c.bf16 %v3259, %v3259
      %v3278 = vpack.c.bf16 %v3261, %v3260
      %v3279 = vpack.c.bf16 %v3263, %v3262
      %v3280 = vpack.c.bf16 %v3264, %v3264
      %v3281 = vpack.c.bf16 %v3266, %v3265
      %v3282 = vpack.c.bf16 %v3268, %v3267
      %v3283 = vpack.c.bf16 %v3269, %v3269
      %v3284 = vpack.c.bf16 %v3271, %v3270
      %v3285 = vpack.c.bf16 %v3273, %v3272
      %v3286 = vpack.c.bf16 %v3274, %v3274
      %3299 = vrot.lane.b32.xlu0 %v3275, 95
      %v3300 = vpop.permute.xlu0 %3299
      %3301 = vrot.lane.b32.xlu0 %v3276, 95
      %v3302 = vpop.permute.xlu0 %3301
      %3303 = vrot.lane.b32.xlu0 %v3277, 95
      %v3304 = vpop.permute.xlu0 %3303
      %3305 = vrot.lane.b32.xlu0 %v3278, 95
      %v3306 = vpop.permute.xlu0 %3305
      %3307 = vrot.lane.b32.xlu0 %v3279, 95
      %v3308 = vpop.permute.xlu0 %3307
      %3309 = vrot.lane.b32.xlu0 %v3280, 95
      %v3310 = vpop.permute.xlu0 %3309
      %3311 = vrot.lane.b32.xlu0 %v3281, 95
      %v3312 = vpop.permute.xlu0 %3311
      %3313 = vrot.lane.b32.xlu0 %v3282, 95
      %v3314 = vpop.permute.xlu0 %3313
      %3315 = vrot.lane.b32.xlu0 %v3283, 95
      %v3316 = vpop.permute.xlu0 %3315
      %3317 = vrot.lane.b32.xlu0 %v3284, 95
      %v3318 = vpop.permute.xlu0 %3317
      %3319 = vrot.lane.b32.xlu0 %v3285, 95
      %v3320 = vpop.permute.xlu0 %3319
      %3321 = vrot.lane.b32.xlu0 %v3286, 95
      %v3322 = vpop.permute.xlu0 %3321
      %v3323 = vrot.slane %v3300, 4
      %v3324 = vrot.slane %v3302, 4
      %v3325 = vrot.slane %v3304, 4
      %v3326 = vrot.slane %v3306, 4
      %v3327 = vrot.slane %v3308, 4
      %v3328 = vrot.slane %v3310, 4
      %v3329 = vrot.slane %v3312, 4
      %v3330 = vrot.slane %v3314, 4
      %v3331 = vrot.slane %v3316, 4
      %v3332 = vrot.slane %v3318, 4
      %v3333 = vrot.slane %v3320, 4
      %v3334 = vrot.slane %v3322, 4
      %v3335 = vsel %vm453, %v3323, %v3324
      %v3336 = vsel %vm1223, %v3300, %v3335
      %v3337 = vsel %vm453, %v3324, %v3325
      %v3338 = vsel %vm1223, %v3302, %v3337
      %v3339 = vsel %vm453, %v3326, %v3327
      %v3340 = vsel %vm1223, %v3306, %v3339
      %v3341 = vsel %vm453, %v3327, %v3328
      %v3342 = vsel %vm1223, %v3308, %v3341
      %v3343 = vsel %vm453, %v3329, %v3330
      %v3344 = vsel %vm1223, %v3312, %v3343
      %v3345 = vsel %vm453, %v3330, %v3331
      %v3346 = vsel %vm1223, %v3314, %v3345
      %v3347 = vsel %vm453, %v3332, %v3333
      %v3348 = vsel %vm1223, %v3318, %v3347
      %v3349 = vsel %vm453, %v3333, %v3334
      %v3350 = vsel %vm1223, %v3320, %v3349
      %3359 = vst [vmem:[#allocation4 + $0x1c0] sm:$0xff] %v3336
      %3360 = vst [vmem:[#allocation4 + $0x1c8] sm:$0xff] %v3338
      %3361 = vst [vmem:[#allocation4 + $0x1d0] sm:$0xff] %v3340
      %3362 = vst [vmem:[#allocation4 + $0x1d8] sm:$0xff] %v3342
      %3363 = vst [vmem:[#allocation4 + $0x1e0] sm:$0xff] %v3344
      %3364 = vst [vmem:[#allocation4 + $0x1e8] sm:$0xff] %v3346
      %3365 = vst [vmem:[#allocation4 + $0x1f0] sm:$0xff] %v3348
      %3366 = vst [vmem:[#allocation4 + $0x1f8] sm:$0xff] %v3350
      %v3367 = vld [vmem:[#allocation3] sm:$0xff]
      %v3368 = vld [vmem:[#allocation3 + $0x8] sm:$0xff]
      %v3369 = vld [vmem:[#allocation3 + $0x10] sm:$0xf]
      %v3370 = vld [vmem:[#allocation3 + $0x14] sm:$0xff]
      %v3371 = vld [vmem:[#allocation3 + $0x1c] sm:$0xff]
      %v3372 = vld [vmem:[#allocation3 + $0x24] sm:$0xf]
      %v3373 = vld [vmem:[#allocation3 + $0x28] sm:$0xff]
      %v3374 = vld [vmem:[#allocation3 + $0x30] sm:$0xff]
      %v3375 = vld [vmem:[#allocation3 + $0x38] sm:$0xf]
      %v3376 = vld [vmem:[#allocation3 + $0x3c] sm:$0xff]
      %v3377 = vld [vmem:[#allocation3 + $0x44] sm:$0xff]
      %v3378 = vld [vmem:[#allocation3 + $0x4c] sm:$0xf]
      %v3379 = vld [vmem:[%s1 + $0x10] sm:$0x11]
      %v3380 = vld [vmem:[%s1 + $0x18] sm:$0x11]
      %v3383 = vunpack.c.l.b16 %v3379
      %v3384 = vunpack.c.h.b16 %v3379
      %v3385 = vunpack.c.l.b16 %v3380
      %v3386 = vunpack.c.h.b16 %v3380
      %v3387 = vpack.c.b16 %v3383, %v3383
      %v3388 = vpack.c.b16 %v3384, %v3384
      %v3389 = vpack.c.b16 %v3385, %v3385
      %v3390 = vpack.c.b16 %v3386, %v3386
      %v3392 = vpack.i.b16 %v3387, %v3387
      %v3394 = vperm.slane %v3392, 0
      %v3396 = vpack.i.b16 %v3388, %v3388
      %v3398 = vperm.slane %v3396, 0
      %v3400 = vpack.i.b16 %v3389, %v3389
      %v3402 = vperm.slane %v3400, 0
      %v3404 = vpack.i.b16 %v3390, %v3390
      %v3406 = vperm.slane %v3404, 0
      %v3407 = vunpack.c.l.bf16 %v3367
      %v3408 = vunpack.c.h.bf16 %v3367
      %v3409 = vunpack.c.l.bf16 %v3368
      %v3410 = vunpack.c.h.bf16 %v3368
      %v3411 = vunpack.c.l.bf16 %v3369
      %v3412 = vunpack.c.l.bf16 %v3370
      %v3413 = vunpack.c.h.bf16 %v3370
      %v3414 = vunpack.c.l.bf16 %v3371
      %v3415 = vunpack.c.h.bf16 %v3371
      %v3416 = vunpack.c.l.bf16 %v3372
      %v3417 = vunpack.c.l.bf16 %v3373
      %v3418 = vunpack.c.h.bf16 %v3373
      %v3419 = vunpack.c.l.bf16 %v3374
      %v3420 = vunpack.c.h.bf16 %v3374
      %v3421 = vunpack.c.l.bf16 %v3375
      %v3422 = vunpack.c.l.bf16 %v3376
      %v3423 = vunpack.c.h.bf16 %v3376
      %v3424 = vunpack.c.l.bf16 %v3377
      %v3425 = vunpack.c.h.bf16 %v3377
      %v3426 = vunpack.c.l.bf16 %v3378
      %v3427 = vunpack.c.l.bf16 %v3394
      %v3428 = vunpack.c.l.bf16 %v3398
      %v3429 = vunpack.c.l.bf16 %v3402
      %v3430 = vunpack.c.l.bf16 %v3406
      %3435 = vrot.lane.b32.xlu0 %v3427, 34
      %v3436 = vpop.permute.xlu0 %3435
      %3437 = vrot.lane.b32.xlu0 %v3428, 34
      %v3438 = vpop.permute.xlu0 %3437
      %3439 = vrot.lane.b32.xlu0 %v3429, 34
      %v3440 = vpop.permute.xlu0 %3439
      %3441 = vrot.lane.b32.xlu0 %v3430, 34
      %v3442 = vpop.permute.xlu0 %3441
      %v3443 = vsel %vm1299, %v3436, %v3438
      %v3444 = vsel %vm1299, %v3438, %v3440
      %v3445 = vsel %vm1299, %v3440, %v3442
      %v3451 = vmul.f32 %v3407, %v3436
      %v3452 = vmul.f32 %v3408, %v3443
      %v3453 = vmul.f32 %v3409, %v3444
      %v3454 = vmul.f32 %v3410, %v3445
      %v3455 = vmul.f32 %v3411, %v3442
      %v3456 = vmul.f32 %v3412, %v3436
      %v3457 = vmul.f32 %v3413, %v3443
      %v3458 = vmul.f32 %v3414, %v3444
      %v3459 = vmul.f32 %v3415, %v3445
      %v3460 = vmul.f32 %v3416, %v3442
      %v3461 = vmul.f32 %v3417, %v3436
      %v3462 = vmul.f32 %v3418, %v3443
      %v3463 = vmul.f32 %v3419, %v3444
      %v3464 = vmul.f32 %v3420, %v3445
      %v3465 = vmul.f32 %v3421, %v3442
      %v3466 = vmul.f32 %v3422, %v3436
      %v3467 = vmul.f32 %v3423, %v3443
      %v3468 = vmul.f32 %v3424, %v3444
      %v3469 = vmul.f32 %v3425, %v3445
      %v3470 = vmul.f32 %v3426, %v3442
      %v3471 = vpack.c.bf16 %v3452, %v3451
      %v3472 = vpack.c.bf16 %v3454, %v3453
      %v3473 = vpack.c.bf16 %v3455, %v3455
      %v3474 = vpack.c.bf16 %v3457, %v3456
      %v3475 = vpack.c.bf16 %v3459, %v3458
      %v3476 = vpack.c.bf16 %v3460, %v3460
      %v3477 = vpack.c.bf16 %v3462, %v3461
      %v3478 = vpack.c.bf16 %v3464, %v3463
      %v3479 = vpack.c.bf16 %v3465, %v3465
      %v3480 = vpack.c.bf16 %v3467, %v3466
      %v3481 = vpack.c.bf16 %v3469, %v3468
      %v3482 = vpack.c.bf16 %v3470, %v3470
      %3495 = vrot.lane.b32.xlu0 %v3471, 94
      %v3496 = vpop.permute.xlu0 %3495
      %3497 = vrot.lane.b32.xlu0 %v3472, 94
      %v3498 = vpop.permute.xlu0 %3497
      %3499 = vrot.lane.b32.xlu0 %v3473, 94
      %v3500 = vpop.permute.xlu0 %3499
      %3501 = vrot.lane.b32.xlu0 %v3474, 94
      %v3502 = vpop.permute.xlu0 %3501
      %3503 = vrot.lane.b32.xlu0 %v3475, 94
      %v3504 = vpop.permute.xlu0 %3503
      %3505 = vrot.lane.b32.xlu0 %v3476, 94
      %v3506 = vpop.permute.xlu0 %3505
      %3507 = vrot.lane.b32.xlu0 %v3477, 94
      %v3508 = vpop.permute.xlu0 %3507
      %3509 = vrot.lane.b32.xlu0 %v3478, 94
      %v3510 = vpop.permute.xlu0 %3509
      %3511 = vrot.lane.b32.xlu0 %v3479, 94
      %v3512 = vpop.permute.xlu0 %3511
      %3513 = vrot.lane.b32.xlu0 %v3480, 94
      %v3514 = vpop.permute.xlu0 %3513
      %3515 = vrot.lane.b32.xlu0 %v3481, 94
      %v3516 = vpop.permute.xlu0 %3515
      %3517 = vrot.lane.b32.xlu0 %v3482, 94
      %v3518 = vpop.permute.xlu0 %3517
      %v3519 = vrot.slane %v3496, 4
      %v3520 = vrot.slane %v3498, 4
      %v3521 = vrot.slane %v3500, 4
      %v3522 = vrot.slane %v3502, 4
      %v3523 = vrot.slane %v3504, 4
      %v3524 = vrot.slane %v3506, 4
      %v3525 = vrot.slane %v3508, 4
      %v3526 = vrot.slane %v3510, 4
      %v3527 = vrot.slane %v3512, 4
      %v3528 = vrot.slane %v3514, 4
      %v3529 = vrot.slane %v3516, 4
      %v3530 = vrot.slane %v3518, 4
      %v3531 = vsel %vm453, %v3519, %v3520
      %v3532 = vsel %vm1349, %v3496, %v3531
      %v3533 = vsel %vm453, %v3520, %v3521
      %v3534 = vsel %vm1349, %v3498, %v3533
      %v3535 = vsel %vm453, %v3522, %v3523
      %v3536 = vsel %vm1349, %v3502, %v3535
      %v3537 = vsel %vm453, %v3523, %v3524
      %v3538 = vsel %vm1349, %v3504, %v3537
      %v3539 = vsel %vm453, %v3525, %v3526
      %v3540 = vsel %vm1349, %v3508, %v3539
      %v3541 = vsel %vm453, %v3526, %v3527
      %v3542 = vsel %vm1349, %v3510, %v3541
      %v3543 = vsel %vm453, %v3528, %v3529
      %v3544 = vsel %vm1349, %v3514, %v3543
      %v3545 = vsel %vm453, %v3529, %v3530
      %v3546 = vsel %vm1349, %v3516, %v3545
      %3555 = vst [vmem:[#allocation4 + $0x200] sm:$0xff] %v3532
      %3556 = vst [vmem:[#allocation4 + $0x208] sm:$0xff] %v3534
      %3557 = vst [vmem:[#allocation4 + $0x210] sm:$0xff] %v3536
      %3558 = vst [vmem:[#allocation4 + $0x218] sm:$0xff] %v3538
      %3559 = vst [vmem:[#allocation4 + $0x220] sm:$0xff] %v3540
      %3560 = vst [vmem:[#allocation4 + $0x228] sm:$0xff] %v3542
      %3561 = vst [vmem:[#allocation4 + $0x230] sm:$0xff] %v3544
      %3562 = vst [vmem:[#allocation4 + $0x238] sm:$0xff] %v3546
      %v3563 = vld [vmem:[%s4] sm:$0xff]
      %v3564 = vld [vmem:[%s4 + $0x8] sm:$0xf]
      %v3565 = vld [vmem:[%s4 + $0xc] sm:$0xff]
      %v3566 = vld [vmem:[%s4 + $0x14] sm:$0xf]
      %v3567 = vld [vmem:[%s4 + $0x18] sm:$0xff]
      %v3568 = vld [vmem:[%s4 + $0x20] sm:$0xf]
      %v3569 = vld [vmem:[%s4 + $0x24] sm:$0xff]
      %v3570 = vld [vmem:[%s4 + $0x2c] sm:$0xf]
      %v3571 = vld [vmem:[#allocation4] sm:$0xff]
      %v3572 = vld [vmem:[#allocation4 + $0x8] sm:$0xff]
      %v3573 = vld [vmem:[#allocation4 + $0x10] sm:$0xff]
      %v3574 = vld [vmem:[#allocation4 + $0x18] sm:$0xff]
      %v3575 = vld [vmem:[#allocation4 + $0x20] sm:$0xff]
      %v3576 = vld [vmem:[#allocation4 + $0x28] sm:$0xff]
      %v3577 = vld [vmem:[#allocation4 + $0x30] sm:$0xff]
      %v3578 = vld [vmem:[#allocation4 + $0x38] sm:$0xff]
      %v3579 = vld [vmem:[#allocation4 + $0x40] sm:$0xff]
      %v3580 = vld [vmem:[#allocation4 + $0x48] sm:$0xff]
      %v3581 = vld [vmem:[#allocation4 + $0x50] sm:$0xff]
      %v3582 = vld [vmem:[#allocation4 + $0x58] sm:$0xff]
      %v3583 = vld [vmem:[#allocation4 + $0x60] sm:$0xff]
      %v3584 = vld [vmem:[#allocation4 + $0x68] sm:$0xff]
      %v3585 = vld [vmem:[#allocation4 + $0x70] sm:$0xff]
      %v3586 = vld [vmem:[#allocation4 + $0x78] sm:$0xff]
      %v3587 = vld [vmem:[#allocation4 + $0x80] sm:$0xff]
      %v3588 = vld [vmem:[#allocation4 + $0x88] sm:$0xff]
      %v3589 = vld [vmem:[#allocation4 + $0x90] sm:$0xff]
      %v3590 = vld [vmem:[#allocation4 + $0x98] sm:$0xff]
      %v3591 = vld [vmem:[#allocation4 + $0xa0] sm:$0xff]
      %v3592 = vld [vmem:[#allocation4 + $0xa8] sm:$0xff]
      %v3593 = vld [vmem:[#allocation4 + $0xb0] sm:$0xff]
      %v3594 = vld [vmem:[#allocation4 + $0xb8] sm:$0xff]
      %v3595 = vld [vmem:[#allocation4 + $0xc0] sm:$0xff]
      %v3596 = vld [vmem:[#allocation4 + $0xc8] sm:$0xff]
      %v3597 = vld [vmem:[#allocation4 + $0xd0] sm:$0xff]
      %v3598 = vld [vmem:[#allocation4 + $0xd8] sm:$0xff]
      %v3599 = vld [vmem:[#allocation4 + $0xe0] sm:$0xff]
      %v3600 = vld [vmem:[#allocation4 + $0xe8] sm:$0xff]
      %v3601 = vld [vmem:[#allocation4 + $0xf0] sm:$0xff]
      %v3602 = vld [vmem:[#allocation4 + $0xf8] sm:$0xff]
      %v3603 = vld [vmem:[#allocation4 + $0x100] sm:$0xff]
      %v3604 = vld [vmem:[#allocation4 + $0x108] sm:$0xff]
      %v3605 = vld [vmem:[#allocation4 + $0x110] sm:$0xff]
      %v3606 = vld [vmem:[#allocation4 + $0x118] sm:$0xff]
      %v3607 = vld [vmem:[#allocation4 + $0x120] sm:$0xff]
      %v3608 = vld [vmem:[#allocation4 + $0x128] sm:$0xff]
      %v3609 = vld [vmem:[#allocation4 + $0x130] sm:$0xff]
      %v3610 = vld [vmem:[#allocation4 + $0x138] sm:$0xff]
      %v3611 = vld [vmem:[#allocation4 + $0x140] sm:$0xff]
      %v3612 = vld [vmem:[#allocation4 + $0x148] sm:$0xff]
      %v3613 = vld [vmem:[#allocation4 + $0x150] sm:$0xff]
      %v3614 = vld [vmem:[#allocation4 + $0x158] sm:$0xff]
      %v3615 = vld [vmem:[#allocation4 + $0x160] sm:$0xff]
      %v3616 = vld [vmem:[#allocation4 + $0x168] sm:$0xff]
      %v3617 = vld [vmem:[#allocation4 + $0x170] sm:$0xff]
      %v3618 = vld [vmem:[#allocation4 + $0x178] sm:$0xff]
      %v3619 = vld [vmem:[#allocation4 + $0x180] sm:$0xff]
      %v3620 = vld [vmem:[#allocation4 + $0x188] sm:$0xff]
      %v3621 = vld [vmem:[#allocation4 + $0x190] sm:$0xff]
      %v3622 = vld [vmem:[#allocation4 + $0x198] sm:$0xff]
      %v3623 = vld [vmem:[#allocation4 + $0x1a0] sm:$0xff]
      %v3624 = vld [vmem:[#allocation4 + $0x1a8] sm:$0xff]
      %v3625 = vld [vmem:[#allocation4 + $0x1b0] sm:$0xff]
      %v3626 = vld [vmem:[#allocation4 + $0x1b8] sm:$0xff]
      %v3627 = vld [vmem:[#allocation4 + $0x1c0] sm:$0xff]
      %v3628 = vld [vmem:[#allocation4 + $0x1c8] sm:$0xff]
      %v3629 = vld [vmem:[#allocation4 + $0x1d0] sm:$0xff]
      %v3630 = vld [vmem:[#allocation4 + $0x1d8] sm:$0xff]
      %v3631 = vld [vmem:[#allocation4 + $0x1e0] sm:$0xff]
      %v3632 = vld [vmem:[#allocation4 + $0x1e8] sm:$0xff]
      %v3633 = vld [vmem:[#allocation4 + $0x1f0] sm:$0xff]
      %v3634 = vld [vmem:[#allocation4 + $0x1f8] sm:$0xff]
      %v3635 = vld [vmem:[#allocation4 + $0x200] sm:$0xff]
      %v3636 = vld [vmem:[#allocation4 + $0x208] sm:$0xff]
      %v3637 = vld [vmem:[#allocation4 + $0x210] sm:$0xff]
      %v3638 = vld [vmem:[#allocation4 + $0x218] sm:$0xff]
      %v3639 = vld [vmem:[#allocation4 + $0x220] sm:$0xff]
      %v3640 = vld [vmem:[#allocation4 + $0x228] sm:$0xff]
      %v3641 = vld [vmem:[#allocation4 + $0x230] sm:$0xff]
      %v3642 = vld [vmem:[#allocation4 + $0x238] sm:$0xff]
      %v3643 = vld [vmem:[%s5] sm:$0xff]
      %v3644 = vld [vmem:[%s5 + $0x8] sm:$0xff]
      %v3645 = vld [vmem:[%s5 + $0x10] sm:$0xff]
      %v3646 = vld [vmem:[%s5 + $0x18] sm:$0xff]
      %3648 = vset.pattern.permute.xlu0 0
      %3649 = vperm.xlu0 %3648, %v3643
      %v3650 = vpop.permute.xlu0 %3649
      %3653 = vset.pattern.permute.xlu0 0
      %3654 = vperm.xlu0 %3653, %v3644
      %v3655 = vpop.permute.xlu0 %3654
      %3658 = vset.pattern.permute.xlu0 0
      %3659 = vperm.xlu0 %3658, %v3645
      %v3660 = vpop.permute.xlu0 %3659
      %3663 = vset.pattern.permute.xlu0 0
      %3664 = vperm.xlu0 %3663, %v3646
      %v3665 = vpop.permute.xlu0 %3664
      %v3675 = vunpack.c.l.b16 %v3563
      %v3676 = vunpack.c.h.b16 %v3563
      %v3677 = vunpack.c.l.b16 %v3564
      %v3678 = vunpack.c.l.b16 %v3565
      %v3679 = vunpack.c.h.b16 %v3565
      %v3680 = vunpack.c.l.b16 %v3566
      %v3681 = vunpack.c.l.b16 %v3567
      %v3682 = vunpack.c.h.b16 %v3567
      %v3683 = vunpack.c.l.b16 %v3568
      %v3684 = vunpack.c.l.b16 %v3569
      %v3685 = vunpack.c.h.b16 %v3569
      %v3686 = vunpack.c.l.b16 %v3570
      %v3687 = vpack.c.b16 %v3678, %v3675
      %v3688 = vpack.c.b16 %v3679, %v3676
      %v3689 = vpack.c.b16 %v3680, %v3677
      %v3690 = vpack.c.b16 %v3684, %v3681
      %v3691 = vpack.c.b16 %v3685, %v3682
      %v3692 = vpack.c.b16 %v3686, %v3683
      %v3769 = vunpack.c.l.b16 %v3571
      %v3770 = vunpack.c.h.b16 %v3571
      %v3771 = vunpack.c.l.b16 %v3572
      %v3772 = vunpack.c.h.b16 %v3572
      %v3773 = vunpack.c.l.b16 %v3573
      %v3774 = vunpack.c.h.b16 %v3573
      %v3775 = vunpack.c.l.b16 %v3574
      %v3776 = vunpack.c.h.b16 %v3574
      %v3777 = vunpack.c.l.b16 %v3575
      %v3778 = vunpack.c.h.b16 %v3575
      %v3779 = vunpack.c.l.b16 %v3576
      %v3780 = vunpack.c.h.b16 %v3576
      %v3781 = vunpack.c.l.b16 %v3577
      %v3782 = vunpack.c.h.b16 %v3577
      %v3783 = vunpack.c.l.b16 %v3578
      %v3784 = vunpack.c.h.b16 %v3578
      %v3785 = vunpack.c.l.b16 %v3579
      %v3786 = vunpack.c.h.b16 %v3579
      %v3787 = vunpack.c.l.b16 %v3580
      %v3788 = vunpack.c.h.b16 %v3580
      %v3789 = vunpack.c.l.b16 %v3581
      %v3790 = vunpack.c.h.b16 %v3581
      %v3791 = vunpack.c.l.b16 %v3582
      %v3792 = vunpack.c.h.b16 %v3582
      %v3793 = vunpack.c.l.b16 %v3583
      %v3794 = vunpack.c.h.b16 %v3583
      %v3795 = vunpack.c.l.b16 %v3584
      %v3796 = vunpack.c.h.b16 %v3584
      %v3797 = vunpack.c.l.b16 %v3585
      %v3798 = vunpack.c.h.b16 %v3585
      %v3799 = vunpack.c.l.b16 %v3586
      %v3800 = vunpack.c.h.b16 %v3586
      %v3801 = vunpack.c.l.b16 %v3587
      %v3802 = vunpack.c.h.b16 %v3587
      %v3803 = vunpack.c.l.b16 %v3588
      %v3804 = vunpack.c.h.b16 %v3588
      %v3805 = vunpack.c.l.b16 %v3589
      %v3806 = vunpack.c.h.b16 %v3589
      %v3807 = vunpack.c.l.b16 %v3590
      %v3808 = vunpack.c.h.b16 %v3590
      %v3809 = vunpack.c.l.b16 %v3591
      %v3810 = vunpack.c.h.b16 %v3591
      %v3811 = vunpack.c.l.b16 %v3592
      %v3812 = vunpack.c.h.b16 %v3592
      %v3813 = vunpack.c.l.b16 %v3593
      %v3814 = vunpack.c.h.b16 %v3593
      %v3815 = vunpack.c.l.b16 %v3594
      %v3816 = vunpack.c.h.b16 %v3594
      %v3817 = vunpack.c.l.b16 %v3595
      %v3818 = vunpack.c.h.b16 %v3595
      %v3819 = vunpack.c.l.b16 %v3596
      %v3820 = vunpack.c.h.b16 %v3596
      %v3821 = vunpack.c.l.b16 %v3597
      %v3822 = vunpack.c.h.b16 %v3597
      %v3823 = vunpack.c.l.b16 %v3598
      %v3824 = vunpack.c.h.b16 %v3598
      %v3825 = vunpack.c.l.b16 %v3599
      %v3826 = vunpack.c.h.b16 %v3599
      %v3827 = vunpack.c.l.b16 %v3600
      %v3828 = vunpack.c.h.b16 %v3600
      %v3829 = vunpack.c.l.b16 %v3601
      %v3830 = vunpack.c.h.b16 %v3601
      %v3831 = vunpack.c.l.b16 %v3602
      %v3832 = vunpack.c.h.b16 %v3602
      %v3833 = vunpack.c.l.b16 %v3603
      %v3834 = vunpack.c.h.b16 %v3603
      %v3835 = vunpack.c.l.b16 %v3604
      %v3836 = vunpack.c.h.b16 %v3604
      %v3837 = vunpack.c.l.b16 %v3605
      %v3838 = vunpack.c.h.b16 %v3605
      %v3839 = vunpack.c.l.b16 %v3606
      %v3840 = vunpack.c.h.b16 %v3606
      %v3841 = vunpack.c.l.b16 %v3607
      %v3842 = vunpack.c.h.b16 %v3607
      %v3843 = vunpack.c.l.b16 %v3608
      %v3844 = vunpack.c.h.b16 %v3608
      %v3845 = vunpack.c.l.b16 %v3609
      %v3846 = vunpack.c.h.b16 %v3609
      %v3847 = vunpack.c.l.b16 %v3610
      %v3848 = vunpack.c.h.b16 %v3610
      %v3849 = vunpack.c.l.b16 %v3611
      %v3850 = vunpack.c.h.b16 %v3611
      %v3851 = vunpack.c.l.b16 %v3612
      %v3852 = vunpack.c.h.b16 %v3612
      %v3853 = vunpack.c.l.b16 %v3613
      %v3854 = vunpack.c.h.b16 %v3613
      %v3855 = vunpack.c.l.b16 %v3614
      %v3856 = vunpack.c.h.b16 %v3614
      %v3857 = vunpack.c.l.b16 %v3615
      %v3858 = vunpack.c.h.b16 %v3615
      %v3859 = vunpack.c.l.b16 %v3616
      %v3860 = vunpack.c.h.b16 %v3616
      %v3861 = vunpack.c.l.b16 %v3617
      %v3862 = vunpack.c.h.b16 %v3617
      %v3863 = vunpack.c.l.b16 %v3618
      %v3864 = vunpack.c.h.b16 %v3618
      %v3865 = vunpack.c.l.b16 %v3619
      %v3866 = vunpack.c.h.b16 %v3619
      %v3867 = vunpack.c.l.b16 %v3620
      %v3868 = vunpack.c.h.b16 %v3620
      %v3869 = vunpack.c.l.b16 %v3621
      %v3870 = vunpack.c.h.b16 %v3621
      %v3871 = vunpack.c.l.b16 %v3622
      %v3872 = vunpack.c.h.b16 %v3622
      %v3873 = vunpack.c.l.b16 %v3623
      %v3874 = vunpack.c.h.b16 %v3623
      %v3875 = vunpack.c.l.b16 %v3624
      %v3876 = vunpack.c.h.b16 %v3624
      %v3877 = vunpack.c.l.b16 %v3625
      %v3878 = vunpack.c.h.b16 %v3625
      %v3879 = vunpack.c.l.b16 %v3626
      %v3880 = vunpack.c.h.b16 %v3626
      %v3881 = vunpack.c.l.b16 %v3627
      %v3882 = vunpack.c.h.b16 %v3627
      %v3883 = vunpack.c.l.b16 %v3628
      %v3884 = vunpack.c.h.b16 %v3628
      %v3885 = vunpack.c.l.b16 %v3629
      %v3886 = vunpack.c.h.b16 %v3629
      %v3887 = vunpack.c.l.b16 %v3630
      %v3888 = vunpack.c.h.b16 %v3630
      %v3889 = vunpack.c.l.b16 %v3631
      %v3890 = vunpack.c.h.b16 %v3631
      %v3891 = vunpack.c.l.b16 %v3632
      %v3892 = vunpack.c.h.b16 %v3632
      %v3893 = vunpack.c.l.b16 %v3633
      %v3894 = vunpack.c.h.b16 %v3633
      %v3895 = vunpack.c.l.b16 %v3634
      %v3896 = vunpack.c.h.b16 %v3634
      %v3897 = vunpack.c.l.b16 %v3635
      %v3898 = vunpack.c.h.b16 %v3635
      %v3899 = vunpack.c.l.b16 %v3636
      %v3900 = vunpack.c.h.b16 %v3636
      %v3901 = vunpack.c.l.b16 %v3637
      %v3902 = vunpack.c.h.b16 %v3637
      %v3903 = vunpack.c.l.b16 %v3638
      %v3904 = vunpack.c.h.b16 %v3638
      %v3905 = vunpack.c.l.b16 %v3639
      %v3906 = vunpack.c.h.b16 %v3639
      %v3907 = vunpack.c.l.b16 %v3640
      %v3908 = vunpack.c.h.b16 %v3640
      %v3909 = vunpack.c.l.b16 %v3641
      %v3910 = vunpack.c.h.b16 %v3641
      %v3911 = vunpack.c.l.b16 %v3642
      %v3912 = vunpack.c.h.b16 %v3642
      %v3913 = vpack.c.b16 %v3773, %v3769
      %v3914 = vpack.c.b16 %v3774, %v3770
      %v3915 = vpack.c.b16 %v3775, %v3771
      %v3916 = vpack.c.b16 %v3776, %v3772
      %v3917 = vpack.c.b16 %v3781, %v3777
      %v3918 = vpack.c.b16 %v3782, %v3778
      %v3919 = vpack.c.b16 %v3783, %v3779
      %v3920 = vpack.c.b16 %v3784, %v3780
      %v3921 = vpack.c.b16 %v3789, %v3785
      %v3922 = vpack.c.b16 %v3790, %v3786
      %v3923 = vpack.c.b16 %v3791, %v3787
      %v3924 = vpack.c.b16 %v3792, %v3788
      %v3925 = vpack.c.b16 %v3797, %v3793
      %v3926 = vpack.c.b16 %v3798, %v3794
      %v3927 = vpack.c.b16 %v3799, %v3795
      %v3928 = vpack.c.b16 %v3800, %v3796
      %v3929 = vpack.c.b16 %v3805, %v3801
      %v3930 = vpack.c.b16 %v3806, %v3802
      %v3931 = vpack.c.b16 %v3807, %v3803
      %v3932 = vpack.c.b16 %v3808, %v3804
      %v3933 = vpack.c.b16 %v3813, %v3809
      %v3934 = vpack.c.b16 %v3814, %v3810
      %v3935 = vpack.c.b16 %v3815, %v3811
      %v3936 = vpack.c.b16 %v3816, %v3812
      %v3937 = vpack.c.b16 %v3821, %v3817
      %v3938 = vpack.c.b16 %v3822, %v3818
      %v3939 = vpack.c.b16 %v3823, %v3819
      %v3940 = vpack.c.b16 %v3824, %v3820
      %v3941 = vpack.c.b16 %v3829, %v3825
      %v3942 = vpack.c.b16 %v3830, %v3826
      %v3943 = vpack.c.b16 %v3831, %v3827
      %v3944 = vpack.c.b16 %v3832, %v3828
      %v3945 = vpack.c.b16 %v3837, %v3833
      %v3946 = vpack.c.b16 %v3838, %v3834
      %v3947 = vpack.c.b16 %v3839, %v3835
      %v3948 = vpack.c.b16 %v3840, %v3836
      %v3949 = vpack.c.b16 %v3845, %v3841
      %v3950 = vpack.c.b16 %v3846, %v3842
      %v3951 = vpack.c.b16 %v3847, %v3843
      %v3952 = vpack.c.b16 %v3848, %v3844
      %v3953 = vpack.c.b16 %v3853, %v3849
      %v3954 = vpack.c.b16 %v3854, %v3850
      %v3955 = vpack.c.b16 %v3855, %v3851
      %v3956 = vpack.c.b16 %v3856, %v3852
      %v3957 = vpack.c.b16 %v3861, %v3857
      %v3958 = vpack.c.b16 %v3862, %v3858
      %v3959 = vpack.c.b16 %v3863, %v3859
      %v3960 = vpack.c.b16 %v3864, %v3860
      %v3961 = vpack.c.b16 %v3869, %v3865
      %v3962 = vpack.c.b16 %v3870, %v3866
      %v3963 = vpack.c.b16 %v3871, %v3867
      %v3964 = vpack.c.b16 %v3872, %v3868
      %v3965 = vpack.c.b16 %v3877, %v3873
      %v3966 = vpack.c.b16 %v3878, %v3874
      %v3967 = vpack.c.b16 %v3879, %v3875
      %v3968 = vpack.c.b16 %v3880, %v3876
      %v3969 = vpack.c.b16 %v3885, %v3881
      %v3970 = vpack.c.b16 %v3886, %v3882
      %v3971 = vpack.c.b16 %v3887, %v3883
      %v3972 = vpack.c.b16 %v3888, %v3884
      %v3973 = vpack.c.b16 %v3893, %v3889
      %v3974 = vpack.c.b16 %v3894, %v3890
      %v3975 = vpack.c.b16 %v3895, %v3891
      %v3976 = vpack.c.b16 %v3896, %v3892
      %v3977 = vpack.c.b16 %v3901, %v3897
      %v3978 = vpack.c.b16 %v3902, %v3898
      %v3979 = vpack.c.b16 %v3903, %v3899
      %v3980 = vpack.c.b16 %v3904, %v3900
      %v3981 = vpack.c.b16 %v3909, %v3905
      %v3982 = vpack.c.b16 %v3910, %v3906
      %v3983 = vpack.c.b16 %v3911, %v3907
      %v3984 = vpack.c.b16 %v3912, %v3908
      %v4058 = vsel %vm1043, %v3689, 0
      %v4061 = vsel %vm1043, %v3692, 0
      %4063 = vmatpush.bf16.msra.mxu0 %v3941
      %4064 = vmatpush.bf16.msra.mxu0 %v3937
      %4065 = vmatpush.bf16.msra.mxu0 %v3933
      %4066 = vmatpush.bf16.msra.mxu0 %v3929
      %4067 = vmatpush.bf16.msra.mxu0 %v3925
      %4068 = vmatpush.bf16.msra.mxu0 %v3921
      %4069 = vmatpush.bf16.msra.mxu0 %v3917
      %4070 = vmatpush.bf16.msra.mxu0 %v3913
      %4071 = vmatmul.bf16.gmra.mxu0 %v3687
      %v4072 = vpop.f32.mrf.mxu0
      %v4073 = vadd.f32 %v3650, %v4072
      %v4074 = vpop.f32.mrf.mxu0
      %v4075 = vadd.f32 %v3655, %v4074
      %4076 = vmatmul.bf16.gmra.mxu0 %v3690
      %v4077 = vpop.f32.mrf.mxu0
      %v4078 = vadd.f32 %v3660, %v4077
      %v4079 = vpop.f32.mrf.mxu0
      %v4080 = vadd.f32 %v3665, %v4079
      %4081 = vdwg.mxu0
      %4082 = vmatpush.bf16.msra.mxu0 %v3973
      %4083 = vmatpush.bf16.msra.mxu0 %v3969
      %4084 = vmatpush.bf16.msra.mxu0 %v3965
      %4085 = vmatpush.bf16.msra.mxu0 %v3961
      %4086 = vmatpush.bf16.msra.mxu0 %v3957
      %4087 = vmatpush.bf16.msra.mxu0 %v3953
      %4088 = vmatpush.bf16.msra.mxu0 %v3949
      %4089 = vmatpush.bf16.msra.mxu0 %v3945
      %4090 = vmatmul.bf16.gmra.mxu0 %v3688
      %v4091 = vpop.f32.mrf.mxu0
      %v4092 = vadd.f32 %v4073, %v4091
      %v4093 = vpop.f32.mrf.mxu0
      %v4094 = vadd.f32 %v4075, %v4093
      %4095 = vmatmul.bf16.gmra.mxu0 %v3691
      %v4096 = vpop.f32.mrf.mxu0
      %v4097 = vadd.f32 %v4078, %v4096
      %v4098 = vpop.f32.mrf.mxu0
      %v4099 = vadd.f32 %v4080, %v4098
      %4100 = vdwg.mxu0
      %4101 = vmatpush.bf16.msra.mxu0 0
      %4102 = vmatpush.bf16.msra.mxu0 0
      %4103 = vmatpush.bf16.msra.mxu0 0
      %4104 = vmatpush.bf16.msra.mxu0 0
      %4105 = vmatpush.bf16.msra.mxu0 0
      %4106 = vmatpush.bf16.msra.mxu0 0
      %4107 = vmatpush.bf16.msra.mxu0 %v3981
      %4108 = vmatpush.bf16.msra.mxu0 %v3977
      %4109 = vmatmul.bf16.gmra.mxu0 %v4058
      %v4110 = vpop.f32.mrf.mxu0
      %v4111 = vadd.f32 %v4092, %v4110
      %v4112 = vpop.f32.mrf.mxu0
      %v4113 = vadd.f32 %v4094, %v4112
      %4114 = vmatmul.bf16.gmra.mxu0 %v4061
      %v4115 = vpop.f32.mrf.mxu0
      %v4116 = vadd.f32 %v4097, %v4115
      %v4117 = vpop.f32.mrf.mxu0
      %v4118 = vadd.f32 %v4099, %v4117
      %4119 = vdwg.mxu0
      %4120 = vmatpush.bf16.msra.mxu0 %v3942
      %4121 = vmatpush.bf16.msra.mxu0 %v3938
      %4122 = vmatpush.bf16.msra.mxu0 %v3934
      %4123 = vmatpush.bf16.msra.mxu0 %v3930
      %4124 = vmatpush.bf16.msra.mxu0 %v3926
      %4125 = vmatpush.bf16.msra.mxu0 %v3922
      %4126 = vmatpush.bf16.msra.mxu0 %v3918
      %4127 = vmatpush.bf16.msra.mxu0 %v3914
      %4128 = vmatmul.bf16.gmra.mxu0 %v3687
      %v4129 = vpop.f32.mrf.mxu0
      %v4130 = vadd.f32 %v3650, %v4129
      %v4131 = vpop.f32.mrf.mxu0
      %v4132 = vadd.f32 %v3655, %v4131
      %4133 = vmatmul.bf16.gmra.mxu0 %v3690
      %v4134 = vpop.f32.mrf.mxu0
      %v4135 = vadd.f32 %v3660, %v4134
      %v4136 = vpop.f32.mrf.mxu0
      %v4137 = vadd.f32 %v3665, %v4136
      %4138 = vdwg.mxu0
      %4139 = vmatpush.bf16.msra.mxu0 %v3974
      %4140 = vmatpush.bf16.msra.mxu0 %v3970
      %4141 = vmatpush.bf16.msra.mxu0 %v3966
      %4142 = vmatpush.bf16.msra.mxu0 %v3962
      %4143 = vmatpush.bf16.msra.mxu0 %v3958
      %4144 = vmatpush.bf16.msra.mxu0 %v3954
      %4145 = vmatpush.bf16.msra.mxu0 %v3950
      %4146 = vmatpush.bf16.msra.mxu0 %v3946
      %4147 = vmatmul.bf16.gmra.mxu0 %v3688
      %v4148 = vpop.f32.mrf.mxu0
      %v4149 = vadd.f32 %v4130, %v4148
      %v4150 = vpop.f32.mrf.mxu0
      %v4151 = vadd.f32 %v4132, %v4150
      %4152 = vmatmul.bf16.gmra.mxu0 %v3691
      %v4153 = vpop.f32.mrf.mxu0
      %v4154 = vadd.f32 %v4135, %v4153
      %v4155 = vpop.f32.mrf.mxu0
      %v4156 = vadd.f32 %v4137, %v4155
      %4157 = vdwg.mxu0
      %4158 = vmatpush.bf16.msra.mxu0 0
      %4159 = vmatpush.bf16.msra.mxu0 0
      %4160 = vmatpush.bf16.msra.mxu0 0
      %4161 = vmatpush.bf16.msra.mxu0 0
      %4162 = vmatpush.bf16.msra.mxu0 0
      %4163 = vmatpush.bf16.msra.mxu0 0
      %4164 = vmatpush.bf16.msra.mxu0 %v3982
      %4165 = vmatpush.bf16.msra.mxu0 %v3978
      %4166 = vmatmul.bf16.gmra.mxu0 %v4058
      %v4167 = vpop.f32.mrf.mxu0
      %v4168 = vadd.f32 %v4149, %v4167
      %v4169 = vpop.f32.mrf.mxu0
      %v4170 = vadd.f32 %v4151, %v4169
      %4171 = vmatmul.bf16.gmra.mxu0 %v4061
      %v4172 = vpop.f32.mrf.mxu0
      %v4173 = vadd.f32 %v4154, %v4172
      %v4174 = vpop.f32.mrf.mxu0
      %v4175 = vadd.f32 %v4156, %v4174
      %4176 = vdwg.mxu0
      %4177 = vmatpush.bf16.msra.mxu0 %v3943
      %4178 = vmatpush.bf16.msra.mxu0 %v3939
      %4179 = vmatpush.bf16.msra.mxu0 %v3935
      %4180 = vmatpush.bf16.msra.mxu0 %v3931
      %4181 = vmatpush.bf16.msra.mxu0 %v3927
      %4182 = vmatpush.bf16.msra.mxu0 %v3923
      %4183 = vmatpush.bf16.msra.mxu0 %v3919
      %4184 = vmatpush.bf16.msra.mxu0 %v3915
      %4185 = vmatmul.bf16.gmra.mxu0 %v3687
      %v4186 = vpop.f32.mrf.mxu0
      %v4187 = vadd.f32 %v3650, %v4186
      %v4188 = vpop.f32.mrf.mxu0
      %v4189 = vadd.f32 %v3655, %v4188
      %4190 = vmatmul.bf16.gmra.mxu0 %v3690
      %v4191 = vpop.f32.mrf.mxu0
      %v4192 = vadd.f32 %v3660, %v4191
      %v4193 = vpop.f32.mrf.mxu0
      %v4194 = vadd.f32 %v3665, %v4193
      %4195 = vdwg.mxu0
      %4196 = vmatpush.bf16.msra.mxu0 %v3975
      %4197 = vmatpush.bf16.msra.mxu0 %v3971
      %4198 = vmatpush.bf16.msra.mxu0 %v3967
      %4199 = vmatpush.bf16.msra.mxu0 %v3963
      %4200 = vmatpush.bf16.msra.mxu0 %v3959
      %4201 = vmatpush.bf16.msra.mxu0 %v3955
      %4202 = vmatpush.bf16.msra.mxu0 %v3951
      %4203 = vmatpush.bf16.msra.mxu0 %v3947
      %4204 = vmatmul.bf16.gmra.mxu0 %v3688
      %v4205 = vpop.f32.mrf.mxu0
      %v4206 = vadd.f32 %v4187, %v4205
      %v4207 = vpop.f32.mrf.mxu0
      %v4208 = vadd.f32 %v4189, %v4207
      %4209 = vmatmul.bf16.gmra.mxu0 %v3691
      %v4210 = vpop.f32.mrf.mxu0
      %v4211 = vadd.f32 %v4192, %v4210
      %v4212 = vpop.f32.mrf.mxu0
      %v4213 = vadd.f32 %v4194, %v4212
      %4214 = vdwg.mxu0
      %4215 = vmatpush.bf16.msra.mxu0 0
      %4216 = vmatpush.bf16.msra.mxu0 0
      %4217 = vmatpush.bf16.msra.mxu0 0
      %4218 = vmatpush.bf16.msra.mxu0 0
      %4219 = vmatpush.bf16.msra.mxu0 0
      %4220 = vmatpush.bf16.msra.mxu0 0
      %4221 = vmatpush.bf16.msra.mxu0 %v3983
      %4222 = vmatpush.bf16.msra.mxu0 %v3979
      %4223 = vmatmul.bf16.gmra.mxu0 %v4058
      %v4224 = vpop.f32.mrf.mxu0
      %v4225 = vadd.f32 %v4206, %v4224
      %v4226 = vpop.f32.mrf.mxu0
      %v4227 = vadd.f32 %v4208, %v4226
      %4228 = vmatmul.bf16.gmra.mxu0 %v4061
      %v4229 = vpop.f32.mrf.mxu0
      %v4230 = vadd.f32 %v4211, %v4229
      %v4231 = vpop.f32.mrf.mxu0
      %v4232 = vadd.f32 %v4213, %v4231
      %4233 = vdwg.mxu0
      %4234 = vmatpush.bf16.msra.mxu0 %v3944
      %4235 = vmatpush.bf16.msra.mxu0 %v3940
      %4236 = vmatpush.bf16.msra.mxu0 %v3936
      %4237 = vmatpush.bf16.msra.mxu0 %v3932
      %4238 = vmatpush.bf16.msra.mxu0 %v3928
      %4239 = vmatpush.bf16.msra.mxu0 %v3924
      %4240 = vmatpush.bf16.msra.mxu0 %v3920
      %4241 = vmatpush.bf16.msra.mxu0 %v3916
      %4242 = vmatmul.bf16.gmra.mxu0 %v3687
      %v4243 = vpop.f32.mrf.mxu0
      %v4244 = vadd.f32 %v3650, %v4243
      %v4245 = vpop.f32.mrf.mxu0
      %v4246 = vadd.f32 %v3655, %v4245
      %4247 = vmatmul.bf16.gmra.mxu0 %v3690
      %v4248 = vpop.f32.mrf.mxu0
      %v4249 = vadd.f32 %v3660, %v4248
      %v4250 = vpop.f32.mrf.mxu0
      %v4251 = vadd.f32 %v3665, %v4250
      %4252 = vdwg.mxu0
      %4253 = vmatpush.bf16.msra.mxu0 %v3976
      %4254 = vmatpush.bf16.msra.mxu0 %v3972
      %4255 = vmatpush.bf16.msra.mxu0 %v3968
      %4256 = vmatpush.bf16.msra.mxu0 %v3964
      %4257 = vmatpush.bf16.msra.mxu0 %v3960
      %4258 = vmatpush.bf16.msra.mxu0 %v3956
      %4259 = vmatpush.bf16.msra.mxu0 %v3952
      %4260 = vmatpush.bf16.msra.mxu0 %v3948
      %4261 = vmatmul.bf16.gmra.mxu0 %v3688
      %v4262 = vpop.f32.mrf.mxu0
      %v4263 = vadd.f32 %v4244, %v4262
      %v4264 = vpop.f32.mrf.mxu0
      %v4265 = vadd.f32 %v4246, %v4264
      %4266 = vmatmul.bf16.gmra.mxu0 %v3691
      %v4267 = vpop.f32.mrf.mxu0
      %v4268 = vadd.f32 %v4249, %v4267
      %v4269 = vpop.f32.mrf.mxu0
      %v4270 = vadd.f32 %v4251, %v4269
      %4271 = vdwg.mxu0
      %4272 = vmatpush.bf16.msra.mxu0 0
      %4273 = vmatpush.bf16.msra.mxu0 0
      %4274 = vmatpush.bf16.msra.mxu0 0
      %4275 = vmatpush.bf16.msra.mxu0 0
      %4276 = vmatpush.bf16.msra.mxu0 0
      %4277 = vmatpush.bf16.msra.mxu0 0
      %4278 = vmatpush.bf16.msra.mxu0 %v3984
      %4279 = vmatpush.bf16.msra.mxu0 %v3980
      %4280 = vmatmul.bf16.gmra.mxu0 %v4058
      %v4281 = vpop.f32.mrf.mxu0
      %v4282 = vadd.f32 %v4263, %v4281
      %v4283 = vpop.f32.mrf.mxu0
      %v4284 = vadd.f32 %v4265, %v4283
      %4285 = vmatmul.bf16.gmra.mxu0 %v4061
      %v4286 = vpop.f32.mrf.mxu0
      %v4287 = vadd.f32 %v4268, %v4286
      %v4288 = vpop.f32.mrf.mxu0
      %v4289 = vadd.f32 %v4270, %v4288
      %4290 = vdwg.mxu0
      %v4291 = vmax.f32 %v4111, 0.0
      %v4292 = vmax.f32 %v4168, 0.0
      %v4293 = vmax.f32 %v4225, 0.0
      %v4294 = vmax.f32 %v4282, 0.0
      %v4295 = vmax.f32 %v4113, 0.0
      %v4296 = vmax.f32 %v4170, 0.0
      %v4297 = vmax.f32 %v4227, 0.0
      %v4298 = vmax.f32 %v4284, 0.0
      %v4299 = vmax.f32 %v4116, 0.0
      %v4300 = vmax.f32 %v4173, 0.0
      %v4301 = vmax.f32 %v4230, 0.0
      %v4302 = vmax.f32 %v4287, 0.0
      %v4303 = vmax.f32 %v4118, 0.0
      %v4304 = vmax.f32 %v4175, 0.0
      %v4305 = vmax.f32 %v4232, 0.0
      %v4306 = vmax.f32 %v4289, 0.0
      %v4307 = vld [vmem:[%s6] sm:$0xff]
      %v4308 = vld [vmem:[%s6 + $0x8] sm:$0xff]
      %v4309 = vld [vmem:[%s6 + $0x10] sm:$0xff]
      %v4310 = vld [vmem:[%s6 + $0x18] sm:$0xff]
      %v4311 = vld [vmem:[%s6 + $0x20] sm:$0xff]
      %v4312 = vld [vmem:[%s6 + $0x28] sm:$0xff]
      %v4313 = vld [vmem:[%s6 + $0x30] sm:$0xff]
      %v4314 = vld [vmem:[%s6 + $0x38] sm:$0xff]
      %v4315 = vld [vmem:[%s6 + $0x40] sm:$0xff]
      %v4316 = vld [vmem:[%s6 + $0x48] sm:$0xff]
      %v4317 = vld [vmem:[%s6 + $0x50] sm:$0xff]
      %v4318 = vld [vmem:[%s6 + $0x58] sm:$0xff]
      %v4319 = vld [vmem:[%s6 + $0x60] sm:$0xff]
      %v4320 = vld [vmem:[%s6 + $0x68] sm:$0xff]
      %v4321 = vld [vmem:[%s6 + $0x70] sm:$0xff]
      %v4322 = vld [vmem:[%s6 + $0x78] sm:$0xff]
      %v4323 = vld [vmem:[%s6 + $0x80] sm:$0xff]
      %v4324 = vld [vmem:[%s6 + $0x88] sm:$0xff]
      %v4325 = vld [vmem:[%s6 + $0x90] sm:$0xff]
      %v4326 = vld [vmem:[%s6 + $0x98] sm:$0xff]
      %v4327 = vld [vmem:[%s6 + $0xa0] sm:$0xff]
      %v4328 = vld [vmem:[%s6 + $0xa8] sm:$0xff]
      %v4329 = vld [vmem:[%s6 + $0xb0] sm:$0xff]
      %v4330 = vld [vmem:[%s6 + $0xb8] sm:$0xff]
      %v4331 = vld [vmem:[%s6 + $0xc0] sm:$0xff]
      %v4332 = vld [vmem:[%s6 + $0xc8] sm:$0xff]
      %v4333 = vld [vmem:[%s6 + $0xd0] sm:$0xff]
      %v4334 = vld [vmem:[%s6 + $0xd8] sm:$0xff]
      %v4335 = vld [vmem:[%s6 + $0xe0] sm:$0xff]
      %v4336 = vld [vmem:[%s6 + $0xe8] sm:$0xff]
      %v4337 = vld [vmem:[%s6 + $0xf0] sm:$0xff]
      %v4338 = vld [vmem:[%s6 + $0xf8] sm:$0xff]
      %v4339 = vld [vmem:[%s6 + $0x100] sm:$0xff]
      %v4340 = vld [vmem:[%s6 + $0x108] sm:$0xff]
      %v4341 = vld [vmem:[%s6 + $0x110] sm:$0xff]
      %v4342 = vld [vmem:[%s6 + $0x118] sm:$0xff]
      %v4343 = vld [vmem:[%s6 + $0x120] sm:$0xff]
      %v4344 = vld [vmem:[%s6 + $0x128] sm:$0xff]
      %v4345 = vld [vmem:[%s6 + $0x130] sm:$0xff]
      %v4346 = vld [vmem:[%s6 + $0x138] sm:$0xff]
      %v4347 = vld [vmem:[%s6 + $0x140] sm:$0xff]
      %v4348 = vld [vmem:[%s6 + $0x148] sm:$0xff]
      %v4349 = vld [vmem:[%s6 + $0x150] sm:$0xff]
      %v4350 = vld [vmem:[%s6 + $0x158] sm:$0xff]
      %v4351 = vld [vmem:[%s6 + $0x160] sm:$0xff]
      %v4352 = vld [vmem:[%s6 + $0x168] sm:$0xff]
      %v4353 = vld [vmem:[%s6 + $0x170] sm:$0xff]
      %v4354 = vld [vmem:[%s6 + $0x178] sm:$0xff]
      %v4355 = vld [vmem:[%s6 + $0x180] sm:$0xff]
      %v4356 = vld [vmem:[%s6 + $0x188] sm:$0xff]
      %v4357 = vld [vmem:[%s6 + $0x190] sm:$0xff]
      %v4358 = vld [vmem:[%s6 + $0x198] sm:$0xff]
      %v4359 = vld [vmem:[%s6 + $0x1a0] sm:$0xff]
      %v4360 = vld [vmem:[%s6 + $0x1a8] sm:$0xff]
      %v4361 = vld [vmem:[%s6 + $0x1b0] sm:$0xff]
      %v4362 = vld [vmem:[%s6 + $0x1b8] sm:$0xff]
      %v4363 = vld [vmem:[%s6 + $0x1c0] sm:$0xff]
      %v4364 = vld [vmem:[%s6 + $0x1c8] sm:$0xff]
      %v4365 = vld [vmem:[%s6 + $0x1d0] sm:$0xff]
      %v4366 = vld [vmem:[%s6 + $0x1d8] sm:$0xff]
      %v4367 = vld [vmem:[%s6 + $0x1e0] sm:$0xff]
      %v4368 = vld [vmem:[%s6 + $0x1e8] sm:$0xff]
      %v4369 = vld [vmem:[%s6 + $0x1f0] sm:$0xff]
      %v4370 = vld [vmem:[%s6 + $0x1f8] sm:$0xff]
      %4371 = vmatpush.msra.mxu0 %v4322
      %4372 = vmatpush.msra.mxu0 %v4321
      %4373 = vmatpush.msra.mxu0 %v4320
      %4374 = vmatpush.msra.mxu0 %v4319
      %4375 = vmatpush.msra.mxu0 %v4318
      %4376 = vmatpush.msra.mxu0 %v4317
      %4377 = vmatpush.msra.mxu0 %v4316
      %4378 = vmatpush.msra.mxu0 %v4315
      %4379 = vmatpush.msra.mxu0 %v4314
      %4380 = vmatpush.msra.mxu0 %v4313
      %4381 = vmatpush.msra.mxu0 %v4312
      %4382 = vmatpush.msra.mxu0 %v4311
      %4383 = vmatpush.msra.mxu0 %v4310
      %4384 = vmatpush.msra.mxu0 %v4309
      %4385 = vmatpush.msra.mxu0 %v4308
      %4386 = vmatpush.msra.mxu0 %v4307
      %4387 = vmatmul.f32.gmra.mxu0 %v4291
      %v4388 = vpop.f32.mrf.mxu0
      %v4389 = vadd.f32 0.0, %v4388
      %4390 = vmatmul.f32.gmra.mxu0 %v4295
      %v4391 = vpop.f32.mrf.mxu0
      %v4392 = vadd.f32 0.0, %v4391
      %4393 = vmatmul.f32.gmra.mxu0 %v4299
      %v4394 = vpop.f32.mrf.mxu0
      %v4395 = vadd.f32 0.0, %v4394
      %4396 = vmatmul.f32.gmra.mxu0 %v4303
      %v4397 = vpop.f32.mrf.mxu0
      %v4398 = vadd.f32 0.0, %v4397
      %4399 = vdwg.mxu0
      %4400 = vmatpush.msra.mxu0 %v4338
      %4401 = vmatpush.msra.mxu0 %v4337
      %4402 = vmatpush.msra.mxu0 %v4336
      %4403 = vmatpush.msra.mxu0 %v4335
      %4404 = vmatpush.msra.mxu0 %v4334
      %4405 = vmatpush.msra.mxu0 %v4333
      %4406 = vmatpush.msra.mxu0 %v4332
      %4407 = vmatpush.msra.mxu0 %v4331
      %4408 = vmatpush.msra.mxu0 %v4330
      %4409 = vmatpush.msra.mxu0 %v4329
      %4410 = vmatpush.msra.mxu0 %v4328
      %4411 = vmatpush.msra.mxu0 %v4327
      %4412 = vmatpush.msra.mxu0 %v4326
      %4413 = vmatpush.msra.mxu0 %v4325
      %4414 = vmatpush.msra.mxu0 %v4324
      %4415 = vmatpush.msra.mxu0 %v4323
      %4416 = vmatmul.f32.gmra.mxu0 %v4292
      %v4417 = vpop.f32.mrf.mxu0
      %v4418 = vadd.f32 %v4389, %v4417
      %4419 = vmatmul.f32.gmra.mxu0 %v4296
      %v4420 = vpop.f32.mrf.mxu0
      %v4421 = vadd.f32 %v4392, %v4420
      %4422 = vmatmul.f32.gmra.mxu0 %v4300
      %v4423 = vpop.f32.mrf.mxu0
      %v4424 = vadd.f32 %v4395, %v4423
      %4425 = vmatmul.f32.gmra.mxu0 %v4304
      %v4426 = vpop.f32.mrf.mxu0
      %v4427 = vadd.f32 %v4398, %v4426
      %4428 = vdwg.mxu0
      %4429 = vmatpush.msra.mxu0 %v4354
      %4430 = vmatpush.msra.mxu0 %v4353
      %4431 = vmatpush.msra.mxu0 %v4352
      %4432 = vmatpush.msra.mxu0 %v4351
      %4433 = vmatpush.msra.mxu0 %v4350
      %4434 = vmatpush.msra.mxu0 %v4349
      %4435 = vmatpush.msra.mxu0 %v4348
      %4436 = vmatpush.msra.mxu0 %v4347
      %4437 = vmatpush.msra.mxu0 %v4346
      %4438 = vmatpush.msra.mxu0 %v4345
      %4439 = vmatpush.msra.mxu0 %v4344
      %4440 = vmatpush.msra.mxu0 %v4343
      %4441 = vmatpush.msra.mxu0 %v4342
      %4442 = vmatpush.msra.mxu0 %v4341
      %4443 = vmatpush.msra.mxu0 %v4340
      %4444 = vmatpush.msra.mxu0 %v4339
      %4445 = vmatmul.f32.gmra.mxu0 %v4293
      %v4446 = vpop.f32.mrf.mxu0
      %v4447 = vadd.f32 %v4418, %v4446
      %4448 = vmatmul.f32.gmra.mxu0 %v4297
      %v4449 = vpop.f32.mrf.mxu0
      %v4450 = vadd.f32 %v4421, %v4449
      %4451 = vmatmul.f32.gmra.mxu0 %v4301
      %v4452 = vpop.f32.mrf.mxu0
      %v4453 = vadd.f32 %v4424, %v4452
      %4454 = vmatmul.f32.gmra.mxu0 %v4305
      %v4455 = vpop.f32.mrf.mxu0
      %v4456 = vadd.f32 %v4427, %v4455
      %4457 = vdwg.mxu0
      %4458 = vmatpush.msra.mxu0 %v4370
      %4459 = vmatpush.msra.mxu0 %v4369
      %4460 = vmatpush.msra.mxu0 %v4368
      %4461 = vmatpush.msra.mxu0 %v4367
      %4462 = vmatpush.msra.mxu0 %v4366
      %4463 = vmatpush.msra.mxu0 %v4365
      %4464 = vmatpush.msra.mxu0 %v4364
      %4465 = vmatpush.msra.mxu0 %v4363
      %4466 = vmatpush.msra.mxu0 %v4362
      %4467 = vmatpush.msra.mxu0 %v4361
      %4468 = vmatpush.msra.mxu0 %v4360
      %4469 = vmatpush.msra.mxu0 %v4359
      %4470 = vmatpush.msra.mxu0 %v4358
      %4471 = vmatpush.msra.mxu0 %v4357
      %4472 = vmatpush.msra.mxu0 %v4356
      %4473 = vmatpush.msra.mxu0 %v4355
      %4474 = vmatmul.f32.gmra.mxu0 %v4294
      %v4475 = vpop.f32.mrf.mxu0
      %v4476 = vadd.f32 %v4447, %v4475
      %4477 = vmatmul.f32.gmra.mxu0 %v4298
      %v4478 = vpop.f32.mrf.mxu0
      %v4479 = vadd.f32 %v4450, %v4478
      %4480 = vmatmul.f32.gmra.mxu0 %v4302
      %v4481 = vpop.f32.mrf.mxu0
      %v4482 = vadd.f32 %v4453, %v4481
      %4483 = vmatmul.f32.gmra.mxu0 %v4306
      %v4484 = vpop.f32.mrf.mxu0
      %v4485 = vadd.f32 %v4456, %v4484
      %4486 = vdwg.mxu0
      %4487 = vst.msk [vmem:[%s278] sm:$0xff] %vm531, %v4476
      %4488 = vst.msk [vmem:[%s278 + $0x8] sm:$0xff] %vm531, %v4479
      %4489 = vst.msk [vmem:[%s278 + $0x10] sm:$0xff] %vm531, %v4482
      %4490 = vst.msk [vmem:[%s278 + $0x18] sm:$0xff] %vm531, %v4485
      %p4491 = scmp.lt.s32.totalorder %s18, 1
      %s4492 = scalar_select %p4491, %s18, 1
      %s4493 = smul.addr %s4492, 4
      %s4494 = smul.addr %s4493, 8
      %s4495 = scalar_lea.vmem %s7, %s4494
      // Predicated region
      $region49: #{transparent_superpixel_encoder_forward.1} parent=47 // pred_check
        %p4496 = pneg %p188
      $region50: #{transparent_superpixel_encoder_forward.1} parent=47 // pred_check_branch
        %4498 = sbr.rel (%p4496) target = $region52
      $region51: #{transparent_superpixel_encoder_forward.1} parent=47 // pred_region
        _
      $region52: #{transparent_superpixel_encoder_forward.1} parent=47 // pred_fallthru
        _
    $region48: #{transparent_superpixel_encoder_forward.1} parent=5 // pred_fallthru
      _
    %p4499 = scmp.le.s32.totalorder 2, %s13
    // Predicated region
    $region53: #{transparent_superpixel_encoder_forward.1} parent=5 // pred_check
      %p4500 = pneg %p4499
    $region54: #{transparent_superpixel_encoder_forward.1} parent=5 // pred_check_branch
      %4502 = sbr.rel (%p4500) target = $region56
    $region55: #{transparent_superpixel_encoder_forward.1} parent=5 // pred_region
      %s4503 = ssub.s32 %s13, 2
      // Predicated region
      $region57: #{transparent_superpixel_encoder_forward.1} parent=55 // pred_check
        %p4504 = pneg %p194
      $region58: #{transparent_superpixel_encoder_forward.1} parent=55 // pred_check_branch
        %4506 = sbr.rel (%p4504) target = $region60
      $region59: #{transparent_superpixel_encoder_forward.1} parent=55 // pred_region
        %p4507 = scmp.lt.s32.totalorder %s19, 1
        %s4508 = scalar_select %p4507, %s19, 1
        %s4509 = smul.addr %s4508, 4
        %s4510 = smul.addr %s4509, 8
        %s4511 = scalar_lea.vmem %s7, %s4510
      $region60: #{transparent_superpixel_encoder_forward.1} parent=55 // pred_fallthru
        _
    $region56: #{transparent_superpixel_encoder_forward.1} parent=5 // pred_fallthru
      _
  $region6: #{transparent_superpixel_encoder_forward.1} parent=0 // loop_footer
    %s17 = sadd.s32 1, %s13
  $region7: #{transparent_superpixel_encoder_forward.1} parent=0 // loop_footer_branch
    %12 = sbr.rel target = $region3
  $region8: #{transparent_superpixel_encoder_forward.1} parent=0 // loop_exit
    _

</llo_original>
